<compile_context>
chip_gen: v5e
topology: v5e:2x2
jax: 0.10.0
libtpu: 0.0.40
codegen_flags: <defaults>
</compile_context>

<pallas_src>
import functools
import math

import numpy as np

import jax
import jax.numpy as jnp
from jax.experimental import pallas as pl
from jax.experimental.pallas import tpu as pltpu


def _round_up(a, b):
    return (a + b - 1) // b * b


def _simple_attention_kernel(x_ref, wqkv_t_ref, bqkv_ref, wproj_ref, bproj_ref,
                             o_ref, *, heads, head_dim):
    """One tile of `tm` tokens:
         qkv projection (MXU, token-on-lanes layout)
      -> per-token across-head attention (lane-dense VPU + EUP)
      -> output projection (MXU, token-rows again for a lane-dense writeback)."""
    H, D = heads, head_dim
    C = H * D
    scale = 1.0 / math.sqrt(D)

    # x tile arrives (tm, C) f32; cast to bf16 here (not in the wrapper) and
    # transpose once so tokens live on lanes for all of the attention math.
    x_t = jnp.transpose(x_ref[...]).astype(wqkv_t_ref.dtype)            # (C, tm) bf16

    # MXU matmul #1: qkv projection, f32 accumulation, transposed layout.
    qkv_t = jnp.dot(wqkv_t_ref[...], x_t,
                    preferred_element_type=jnp.float32) + bqkv_ref[...]  # (3C, tm) f32

    # Per-head slabs: static D-row sublane slices of qkv_t (no data movement).
    # PyTorch's .view(B, N, 3, H, D) ordering => channel c = h*D + d and the
    # q/k/v blocks are the three consecutive C-row groups.
    q = [qkv_t[0 * C + h * D: 0 * C + (h + 1) * D, :] * scale for h in range(H)]
    k = [qkv_t[1 * C + g * D: 1 * C + (g + 1) * D, :] for g in range(H)]
    v = [qkv_t[2 * C + g * D: 2 * C + (g + 1) * D, :] for g in range(H)]

    # Attention across the H heads of each token.  Operands are (D, tm) /
    # (1, tm) slabs with tokens on lanes; the H-wide softmax axis is an
    # unrolled list (plain elementwise max/add of lane-dense arrays); only the
    # D-wide score reduction touches the sublane axis.
    ctx_rows = []
    for h in range(H):
        s = [jnp.sum(q[h] * k[g], axis=0, keepdims=True)                 # (1, tm)
             for g in range(H)]
        m = functools.reduce(jnp.maximum, s)                             # (1, tm)
        e = [jnp.exp(sg - m) for sg in s]
        denom = functools.reduce(jnp.add, e)
        inv = pl.reciprocal(denom, approx=True)                          # EUP
        ctx_h = (e[0] * inv) * v[0]                                      # (D, tm)
        for g in range(1, H):
            ctx_h = ctx_h + (e[g] * inv) * v[g]
        ctx_rows.append(ctx_h)
    ctx_t = jnp.concatenate(ctx_rows, axis=0)                            # (C, tm) f32

    # Back to token-rows (one small transpose) so the projection output is
    # written lane-dense along C.
    ctx = jnp.transpose(ctx_t).astype(wproj_ref.dtype)                   # (tm, C) bf16

    # MXU matmul #2: output projection, f32 accumulation.
    out = jnp.dot(ctx, wproj_ref[...],
                  preferred_element_type=jnp.float32) + bproj_ref[...]
    o_ref[...] = out.astype(o_ref.dtype)


def prepare_params(w_qkv, b_qkv, w_proj, b_proj, *, matmul_dtype=jnp.bfloat16):
    """One-time parameter prep (init time, not per call).
    Inputs use the (in, out) Linear layout: w_qkv (C, 3C), w_proj (C, C).
      * Wqkv is stored transposed (3C, C) so the kernel produces qkv directly in
        the token-on-lanes layout (no in-kernel qkv transpose).
      * Weights are cast to the MXU matmul dtype (bf16); biases stay f32 (they
        add onto f32 accumulators).  bqkv -> (3C, 1) column, bproj -> (1, C) row.
      * No scaling is folded into the weights: the 1/sqrt(D) attention scale is
        applied in-kernel, so there is no double-apply hazard."""
    wqkv_t = jnp.asarray(w_qkv, matmul_dtype).T
    bqkv = jnp.asarray(b_qkv, jnp.float32).reshape(-1, 1)
    wproj = jnp.asarray(w_proj, matmul_dtype)
    bproj = jnp.asarray(b_proj, jnp.float32).reshape(1, -1)
    return wqkv_t, bqkv, wproj, bproj


def _vmem_limit_bytes(tm, C, in_bytes, w_bytes, out_bytes):
    """Scoped-VMEM request sized from the actual buffers (+4x headroom) instead
    of the 16/32 MiB generation defaults; capped well below v7x's 64 MiB."""
    weights = (3 * C * C + C * C) * w_bytes               # Wqkv^T + Wproj (resident)
    biases = (3 * C * 128 + 8 * C) * 4                    # lane/sublane-padded f32
    io_tiles = tm * C * (in_bytes + out_bytes)            # x tile + out tile
    interm = 5 * C * tm * 4 + 2 * tm * C * w_bytes        # qkv_t, ctx(+T), bf16 copies
    est = 2 * (weights + biases + io_tiles) + interm      # x2: double buffering
    return int(min(4 * est, 48 << 20))


def _pick_tm(M):
    """256-row tiles for large M (fills an MXU macro tile, amortizes the
    ~0.35us/grid-step overhead); otherwise 128 so each TensorCore still gets
    several pipelined grid steps (v7x megacore) while the token-on-lanes VPU
    slabs stay fully lane-dense (128 tokens = 128 lanes)."""
    return 256 if M >= 2048 else 128


@functools.partial(jax.jit, static_argnames=("heads", "tm", "out_dtype"))
def _simple_attention_call(x, wqkv_t, bqkv, wproj, bproj, *, heads, tm, out_dtype):
    B, N, C = x.shape
    M = B * N
    head_dim = C // heads
    kernel = functools.partial(_simple_attention_kernel,
                               heads=heads, head_dim=head_dim)
    out = pl.pallas_call(
        kernel,
        out_shape=jax.ShapeDtypeStruct((M, C), out_dtype),
        grid_spec=pltpu.PrefetchScalarGridSpec(
            num_scalar_prefetch=0,
            grid=(pl.cdiv(M, tm),),            # uneven M -> overhanging last block
            in_specs=[
                pl.BlockSpec((tm, C), lambda i: (i, 0)),         # x tile (f32)
                pl.BlockSpec((3 * C, C), lambda i: (0, 0)),      # Wqkv^T (resident)
                pl.BlockSpec((3 * C, 1), lambda i: (0, 0)),      # bqkv column (f32)
                pl.BlockSpec((C, C), lambda i: (0, 0)),          # Wproj (resident)
                pl.BlockSpec((1, C), lambda i: (0, 0)),          # bproj row (f32)
            ],
            out_specs=pl.BlockSpec((tm, C), lambda i: (i, 0)),
        ),
        compiler_params=pltpu.CompilerParams(
            dimension_semantics=("parallel",),  # token tiles shard across TCs
            vmem_limit_bytes=_vmem_limit_bytes(
                tm, C,
                in_bytes=x.dtype.itemsize,
                w_bytes=wqkv_t.dtype.itemsize,
                out_bytes=np.dtype(out_dtype).itemsize),
        ),
    )(x.reshape(M, C), wqkv_t, bqkv, wproj, bproj)
    return out.reshape(B, N, C)


def simple_attention(x, params, *, heads, tm=None, out_dtype=None):
    """x: (B, N, C) float32; params = prepare_params(...).
    out_dtype defaults to x.dtype (f32, matching PyTorch); pass jnp.bfloat16 to
    roughly halve the output HBM writeback if the consumer tolerates it."""
    wqkv_t, bqkv, wproj, bproj = params
    B, N, C = x.shape
    assert C % heads == 0, "dim must be divisible by heads"
    if tm is None:
        tm = _pick_tm(B * N)
    tm = max(8, _round_up(int(tm), 8))
    out_dtype = np.dtype(x.dtype) if out_dtype is None else np.dtype(out_dtype)
    return _simple_attention_call(x, wqkv_t, bqkv, wproj, bproj,
                                  heads=heads, tm=tm, out_dtype=out_dtype)


def simple_attention_reference(x, w_qkv, b_qkv, w_proj, b_proj, *, heads):
    """Pure-JAX f32 reference mirroring the PyTorch forward exactly."""
    B, N, C = x.shape
    D = C // heads
    qkv = (x @ w_qkv + b_qkv.reshape(-1)).reshape(B, N, 3, heads, D)
    q, k, v = qkv[:, :, 0], qkv[:, :, 1], qkv[:, :, 2]
    scores = jnp.einsum("bnhd,bngd->bnhg", q, k) / math.sqrt(D)
    attn = jax.nn.softmax(scores, axis=-1)
    out = jnp.einsum("bnhg,bngd->bnhd", attn, v).reshape(B, N, C)
    return out @ w_proj + b_proj.reshape(-1)


if __name__ == "__main__":
    # Module defaults: dim=256, heads=8.  M = B*N = 512 tokens -> tm=128,
    # grid=(4,): several pipelined steps and >=2 per TensorCore on v7x.
    B, N, dim, heads = 2, 256, 256, 8

    key = jax.random.PRNGKey(0)
    kx, k1, k2, k3, k4 = jax.random.split(key, 5)
    x = jax.random.normal(kx, (B, N, dim), dtype=jnp.float32)

    # Deterministic PyTorch-Linear-style init, stored in (in, out) layout.
    bound = 1.0 / math.sqrt(dim)
    w_qkv = jax.random.uniform(k1, (dim, 3 * dim), jnp.float32, -bound, bound)
    b_qkv = jax.random.uniform(k2, (3 * dim,), jnp.float32, -bound, bound)
    w_proj = jax.random.uniform(k3, (dim, dim), jnp.float32, -bound, bound)
    b_proj = jax.random.uniform(k4, (dim,), jnp.float32, -bound, bound)

    params = prepare_params(w_qkv, b_qkv, w_proj, b_proj)
    out = jax.block_until_ready(simple_attention(x, params, heads=heads))

    ref = simple_attention_reference(x, w_qkv, b_qkv, w_proj, b_proj, heads=heads)
    assert out.shape == (B, N, dim) and out.dtype == jnp.float32
    # bf16 MXU matmuls (f32 accumulation) + approx-reciprocal softmax give
    # ~1e-2-level max deviation from the exact f32 path; 3e-2 is ~2x headroom.
    max_err = float(jnp.max(jnp.abs(out - ref)))
    assert jnp.allclose(out, ref, atol=3e-2, rtol=3e-2), (
        f"mismatch vs reference, max |err| = {max_err}")

    print("KERNEL_OK")
</pallas_src>

<mosaic_0001>
module attributes {stable_mosaic.version = 11 : i64} {
  func.func @_simple_attention_kernel(%arg0: i32, %arg1: memref<128x256xf32, #tpu.memory_space<vmem>>, %arg2: memref<768x256xbf16, #tpu.memory_space<vmem>>, %arg3: memref<768x1xf32, #tpu.memory_space<vmem>>, %arg4: memref<256x256xbf16, #tpu.memory_space<vmem>>, %arg5: memref<1x256xf32, #tpu.memory_space<vmem>>, %arg6: memref<128x256xf32, #tpu.memory_space<vmem>>) attributes {dimension_semantics = [#tpu.dimension_semantics<parallel>], iteration_bounds = array<i64: 4>, scalar_prefetch = 0 : i64, scratch_operands = 0 : i64, tpu.core_type = #tpu.core_type<tc>, window_params = [{transform_indices = @transform_0, window_bounds = array<i64: 128, 256>}, {pipeline_mode = #tpu.pipeline_mode<synchronous>, transform_indices = @transform_1, window_bounds = array<i64: 768, 256>}, {pipeline_mode = #tpu.pipeline_mode<synchronous>, transform_indices = @transform_2, window_bounds = array<i64: 768, 1>}, {pipeline_mode = #tpu.pipeline_mode<synchronous>, transform_indices = @transform_3, window_bounds = array<i64: 256, 256>}, {pipeline_mode = #tpu.pipeline_mode<synchronous>, transform_indices = @transform_4, window_bounds = array<i64: 1, 256>}, {transform_indices = @transform_5, window_bounds = array<i64: 128, 256>}]} {
    %c0 = arith.constant 0 : index
    %c0_0 = arith.constant 0 : index
    %0 = vector.load %arg1[%c0, %c0_0] : memref<128x256xf32, #tpu.memory_space<vmem>>, vector<128x256xf32>
    %1 = tpu.transpose %0, [1, 0] : vector<128x256xf32> -> vector<256x128xf32>
    %2 = arith.truncf %1 : vector<256x128xf32> to vector<256x128xbf16>
    %c0_1 = arith.constant 0 : index
    %c0_2 = arith.constant 0 : index
    %3 = vector.load %arg2[%c0_1, %c0_2] : memref<768x256xbf16, #tpu.memory_space<vmem>>, vector<768x256xbf16>
    %cst = arith.constant dense<0.000000e+00> : vector<768x128xf32>
    %4 = tpu.matmul %3, %2, %cst {dimension_numbers = #tpu.dot_dimension_numbers<[1], [0], [0], [1], [0, 0, 1, 1], [], []>} : vector<768x256xbf16>, vector<256x128xbf16>, vector<768x128xf32> -> vector<768x128xf32>
    %c0_3 = arith.constant 0 : index
    %c0_4 = arith.constant 0 : index
    %5 = vector.load %arg3[%c0_3, %c0_4] : memref<768x1xf32, #tpu.memory_space<vmem>>, vector<768x1xf32>
    %6 = vector.broadcast %5 : vector<768x1xf32> to vector<768x128xf32>
    %7 = arith.addf %4, %6 : vector<768x128xf32>
    %8 = vector.extract_strided_slice %7 {offsets = [0, 0], sizes = [32, 128], strides = [1, 1]} : vector<768x128xf32> to vector<32x128xf32>
    %cst_5 = arith.constant 0.176776692 : f32
    %9 = vector.broadcast %cst_5 : f32 to vector<32x128xf32>
    %10 = arith.mulf %8, %9 : vector<32x128xf32>
    %11 = vector.extract_strided_slice %7 {offsets = [32, 0], sizes = [32, 128], strides = [1, 1]} : vector<768x128xf32> to vector<32x128xf32>
    %cst_6 = arith.constant 0.176776692 : f32
    %12 = vector.broadcast %cst_6 : f32 to vector<32x128xf32>
    %13 = arith.mulf %11, %12 : vector<32x128xf32>
    %14 = vector.extract_strided_slice %7 {offsets = [64, 0], sizes = [32, 128], strides = [1, 1]} : vector<768x128xf32> to vector<32x128xf32>
    %cst_7 = arith.constant 0.176776692 : f32
    %15 = vector.broadcast %cst_7 : f32 to vector<32x128xf32>
    %16 = arith.mulf %14, %15 : vector<32x128xf32>
    %17 = vector.extract_strided_slice %7 {offsets = [96, 0], sizes = [32, 128], strides = [1, 1]} : vector<768x128xf32> to vector<32x128xf32>
    %cst_8 = arith.constant 0.176776692 : f32
    %18 = vector.broadcast %cst_8 : f32 to vector<32x128xf32>
    %19 = arith.mulf %17, %18 : vector<32x128xf32>
    %20 = vector.extract_strided_slice %7 {offsets = [128, 0], sizes = [32, 128], strides = [1, 1]} : vector<768x128xf32> to vector<32x128xf32>
    %cst_9 = arith.constant 0.176776692 : f32
    %21 = vector.broadcast %cst_9 : f32 to vector<32x128xf32>
    %22 = arith.mulf %20, %21 : vector<32x128xf32>
    %23 = vector.extract_strided_slice %7 {offsets = [160, 0], sizes = [32, 128], strides = [1, 1]} : vector<768x128xf32> to vector<32x128xf32>
    %cst_10 = arith.constant 0.176776692 : f32
    %24 = vector.broadcast %cst_10 : f32 to vector<32x128xf32>
    %25 = arith.mulf %23, %24 : vector<32x128xf32>
    %26 = vector.extract_strided_slice %7 {offsets = [192, 0], sizes = [32, 128], strides = [1, 1]} : vector<768x128xf32> to vector<32x128xf32>
    %cst_11 = arith.constant 0.176776692 : f32
    %27 = vector.broadcast %cst_11 : f32 to vector<32x128xf32>
    %28 = arith.mulf %26, %27 : vector<32x128xf32>
    %29 = vector.extract_strided_slice %7 {offsets = [224, 0], sizes = [32, 128], strides = [1, 1]} : vector<768x128xf32> to vector<32x128xf32>
    %cst_12 = arith.constant 0.176776692 : f32
    %30 = vector.broadcast %cst_12 : f32 to vector<32x128xf32>
    %31 = arith.mulf %29, %30 : vector<32x128xf32>
    %32 = vector.extract_strided_slice %7 {offsets = [256, 0], sizes = [32, 128], strides = [1, 1]} : vector<768x128xf32> to vector<32x128xf32>
    %33 = vector.extract_strided_slice %7 {offsets = [288, 0], sizes = [32, 128], strides = [1, 1]} : vector<768x128xf32> to vector<32x128xf32>
    %34 = vector.extract_strided_slice %7 {offsets = [320, 0], sizes = [32, 128], strides = [1, 1]} : vector<768x128xf32> to vector<32x128xf32>
    %35 = vector.extract_strided_slice %7 {offsets = [352, 0], sizes = [32, 128], strides = [1, 1]} : vector<768x128xf32> to vector<32x128xf32>
    %36 = vector.extract_strided_slice %7 {offsets = [384, 0], sizes = [32, 128], strides = [1, 1]} : vector<768x128xf32> to vector<32x128xf32>
    %37 = vector.extract_strided_slice %7 {offsets = [416, 0], sizes = [32, 128], strides = [1, 1]} : vector<768x128xf32> to vector<32x128xf32>
    %38 = vector.extract_strided_slice %7 {offsets = [448, 0], sizes = [32, 128], strides = [1, 1]} : vector<768x128xf32> to vector<32x128xf32>
    %39 = vector.extract_strided_slice %7 {offsets = [480, 0], sizes = [32, 128], strides = [1, 1]} : vector<768x128xf32> to vector<32x128xf32>
    %40 = vector.extract_strided_slice %7 {offsets = [512, 0], sizes = [32, 128], strides = [1, 1]} : vector<768x128xf32> to vector<32x128xf32>
    %41 = vector.extract_strided_slice %7 {offsets = [544, 0], sizes = [32, 128], strides = [1, 1]} : vector<768x128xf32> to vector<32x128xf32>
    %42 = vector.extract_strided_slice %7 {offsets = [576, 0], sizes = [32, 128], strides = [1, 1]} : vector<768x128xf32> to vector<32x128xf32>
    %43 = vector.extract_strided_slice %7 {offsets = [608, 0], sizes = [32, 128], strides = [1, 1]} : vector<768x128xf32> to vector<32x128xf32>
    %44 = vector.extract_strided_slice %7 {offsets = [640, 0], sizes = [32, 128], strides = [1, 1]} : vector<768x128xf32> to vector<32x128xf32>
    %45 = vector.extract_strided_slice %7 {offsets = [672, 0], sizes = [32, 128], strides = [1, 1]} : vector<768x128xf32> to vector<32x128xf32>
    %46 = vector.extract_strided_slice %7 {offsets = [704, 0], sizes = [32, 128], strides = [1, 1]} : vector<768x128xf32> to vector<32x128xf32>
    %47 = vector.extract_strided_slice %7 {offsets = [736, 0], sizes = [32, 128], strides = [1, 1]} : vector<768x128xf32> to vector<32x128xf32>
    %48 = arith.mulf %10, %32 : vector<32x128xf32>
    %cst_13 = arith.constant dense<0.000000e+00> : vector<128xf32>
    %49 = vector.multi_reduction <add>, %48, %cst_13 [0] : vector<32x128xf32> to vector<128xf32>
    %50 = vector.shape_cast %49 : vector<128xf32> to vector<1x128xf32>
    %51 = arith.mulf %10, %33 : vector<32x128xf32>
    %cst_14 = arith.constant dense<0.000000e+00> : vector<128xf32>
    %52 = vector.multi_reduction <add>, %51, %cst_14 [0] : vector<32x128xf32> to vector<128xf32>
    %53 = vector.shape_cast %52 : vector<128xf32> to vector<1x128xf32>
    %54 = arith.mulf %10, %34 : vector<32x128xf32>
    %cst_15 = arith.constant dense<0.000000e+00> : vector<128xf32>
    %55 = vector.multi_reduction <add>, %54, %cst_15 [0] : vector<32x128xf32> to vector<128xf32>
    %56 = vector.shape_cast %55 : vector<128xf32> to vector<1x128xf32>
    %57 = arith.mulf %10, %35 : vector<32x128xf32>
    %cst_16 = arith.constant dense<0.000000e+00> : vector<128xf32>
    %58 = vector.multi_reduction <add>, %57, %cst_16 [0] : vector<32x128xf32> to vector<128xf32>
    %59 = vector.shape_cast %58 : vector<128xf32> to vector<1x128xf32>
    %60 = arith.mulf %10, %36 : vector<32x128xf32>
    %cst_17 = arith.constant dense<0.000000e+00> : vector<128xf32>
    %61 = vector.multi_reduction <add>, %60, %cst_17 [0] : vector<32x128xf32> to vector<128xf32>
    %62 = vector.shape_cast %61 : vector<128xf32> to vector<1x128xf32>
    %63 = arith.mulf %10, %37 : vector<32x128xf32>
    %cst_18 = arith.constant dense<0.000000e+00> : vector<128xf32>
    %64 = vector.multi_reduction <add>, %63, %cst_18 [0] : vector<32x128xf32> to vector<128xf32>
    %65 = vector.shape_cast %64 : vector<128xf32> to vector<1x128xf32>
    %66 = arith.mulf %10, %38 : vector<32x128xf32>
    %cst_19 = arith.constant dense<0.000000e+00> : vector<128xf32>
    %67 = vector.multi_reduction <add>, %66, %cst_19 [0] : vector<32x128xf32> to vector<128xf32>
    %68 = vector.shape_cast %67 : vector<128xf32> to vector<1x128xf32>
    %69 = arith.mulf %10, %39 : vector<32x128xf32>
    %cst_20 = arith.constant dense<0.000000e+00> : vector<128xf32>
    %70 = vector.multi_reduction <add>, %69, %cst_20 [0] : vector<32x128xf32> to vector<128xf32>
    %71 = vector.shape_cast %70 : vector<128xf32> to vector<1x128xf32>
    %72 = arith.maximumf %50, %53 : vector<1x128xf32>
    %73 = arith.maximumf %72, %56 : vector<1x128xf32>
    %74 = arith.maximumf %73, %59 : vector<1x128xf32>
    %75 = arith.maximumf %74, %62 : vector<1x128xf32>
    %76 = arith.maximumf %75, %65 : vector<1x128xf32>
    %77 = arith.maximumf %76, %68 : vector<1x128xf32>
    %78 = arith.maximumf %77, %71 : vector<1x128xf32>
    %79 = arith.subf %50, %78 : vector<1x128xf32>
    %80 = math.exp %79 : vector<1x128xf32>
    %81 = arith.subf %53, %78 : vector<1x128xf32>
    %82 = math.exp %81 : vector<1x128xf32>
    %83 = arith.subf %56, %78 : vector<1x128xf32>
    %84 = math.exp %83 : vector<1x128xf32>
    %85 = arith.subf %59, %78 : vector<1x128xf32>
    %86 = math.exp %85 : vector<1x128xf32>
    %87 = arith.subf %62, %78 : vector<1x128xf32>
    %88 = math.exp %87 : vector<1x128xf32>
    %89 = arith.subf %65, %78 : vector<1x128xf32>
    %90 = math.exp %89 : vector<1x128xf32>
    %91 = arith.subf %68, %78 : vector<1x128xf32>
    %92 = math.exp %91 : vector<1x128xf32>
    %93 = arith.subf %71, %78 : vector<1x128xf32>
    %94 = math.exp %93 : vector<1x128xf32>
    %95 = arith.addf %80, %82 : vector<1x128xf32>
    %96 = arith.addf %95, %84 : vector<1x128xf32>
    %97 = arith.addf %96, %86 : vector<1x128xf32>
    %98 = arith.addf %97, %88 : vector<1x128xf32>
    %99 = arith.addf %98, %90 : vector<1x128xf32>
    %100 = arith.addf %99, %92 : vector<1x128xf32>
    %101 = arith.addf %100, %94 : vector<1x128xf32>
    %102 = tpu.reciprocal %101 {approx = true} : vector<1x128xf32> -> vector<1x128xf32>
    %103 = arith.mulf %80, %102 : vector<1x128xf32>
    %104 = vector.broadcast %103 : vector<1x128xf32> to vector<32x128xf32>
    %105 = arith.mulf %104, %40 : vector<32x128xf32>
    %106 = arith.mulf %82, %102 : vector<1x128xf32>
    %107 = vector.broadcast %106 : vector<1x128xf32> to vector<32x128xf32>
    %108 = arith.mulf %107, %41 : vector<32x128xf32>
    %109 = arith.addf %105, %108 : vector<32x128xf32>
    %110 = arith.mulf %84, %102 : vector<1x128xf32>
    %111 = vector.broadcast %110 : vector<1x128xf32> to vector<32x128xf32>
    %112 = arith.mulf %111, %42 : vector<32x128xf32>
    %113 = arith.addf %109, %112 : vector<32x128xf32>
    %114 = arith.mulf %86, %102 : vector<1x128xf32>
    %115 = vector.broadcast %114 : vector<1x128xf32> to vector<32x128xf32>
    %116 = arith.mulf %115, %43 : vector<32x128xf32>
    %117 = arith.addf %113, %116 : vector<32x128xf32>
    %118 = arith.mulf %88, %102 : vector<1x128xf32>
    %119 = vector.broadcast %118 : vector<1x128xf32> to vector<32x128xf32>
    %120 = arith.mulf %119, %44 : vector<32x128xf32>
    %121 = arith.addf %117, %120 : vector<32x128xf32>
    %122 = arith.mulf %90, %102 : vector<1x128xf32>
    %123 = vector.broadcast %122 : vector<1x128xf32> to vector<32x128xf32>
    %124 = arith.mulf %123, %45 : vector<32x128xf32>
    %125 = arith.addf %121, %124 : vector<32x128xf32>
    %126 = arith.mulf %92, %102 : vector<1x128xf32>
    %127 = vector.broadcast %126 : vector<1x128xf32> to vector<32x128xf32>
    %128 = arith.mulf %127, %46 : vector<32x128xf32>
    %129 = arith.addf %125, %128 : vector<32x128xf32>
    %130 = arith.mulf %94, %102 : vector<1x128xf32>
    %131 = vector.broadcast %130 : vector<1x128xf32> to vector<32x128xf32>
    %132 = arith.mulf %131, %47 : vector<32x128xf32>
    %133 = arith.addf %129, %132 : vector<32x128xf32>
    %134 = arith.mulf %13, %32 : vector<32x128xf32>
    %cst_21 = arith.constant dense<0.000000e+00> : vector<128xf32>
    %135 = vector.multi_reduction <add>, %134, %cst_21 [0] : vector<32x128xf32> to vector<128xf32>
    %136 = vector.shape_cast %135 : vector<128xf32> to vector<1x128xf32>
    %137 = arith.mulf %13, %33 : vector<32x128xf32>
    %cst_22 = arith.constant dense<0.000000e+00> : vector<128xf32>
    %138 = vector.multi_reduction <add>, %137, %cst_22 [0] : vector<32x128xf32> to vector<128xf32>
    %139 = vector.shape_cast %138 : vector<128xf32> to vector<1x128xf32>
    %140 = arith.mulf %13, %34 : vector<32x128xf32>
    %cst_23 = arith.constant dense<0.000000e+00> : vector<128xf32>
    %141 = vector.multi_reduction <add>, %140, %cst_23 [0] : vector<32x128xf32> to vector<128xf32>
    %142 = vector.shape_cast %141 : vector<128xf32> to vector<1x128xf32>
    %143 = arith.mulf %13, %35 : vector<32x128xf32>
    %cst_24 = arith.constant dense<0.000000e+00> : vector<128xf32>
    %144 = vector.multi_reduction <add>, %143, %cst_24 [0] : vector<32x128xf32> to vector<128xf32>
    %145 = vector.shape_cast %144 : vector<128xf32> to vector<1x128xf32>
    %146 = arith.mulf %13, %36 : vector<32x128xf32>
    %cst_25 = arith.constant dense<0.000000e+00> : vector<128xf32>
    %147 = vector.multi_reduction <add>, %146, %cst_25 [0] : vector<32x128xf32> to vector<128xf32>
    %148 = vector.shape_cast %147 : vector<128xf32> to vector<1x128xf32>
    %149 = arith.mulf %13, %37 : vector<32x128xf32>
    %cst_26 = arith.constant dense<0.000000e+00> : vector<128xf32>
    %150 = vector.multi_reduction <add>, %149, %cst_26 [0] : vector<32x128xf32> to vector<128xf32>
    %151 = vector.shape_cast %150 : vector<128xf32> to vector<1x128xf32>
    %152 = arith.mulf %13, %38 : vector<32x128xf32>
    %cst_27 = arith.constant dense<0.000000e+00> : vector<128xf32>
    %153 = vector.multi_reduction <add>, %152, %cst_27 [0] : vector<32x128xf32> to vector<128xf32>
    %154 = vector.shape_cast %153 : vector<128xf32> to vector<1x128xf32>
    %155 = arith.mulf %13, %39 : vector<32x128xf32>
    %cst_28 = arith.constant dense<0.000000e+00> : vector<128xf32>
    %156 = vector.multi_reduction <add>, %155, %cst_28 [0] : vector<32x128xf32> to vector<128xf32>
    %157 = vector.shape_cast %156 : vector<128xf32> to vector<1x128xf32>
    %158 = arith.maximumf %136, %139 : vector<1x128xf32>
    %159 = arith.maximumf %158, %142 : vector<1x128xf32>
    %160 = arith.maximumf %159, %145 : vector<1x128xf32>
    %161 = arith.maximumf %160, %148 : vector<1x128xf32>
    %162 = arith.maximumf %161, %151 : vector<1x128xf32>
    %163 = arith.maximumf %162, %154 : vector<1x128xf32>
    %164 = arith.maximumf %163, %157 : vector<1x128xf32>
    %165 = arith.subf %136, %164 : vector<1x128xf32>
    %166 = math.exp %165 : vector<1x128xf32>
    %167 = arith.subf %139, %164 : vector<1x128xf32>
    %168 = math.exp %167 : vector<1x128xf32>
    %169 = arith.subf %142, %164 : vector<1x128xf32>
    %170 = math.exp %169 : vector<1x128xf32>
    %171 = arith.subf %145, %164 : vector<1x128xf32>
    %172 = math.exp %171 : vector<1x128xf32>
    %173 = arith.subf %148, %164 : vector<1x128xf32>
    %174 = math.exp %173 : vector<1x128xf32>
    %175 = arith.subf %151, %164 : vector<1x128xf32>
    %176 = math.exp %175 : vector<1x128xf32>
    %177 = arith.subf %154, %164 : vector<1x128xf32>
    %178 = math.exp %177 : vector<1x128xf32>
    %179 = arith.subf %157, %164 : vector<1x128xf32>
    %180 = math.exp %179 : vector<1x128xf32>
    %181 = arith.addf %166, %168 : vector<1x128xf32>
    %182 = arith.addf %181, %170 : vector<1x128xf32>
    %183 = arith.addf %182, %172 : vector<1x128xf32>
    %184 = arith.addf %183, %174 : vector<1x128xf32>
    %185 = arith.addf %184, %176 : vector<1x128xf32>
    %186 = arith.addf %185, %178 : vector<1x128xf32>
    %187 = arith.addf %186, %180 : vector<1x128xf32>
    %188 = tpu.reciprocal %187 {approx = true} : vector<1x128xf32> -> vector<1x128xf32>
    %189 = arith.mulf %166, %188 : vector<1x128xf32>
    %190 = vector.broadcast %189 : vector<1x128xf32> to vector<32x128xf32>
    %191 = arith.mulf %190, %40 : vector<32x128xf32>
    %192 = arith.mulf %168, %188 : vector<1x128xf32>
    %193 = vector.broadcast %192 : vector<1x128xf32> to vector<32x128xf32>
    %194 = arith.mulf %193, %41 : vector<32x128xf32>
    %195 = arith.addf %191, %194 : vector<32x128xf32>
    %196 = arith.mulf %170, %188 : vector<1x128xf32>
    %197 = vector.broadcast %196 : vector<1x128xf32> to vector<32x128xf32>
    %198 = arith.mulf %197, %42 : vector<32x128xf32>
    %199 = arith.addf %195, %198 : vector<32x128xf32>
    %200 = arith.mulf %172, %188 : vector<1x128xf32>
    %201 = vector.broadcast %200 : vector<1x128xf32> to vector<32x128xf32>
    %202 = arith.mulf %201, %43 : vector<32x128xf32>
    %203 = arith.addf %199, %202 : vector<32x128xf32>
    %204 = arith.mulf %174, %188 : vector<1x128xf32>
    %205 = vector.broadcast %204 : vector<1x128xf32> to vector<32x128xf32>
    %206 = arith.mulf %205, %44 : vector<32x128xf32>
    %207 = arith.addf %203, %206 : vector<32x128xf32>
    %208 = arith.mulf %176, %188 : vector<1x128xf32>
    %209 = vector.broadcast %208 : vector<1x128xf32> to vector<32x128xf32>
    %210 = arith.mulf %209, %45 : vector<32x128xf32>
    %211 = arith.addf %207, %210 : vector<32x128xf32>
    %212 = arith.mulf %178, %188 : vector<1x128xf32>
    %213 = vector.broadcast %212 : vector<1x128xf32> to vector<32x128xf32>
    %214 = arith.mulf %213, %46 : vector<32x128xf32>
    %215 = arith.addf %211, %214 : vector<32x128xf32>
    %216 = arith.mulf %180, %188 : vector<1x128xf32>
    %217 = vector.broadcast %216 : vector<1x128xf32> to vector<32x128xf32>
    %218 = arith.mulf %217, %47 : vector<32x128xf32>
    %219 = arith.addf %215, %218 : vector<32x128xf32>
    %220 = arith.mulf %16, %32 : vector<32x128xf32>
    %cst_29 = arith.constant dense<0.000000e+00> : vector<128xf32>
    %221 = vector.multi_reduction <add>, %220, %cst_29 [0] : vector<32x128xf32> to vector<128xf32>
    %222 = vector.shape_cast %221 : vector<128xf32> to vector<1x128xf32>
    %223 = arith.mulf %16, %33 : vector<32x128xf32>
    %cst_30 = arith.constant dense<0.000000e+00> : vector<128xf32>
    %224 = vector.multi_reduction <add>, %223, %cst_30 [0] : vector<32x128xf32> to vector<128xf32>
    %225 = vector.shape_cast %224 : vector<128xf32> to vector<1x128xf32>
    %226 = arith.mulf %16, %34 : vector<32x128xf32>
    %cst_31 = arith.constant dense<0.000000e+00> : vector<128xf32>
    %227 = vector.multi_reduction <add>, %226, %cst_31 [0] : vector<32x128xf32> to vector<128xf32>
    %228 = vector.shape_cast %227 : vector<128xf32> to vector<1x128xf32>
    %229 = arith.mulf %16, %35 : vector<32x128xf32>
    %cst_32 = arith.constant dense<0.000000e+00> : vector<128xf32>
    %230 = vector.multi_reduction <add>, %229, %cst_32 [0] : vector<32x128xf32> to vector<128xf32>
    %231 = vector.shape_cast %230 : vector<128xf32> to vector<1x128xf32>
    %232 = arith.mulf %16, %36 : vector<32x128xf32>
    %cst_33 = arith.constant dense<0.000000e+00> : vector<128xf32>
    %233 = vector.multi_reduction <add>, %232, %cst_33 [0] : vector<32x128xf32> to vector<128xf32>
    %234 = vector.shape_cast %233 : vector<128xf32> to vector<1x128xf32>
    %235 = arith.mulf %16, %37 : vector<32x128xf32>
    %cst_34 = arith.constant dense<0.000000e+00> : vector<128xf32>
    %236 = vector.multi_reduction <add>, %235, %cst_34 [0] : vector<32x128xf32> to vector<128xf32>
    %237 = vector.shape_cast %236 : vector<128xf32> to vector<1x128xf32>
    %238 = arith.mulf %16, %38 : vector<32x128xf32>
    %cst_35 = arith.constant dense<0.000000e+00> : vector<128xf32>
    %239 = vector.multi_reduction <add>, %238, %cst_35 [0] : vector<32x128xf32> to vector<128xf32>
    %240 = vector.shape_cast %239 : vector<128xf32> to vector<1x128xf32>
    %241 = arith.mulf %16, %39 : vector<32x128xf32>
    %cst_36 = arith.constant dense<0.000000e+00> : vector<128xf32>
    %242 = vector.multi_reduction <add>, %241, %cst_36 [0] : vector<32x128xf32> to vector<128xf32>
    %243 = vector.shape_cast %242 : vector<128xf32> to vector<1x128xf32>
    %244 = arith.maximumf %222, %225 : vector<1x128xf32>
    %245 = arith.maximumf %244, %228 : vector<1x128xf32>
    %246 = arith.maximumf %245, %231 : vector<1x128xf32>
    %247 = arith.maximumf %246, %234 : vector<1x128xf32>
    %248 = arith.maximumf %247, %237 : vector<1x128xf32>
    %249 = arith.maximumf %248, %240 : vector<1x128xf32>
    %250 = arith.maximumf %249, %243 : vector<1x128xf32>
    %251 = arith.subf %222, %250 : vector<1x128xf32>
    %252 = math.exp %251 : vector<1x128xf32>
    %253 = arith.subf %225, %250 : vector<1x128xf32>
    %254 = math.exp %253 : vector<1x128xf32>
    %255 = arith.subf %228, %250 : vector<1x128xf32>
    %256 = math.exp %255 : vector<1x128xf32>
    %257 = arith.subf %231, %250 : vector<1x128xf32>
    %258 = math.exp %257 : vector<1x128xf32>
    %259 = arith.subf %234, %250 : vector<1x128xf32>
    %260 = math.exp %259 : vector<1x128xf32>
    %261 = arith.subf %237, %250 : vector<1x128xf32>
    %262 = math.exp %261 : vector<1x128xf32>
    %263 = arith.subf %240, %250 : vector<1x128xf32>
    %264 = math.exp %263 : vector<1x128xf32>
    %265 = arith.subf %243, %250 : vector<1x128xf32>
    %266 = math.exp %265 : vector<1x128xf32>
    %267 = arith.addf %252, %254 : vector<1x128xf32>
    %268 = arith.addf %267, %256 : vector<1x128xf32>
    %269 = arith.addf %268, %258 : vector<1x128xf32>
    %270 = arith.addf %269, %260 : vector<1x128xf32>
    %271 = arith.addf %270, %262 : vector<1x128xf32>
    %272 = arith.addf %271, %264 : vector<1x128xf32>
    %273 = arith.addf %272, %266 : vector<1x128xf32>
    %274 = tpu.reciprocal %273 {approx = true} : vector<1x128xf32> -> vector<1x128xf32>
    %275 = arith.mulf %252, %274 : vector<1x128xf32>
    %276 = vector.broadcast %275 : vector<1x128xf32> to vector<32x128xf32>
    %277 = arith.mulf %276, %40 : vector<32x128xf32>
    %278 = arith.mulf %254, %274 : vector<1x128xf32>
    %279 = vector.broadcast %278 : vector<1x128xf32> to vector<32x128xf32>
    %280 = arith.mulf %279, %41 : vector<32x128xf32>
    %281 = arith.addf %277, %280 : vector<32x128xf32>
    %282 = arith.mulf %256, %274 : vector<1x128xf32>
    %283 = vector.broadcast %282 : vector<1x128xf32> to vector<32x128xf32>
    %284 = arith.mulf %283, %42 : vector<32x128xf32>
    %285 = arith.addf %281, %284 : vector<32x128xf32>
    %286 = arith.mulf %258, %274 : vector<1x128xf32>
    %287 = vector.broadcast %286 : vector<1x128xf32> to vector<32x128xf32>
    %288 = arith.mulf %287, %43 : vector<32x128xf32>
    %289 = arith.addf %285, %288 : vector<32x128xf32>
    %290 = arith.mulf %260, %274 : vector<1x128xf32>
    %291 = vector.broadcast %290 : vector<1x128xf32> to vector<32x128xf32>
    %292 = arith.mulf %291, %44 : vector<32x128xf32>
    %293 = arith.addf %289, %292 : vector<32x128xf32>
    %294 = arith.mulf %262, %274 : vector<1x128xf32>
    %295 = vector.broadcast %294 : vector<1x128xf32> to vector<32x128xf32>
    %296 = arith.mulf %295, %45 : vector<32x128xf32>
    %297 = arith.addf %293, %296 : vector<32x128xf32>
    %298 = arith.mulf %264, %274 : vector<1x128xf32>
    %299 = vector.broadcast %298 : vector<1x128xf32> to vector<32x128xf32>
    %300 = arith.mulf %299, %46 : vector<32x128xf32>
    %301 = arith.addf %297, %300 : vector<32x128xf32>
    %302 = arith.mulf %266, %274 : vector<1x128xf32>
    %303 = vector.broadcast %302 : vector<1x128xf32> to vector<32x128xf32>
    %304 = arith.mulf %303, %47 : vector<32x128xf32>
    %305 = arith.addf %301, %304 : vector<32x128xf32>
    %306 = arith.mulf %19, %32 : vector<32x128xf32>
    %cst_37 = arith.constant dense<0.000000e+00> : vector<128xf32>
    %307 = vector.multi_reduction <add>, %306, %cst_37 [0] : vector<32x128xf32> to vector<128xf32>
    %308 = vector.shape_cast %307 : vector<128xf32> to vector<1x128xf32>
    %309 = arith.mulf %19, %33 : vector<32x128xf32>
    %cst_38 = arith.constant dense<0.000000e+00> : vector<128xf32>
    %310 = vector.multi_reduction <add>, %309, %cst_38 [0] : vector<32x128xf32> to vector<128xf32>
    %311 = vector.shape_cast %310 : vector<128xf32> to vector<1x128xf32>
    %312 = arith.mulf %19, %34 : vector<32x128xf32>
    %cst_39 = arith.constant dense<0.000000e+00> : vector<128xf32>
    %313 = vector.multi_reduction <add>, %312, %cst_39 [0] : vector<32x128xf32> to vector<128xf32>
    %314 = vector.shape_cast %313 : vector<128xf32> to vector<1x128xf32>
    %315 = arith.mulf %19, %35 : vector<32x128xf32>
    %cst_40 = arith.constant dense<0.000000e+00> : vector<128xf32>
    %316 = vector.multi_reduction <add>, %315, %cst_40 [0] : vector<32x128xf32> to vector<128xf32>
    %317 = vector.shape_cast %316 : vector<128xf32> to vector<1x128xf32>
    %318 = arith.mulf %19, %36 : vector<32x128xf32>
    %cst_41 = arith.constant dense<0.000000e+00> : vector<128xf32>
    %319 = vector.multi_reduction <add>, %318, %cst_41 [0] : vector<32x128xf32> to vector<128xf32>
    %320 = vector.shape_cast %319 : vector<128xf32> to vector<1x128xf32>
    %321 = arith.mulf %19, %37 : vector<32x128xf32>
    %cst_42 = arith.constant dense<0.000000e+00> : vector<128xf32>
    %322 = vector.multi_reduction <add>, %321, %cst_42 [0] : vector<32x128xf32> to vector<128xf32>
    %323 = vector.shape_cast %322 : vector<128xf32> to vector<1x128xf32>
    %324 = arith.mulf %19, %38 : vector<32x128xf32>
    %cst_43 = arith.constant dense<0.000000e+00> : vector<128xf32>
    %325 = vector.multi_reduction <add>, %324, %cst_43 [0] : vector<32x128xf32> to vector<128xf32>
    %326 = vector.shape_cast %325 : vector<128xf32> to vector<1x128xf32>
    %327 = arith.mulf %19, %39 : vector<32x128xf32>
    %cst_44 = arith.constant dense<0.000000e+00> : vector<128xf32>
    %328 = vector.multi_reduction <add>, %327, %cst_44 [0] : vector<32x128xf32> to vector<128xf32>
    %329 = vector.shape_cast %328 : vector<128xf32> to vector<1x128xf32>
    %330 = arith.maximumf %308, %311 : vector<1x128xf32>
    %331 = arith.maximumf %330, %314 : vector<1x128xf32>
    %332 = arith.maximumf %331, %317 : vector<1x128xf32>
    %333 = arith.maximumf %332, %320 : vector<1x128xf32>
    %334 = arith.maximumf %333, %323 : vector<1x128xf32>
    %335 = arith.maximumf %334, %326 : vector<1x128xf32>
    %336 = arith.maximumf %335, %329 : vector<1x128xf32>
    %337 = arith.subf %308, %336 : vector<1x128xf32>
    %338 = math.exp %337 : vector<1x128xf32>
    %339 = arith.subf %311, %336 : vector<1x128xf32>
    %340 = math.exp %339 : vector<1x128xf32>
    %341 = arith.subf %314, %336 : vector<1x128xf32>
    %342 = math.exp %341 : vector<1x128xf32>
    %343 = arith.subf %317, %336 : vector<1x128xf32>
    %344 = math.exp %343 : vector<1x128xf32>
    %345 = arith.subf %320, %336 : vector<1x128xf32>
    %346 = math.exp %345 : vector<1x128xf32>
    %347 = arith.subf %323, %336 : vector<1x128xf32>
    %348 = math.exp %347 : vector<1x128xf32>
    %349 = arith.subf %326, %336 : vector<1x128xf32>
    %350 = math.exp %349 : vector<1x128xf32>
    %351 = arith.subf %329, %336 : vector<1x128xf32>
    %352 = math.exp %351 : vector<1x128xf32>
    %353 = arith.addf %338, %340 : vector<1x128xf32>
    %354 = arith.addf %353, %342 : vector<1x128xf32>
    %355 = arith.addf %354, %344 : vector<1x128xf32>
    %356 = arith.addf %355, %346 : vector<1x128xf32>
    %357 = arith.addf %356, %348 : vector<1x128xf32>
    %358 = arith.addf %357, %350 : vector<1x128xf32>
    %359 = arith.addf %358, %352 : vector<1x128xf32>
    %360 = tpu.reciprocal %359 {approx = true} : vector<1x128xf32> -> vector<1x128xf32>
    %361 = arith.mulf %338, %360 : vector<1x128xf32>
    %362 = vector.broadcast %361 : vector<1x128xf32> to vector<32x128xf32>
    %363 = arith.mulf %362, %40 : vector<32x128xf32>
    %364 = arith.mulf %340, %360 : vector<1x128xf32>
    %365 = vector.broadcast %364 : vector<1x128xf32> to vector<32x128xf32>
    %366 = arith.mulf %365, %41 : vector<32x128xf32>
    %367 = arith.addf %363, %366 : vector<32x128xf32>
    %368 = arith.mulf %342, %360 : vector<1x128xf32>
    %369 = vector.broadcast %368 : vector<1x128xf32> to vector<32x128xf32>
    %370 = arith.mulf %369, %42 : vector<32x128xf32>
    %371 = arith.addf %367, %370 : vector<32x128xf32>
    %372 = arith.mulf %344, %360 : vector<1x128xf32>
    %373 = vector.broadcast %372 : vector<1x128xf32> to vector<32x128xf32>
    %374 = arith.mulf %373, %43 : vector<32x128xf32>
    %375 = arith.addf %371, %374 : vector<32x128xf32>
    %376 = arith.mulf %346, %360 : vector<1x128xf32>
    %377 = vector.broadcast %376 : vector<1x128xf32> to vector<32x128xf32>
    %378 = arith.mulf %377, %44 : vector<32x128xf32>
    %379 = arith.addf %375, %378 : vector<32x128xf32>
    %380 = arith.mulf %348, %360 : vector<1x128xf32>
    %381 = vector.broadcast %380 : vector<1x128xf32> to vector<32x128xf32>
    %382 = arith.mulf %381, %45 : vector<32x128xf32>
    %383 = arith.addf %379, %382 : vector<32x128xf32>
    %384 = arith.mulf %350, %360 : vector<1x128xf32>
    %385 = vector.broadcast %384 : vector<1x128xf32> to vector<32x128xf32>
    %386 = arith.mulf %385, %46 : vector<32x128xf32>
    %387 = arith.addf %383, %386 : vector<32x128xf32>
    %388 = arith.mulf %352, %360 : vector<1x128xf32>
    %389 = vector.broadcast %388 : vector<1x128xf32> to vector<32x128xf32>
    %390 = arith.mulf %389, %47 : vector<32x128xf32>
    %391 = arith.addf %387, %390 : vector<32x128xf32>
    %392 = arith.mulf %22, %32 : vector<32x128xf32>
    %cst_45 = arith.constant dense<0.000000e+00> : vector<128xf32>
    %393 = vector.multi_reduction <add>, %392, %cst_45 [0] : vector<32x128xf32> to vector<128xf32>
    %394 = vector.shape_cast %393 : vector<128xf32> to vector<1x128xf32>
    %395 = arith.mulf %22, %33 : vector<32x128xf32>
    %cst_46 = arith.constant dense<0.000000e+00> : vector<128xf32>
    %396 = vector.multi_reduction <add>, %395, %cst_46 [0] : vector<32x128xf32> to vector<128xf32>
    %397 = vector.shape_cast %396 : vector<128xf32> to vector<1x128xf32>
    %398 = arith.mulf %22, %34 : vector<32x128xf32>
    %cst_47 = arith.constant dense<0.000000e+00> : vector<128xf32>
    %399 = vector.multi_reduction <add>, %398, %cst_47 [0] : vector<32x128xf32> to vector<128xf32>
    %400 = vector.shape_cast %399 : vector<128xf32> to vector<1x128xf32>
    %401 = arith.mulf %22, %35 : vector<32x128xf32>
    %cst_48 = arith.constant dense<0.000000e+00> : vector<128xf32>
    %402 = vector.multi_reduction <add>, %401, %cst_48 [0] : vector<32x128xf32> to vector<128xf32>
    %403 = vector.shape_cast %402 : vector<128xf32> to vector<1x128xf32>
    %404 = arith.mulf %22, %36 : vector<32x128xf32>
    %cst_49 = arith.constant dense<0.000000e+00> : vector<128xf32>
    %405 = vector.multi_reduction <add>, %404, %cst_49 [0] : vector<32x128xf32> to vector<128xf32>
    %406 = vector.shape_cast %405 : vector<128xf32> to vector<1x128xf32>
    %407 = arith.mulf %22, %37 : vector<32x128xf32>
    %cst_50 = arith.constant dense<0.000000e+00> : vector<128xf32>
    %408 = vector.multi_reduction <add>, %407, %cst_50 [0] : vector<32x128xf32> to vector<128xf32>
    %409 = vector.shape_cast %408 : vector<128xf32> to vector<1x128xf32>
    %410 = arith.mulf %22, %38 : vector<32x128xf32>
    %cst_51 = arith.constant dense<0.000000e+00> : vector<128xf32>
    %411 = vector.multi_reduction <add>, %410, %cst_51 [0] : vector<32x128xf32> to vector<128xf32>
    %412 = vector.shape_cast %411 : vector<128xf32> to vector<1x128xf32>
    %413 = arith.mulf %22, %39 : vector<32x128xf32>
    %cst_52 = arith.constant dense<0.000000e+00> : vector<128xf32>
    %414 = vector.multi_reduction <add>, %413, %cst_52 [0] : vector<32x128xf32> to vector<128xf32>
    %415 = vector.shape_cast %414 : vector<128xf32> to vector<1x128xf32>
    %416 = arith.maximumf %394, %397 : vector<1x128xf32>
    %417 = arith.maximumf %416, %400 : vector<1x128xf32>
    %418 = arith.maximumf %417, %403 : vector<1x128xf32>
    %419 = arith.maximumf %418, %406 : vector<1x128xf32>
    %420 = arith.maximumf %419, %409 : vector<1x128xf32>
    %421 = arith.maximumf %420, %412 : vector<1x128xf32>
    %422 = arith.maximumf %421, %415 : vector<1x128xf32>
    %423 = arith.subf %394, %422 : vector<1x128xf32>
    %424 = math.exp %423 : vector<1x128xf32>
    %425 = arith.subf %397, %422 : vector<1x128xf32>
    %426 = math.exp %425 : vector<1x128xf32>
    %427 = arith.subf %400, %422 : vector<1x128xf32>
    %428 = math.exp %427 : vector<1x128xf32>
    %429 = arith.subf %403, %422 : vector<1x128xf32>
    %430 = math.exp %429 : vector<1x128xf32>
    %431 = arith.subf %406, %422 : vector<1x128xf32>
    %432 = math.exp %431 : vector<1x128xf32>
    %433 = arith.subf %409, %422 : vector<1x128xf32>
    %434 = math.exp %433 : vector<1x128xf32>
    %435 = arith.subf %412, %422 : vector<1x128xf32>
    %436 = math.exp %435 : vector<1x128xf32>
    %437 = arith.subf %415, %422 : vector<1x128xf32>
    %438 = math.exp %437 : vector<1x128xf32>
    %439 = arith.addf %424, %426 : vector<1x128xf32>
    %440 = arith.addf %439, %428 : vector<1x128xf32>
    %441 = arith.addf %440, %430 : vector<1x128xf32>
    %442 = arith.addf %441, %432 : vector<1x128xf32>
    %443 = arith.addf %442, %434 : vector<1x128xf32>
    %444 = arith.addf %443, %436 : vector<1x128xf32>
    %445 = arith.addf %444, %438 : vector<1x128xf32>
    %446 = tpu.reciprocal %445 {approx = true} : vector<1x128xf32> -> vector<1x128xf32>
    %447 = arith.mulf %424, %446 : vector<1x128xf32>
    %448 = vector.broadcast %447 : vector<1x128xf32> to vector<32x128xf32>
    %449 = arith.mulf %448, %40 : vector<32x128xf32>
    %450 = arith.mulf %426, %446 : vector<1x128xf32>
    %451 = vector.broadcast %450 : vector<1x128xf32> to vector<32x128xf32>
    %452 = arith.mulf %451, %41 : vector<32x128xf32>
    %453 = arith.addf %449, %452 : vector<32x128xf32>
    %454 = arith.mulf %428, %446 : vector<1x128xf32>
    %455 = vector.broadcast %454 : vector<1x128xf32> to vector<32x128xf32>
    %456 = arith.mulf %455, %42 : vector<32x128xf32>
    %457 = arith.addf %453, %456 : vector<32x128xf32>
    %458 = arith.mulf %430, %446 : vector<1x128xf32>
    %459 = vector.broadcast %458 : vector<1x128xf32> to vector<32x128xf32>
    %460 = arith.mulf %459, %43 : vector<32x128xf32>
    %461 = arith.addf %457, %460 : vector<32x128xf32>
    %462 = arith.mulf %432, %446 : vector<1x128xf32>
    %463 = vector.broadcast %462 : vector<1x128xf32> to vector<32x128xf32>
    %464 = arith.mulf %463, %44 : vector<32x128xf32>
    %465 = arith.addf %461, %464 : vector<32x128xf32>
    %466 = arith.mulf %434, %446 : vector<1x128xf32>
    %467 = vector.broadcast %466 : vector<1x128xf32> to vector<32x128xf32>
    %468 = arith.mulf %467, %45 : vector<32x128xf32>
    %469 = arith.addf %465, %468 : vector<32x128xf32>
    %470 = arith.mulf %436, %446 : vector<1x128xf32>
    %471 = vector.broadcast %470 : vector<1x128xf32> to vector<32x128xf32>
    %472 = arith.mulf %471, %46 : vector<32x128xf32>
    %473 = arith.addf %469, %472 : vector<32x128xf32>
    %474 = arith.mulf %438, %446 : vector<1x128xf32>
    %475 = vector.broadcast %474 : vector<1x128xf32> to vector<32x128xf32>
    %476 = arith.mulf %475, %47 : vector<32x128xf32>
    %477 = arith.addf %473, %476 : vector<32x128xf32>
    %478 = arith.mulf %25, %32 : vector<32x128xf32>
    %cst_53 = arith.constant dense<0.000000e+00> : vector<128xf32>
    %479 = vector.multi_reduction <add>, %478, %cst_53 [0] : vector<32x128xf32> to vector<128xf32>
    %480 = vector.shape_cast %479 : vector<128xf32> to vector<1x128xf32>
    %481 = arith.mulf %25, %33 : vector<32x128xf32>
    %cst_54 = arith.constant dense<0.000000e+00> : vector<128xf32>
    %482 = vector.multi_reduction <add>, %481, %cst_54 [0] : vector<32x128xf32> to vector<128xf32>
    %483 = vector.shape_cast %482 : vector<128xf32> to vector<1x128xf32>
    %484 = arith.mulf %25, %34 : vector<32x128xf32>
    %cst_55 = arith.constant dense<0.000000e+00> : vector<128xf32>
    %485 = vector.multi_reduction <add>, %484, %cst_55 [0] : vector<32x128xf32> to vector<128xf32>
    %486 = vector.shape_cast %485 : vector<128xf32> to vector<1x128xf32>
    %487 = arith.mulf %25, %35 : vector<32x128xf32>
    %cst_56 = arith.constant dense<0.000000e+00> : vector<128xf32>
    %488 = vector.multi_reduction <add>, %487, %cst_56 [0] : vector<32x128xf32> to vector<128xf32>
    %489 = vector.shape_cast %488 : vector<128xf32> to vector<1x128xf32>
    %490 = arith.mulf %25, %36 : vector<32x128xf32>
    %cst_57 = arith.constant dense<0.000000e+00> : vector<128xf32>
    %491 = vector.multi_reduction <add>, %490, %cst_57 [0] : vector<32x128xf32> to vector<128xf32>
    %492 = vector.shape_cast %491 : vector<128xf32> to vector<1x128xf32>
    %493 = arith.mulf %25, %37 : vector<32x128xf32>
    %cst_58 = arith.constant dense<0.000000e+00> : vector<128xf32>
    %494 = vector.multi_reduction <add>, %493, %cst_58 [0] : vector<32x128xf32> to vector<128xf32>
    %495 = vector.shape_cast %494 : vector<128xf32> to vector<1x128xf32>
    %496 = arith.mulf %25, %38 : vector<32x128xf32>
    %cst_59 = arith.constant dense<0.000000e+00> : vector<128xf32>
    %497 = vector.multi_reduction <add>, %496, %cst_59 [0] : vector<32x128xf32> to vector<128xf32>
    %498 = vector.shape_cast %497 : vector<128xf32> to vector<1x128xf32>
    %499 = arith.mulf %25, %39 : vector<32x128xf32>
    %cst_60 = arith.constant dense<0.000000e+00> : vector<128xf32>
    %500 = vector.multi_reduction <add>, %499, %cst_60 [0] : vector<32x128xf32> to vector<128xf32>
    %501 = vector.shape_cast %500 : vector<128xf32> to vector<1x128xf32>
    %502 = arith.maximumf %480, %483 : vector<1x128xf32>
    %503 = arith.maximumf %502, %486 : vector<1x128xf32>
    %504 = arith.maximumf %503, %489 : vector<1x128xf32>
    %505 = arith.maximumf %504, %492 : vector<1x128xf32>
    %506 = arith.maximumf %505, %495 : vector<1x128xf32>
    %507 = arith.maximumf %506, %498 : vector<1x128xf32>
    %508 = arith.maximumf %507, %501 : vector<1x128xf32>
    %509 = arith.subf %480, %508 : vector<1x128xf32>
    %510 = math.exp %509 : vector<1x128xf32>
    %511 = arith.subf %483, %508 : vector<1x128xf32>
    %512 = math.exp %511 : vector<1x128xf32>
    %513 = arith.subf %486, %508 : vector<1x128xf32>
    %514 = math.exp %513 : vector<1x128xf32>
    %515 = arith.subf %489, %508 : vector<1x128xf32>
    %516 = math.exp %515 : vector<1x128xf32>
    %517 = arith.subf %492, %508 : vector<1x128xf32>
    %518 = math.exp %517 : vector<1x128xf32>
    %519 = arith.subf %495, %508 : vector<1x128xf32>
    %520 = math.exp %519 : vector<1x128xf32>
    %521 = arith.subf %498, %508 : vector<1x128xf32>
    %522 = math.exp %521 : vector<1x128xf32>
    %523 = arith.subf %501, %508 : vector<1x128xf32>
    %524 = math.exp %523 : vector<1x128xf32>
    %525 = arith.addf %510, %512 : vector<1x128xf32>
    %526 = arith.addf %525, %514 : vector<1x128xf32>
    %527 = arith.addf %526, %516 : vector<1x128xf32>
    %528 = arith.addf %527, %518 : vector<1x128xf32>
    %529 = arith.addf %528, %520 : vector<1x128xf32>
    %530 = arith.addf %529, %522 : vector<1x128xf32>
    %531 = arith.addf %530, %524 : vector<1x128xf32>
    %532 = tpu.reciprocal %531 {approx = true} : vector<1x128xf32> -> vector<1x128xf32>
    %533 = arith.mulf %510, %532 : vector<1x128xf32>
    %534 = vector.broadcast %533 : vector<1x128xf32> to vector<32x128xf32>
    %535 = arith.mulf %534, %40 : vector<32x128xf32>
    %536 = arith.mulf %512, %532 : vector<1x128xf32>
    %537 = vector.broadcast %536 : vector<1x128xf32> to vector<32x128xf32>
    %538 = arith.mulf %537, %41 : vector<32x128xf32>
    %539 = arith.addf %535, %538 : vector<32x128xf32>
    %540 = arith.mulf %514, %532 : vector<1x128xf32>
    %541 = vector.broadcast %540 : vector<1x128xf32> to vector<32x128xf32>
    %542 = arith.mulf %541, %42 : vector<32x128xf32>
    %543 = arith.addf %539, %542 : vector<32x128xf32>
    %544 = arith.mulf %516, %532 : vector<1x128xf32>
    %545 = vector.broadcast %544 : vector<1x128xf32> to vector<32x128xf32>
    %546 = arith.mulf %545, %43 : vector<32x128xf32>
    %547 = arith.addf %543, %546 : vector<32x128xf32>
    %548 = arith.mulf %518, %532 : vector<1x128xf32>
    %549 = vector.broadcast %548 : vector<1x128xf32> to vector<32x128xf32>
    %550 = arith.mulf %549, %44 : vector<32x128xf32>
    %551 = arith.addf %547, %550 : vector<32x128xf32>
    %552 = arith.mulf %520, %532 : vector<1x128xf32>
    %553 = vector.broadcast %552 : vector<1x128xf32> to vector<32x128xf32>
    %554 = arith.mulf %553, %45 : vector<32x128xf32>
    %555 = arith.addf %551, %554 : vector<32x128xf32>
    %556 = arith.mulf %522, %532 : vector<1x128xf32>
    %557 = vector.broadcast %556 : vector<1x128xf32> to vector<32x128xf32>
    %558 = arith.mulf %557, %46 : vector<32x128xf32>
    %559 = arith.addf %555, %558 : vector<32x128xf32>
    %560 = arith.mulf %524, %532 : vector<1x128xf32>
    %561 = vector.broadcast %560 : vector<1x128xf32> to vector<32x128xf32>
    %562 = arith.mulf %561, %47 : vector<32x128xf32>
    %563 = arith.addf %559, %562 : vector<32x128xf32>
    %564 = arith.mulf %28, %32 : vector<32x128xf32>
    %cst_61 = arith.constant dense<0.000000e+00> : vector<128xf32>
    %565 = vector.multi_reduction <add>, %564, %cst_61 [0] : vector<32x128xf32> to vector<128xf32>
    %566 = vector.shape_cast %565 : vector<128xf32> to vector<1x128xf32>
    %567 = arith.mulf %28, %33 : vector<32x128xf32>
    %cst_62 = arith.constant dense<0.000000e+00> : vector<128xf32>
    %568 = vector.multi_reduction <add>, %567, %cst_62 [0] : vector<32x128xf32> to vector<128xf32>
    %569 = vector.shape_cast %568 : vector<128xf32> to vector<1x128xf32>
    %570 = arith.mulf %28, %34 : vector<32x128xf32>
    %cst_63 = arith.constant dense<0.000000e+00> : vector<128xf32>
    %571 = vector.multi_reduction <add>, %570, %cst_63 [0] : vector<32x128xf32> to vector<128xf32>
    %572 = vector.shape_cast %571 : vector<128xf32> to vector<1x128xf32>
    %573 = arith.mulf %28, %35 : vector<32x128xf32>
    %cst_64 = arith.constant dense<0.000000e+00> : vector<128xf32>
    %574 = vector.multi_reduction <add>, %573, %cst_64 [0] : vector<32x128xf32> to vector<128xf32>
    %575 = vector.shape_cast %574 : vector<128xf32> to vector<1x128xf32>
    %576 = arith.mulf %28, %36 : vector<32x128xf32>
    %cst_65 = arith.constant dense<0.000000e+00> : vector<128xf32>
    %577 = vector.multi_reduction <add>, %576, %cst_65 [0] : vector<32x128xf32> to vector<128xf32>
    %578 = vector.shape_cast %577 : vector<128xf32> to vector<1x128xf32>
    %579 = arith.mulf %28, %37 : vector<32x128xf32>
    %cst_66 = arith.constant dense<0.000000e+00> : vector<128xf32>
    %580 = vector.multi_reduction <add>, %579, %cst_66 [0] : vector<32x128xf32> to vector<128xf32>
    %581 = vector.shape_cast %580 : vector<128xf32> to vector<1x128xf32>
    %582 = arith.mulf %28, %38 : vector<32x128xf32>
    %cst_67 = arith.constant dense<0.000000e+00> : vector<128xf32>
    %583 = vector.multi_reduction <add>, %582, %cst_67 [0] : vector<32x128xf32> to vector<128xf32>
    %584 = vector.shape_cast %583 : vector<128xf32> to vector<1x128xf32>
    %585 = arith.mulf %28, %39 : vector<32x128xf32>
    %cst_68 = arith.constant dense<0.000000e+00> : vector<128xf32>
    %586 = vector.multi_reduction <add>, %585, %cst_68 [0] : vector<32x128xf32> to vector<128xf32>
    %587 = vector.shape_cast %586 : vector<128xf32> to vector<1x128xf32>
    %588 = arith.maximumf %566, %569 : vector<1x128xf32>
    %589 = arith.maximumf %588, %572 : vector<1x128xf32>
    %590 = arith.maximumf %589, %575 : vector<1x128xf32>
    %591 = arith.maximumf %590, %578 : vector<1x128xf32>
    %592 = arith.maximumf %591, %581 : vector<1x128xf32>
    %593 = arith.maximumf %592, %584 : vector<1x128xf32>
    %594 = arith.maximumf %593, %587 : vector<1x128xf32>
    %595 = arith.subf %566, %594 : vector<1x128xf32>
    %596 = math.exp %595 : vector<1x128xf32>
    %597 = arith.subf %569, %594 : vector<1x128xf32>
    %598 = math.exp %597 : vector<1x128xf32>
    %599 = arith.subf %572, %594 : vector<1x128xf32>
    %600 = math.exp %599 : vector<1x128xf32>
    %601 = arith.subf %575, %594 : vector<1x128xf32>
    %602 = math.exp %601 : vector<1x128xf32>
    %603 = arith.subf %578, %594 : vector<1x128xf32>
    %604 = math.exp %603 : vector<1x128xf32>
    %605 = arith.subf %581, %594 : vector<1x128xf32>
    %606 = math.exp %605 : vector<1x128xf32>
    %607 = arith.subf %584, %594 : vector<1x128xf32>
    %608 = math.exp %607 : vector<1x128xf32>
    %609 = arith.subf %587, %594 : vector<1x128xf32>
    %610 = math.exp %609 : vector<1x128xf32>
    %611 = arith.addf %596, %598 : vector<1x128xf32>
    %612 = arith.addf %611, %600 : vector<1x128xf32>
    %613 = arith.addf %612, %602 : vector<1x128xf32>
    %614 = arith.addf %613, %604 : vector<1x128xf32>
    %615 = arith.addf %614, %606 : vector<1x128xf32>
    %616 = arith.addf %615, %608 : vector<1x128xf32>
    %617 = arith.addf %616, %610 : vector<1x128xf32>
    %618 = tpu.reciprocal %617 {approx = true} : vector<1x128xf32> -> vector<1x128xf32>
    %619 = arith.mulf %596, %618 : vector<1x128xf32>
    %620 = vector.broadcast %619 : vector<1x128xf32> to vector<32x128xf32>
    %621 = arith.mulf %620, %40 : vector<32x128xf32>
    %622 = arith.mulf %598, %618 : vector<1x128xf32>
    %623 = vector.broadcast %622 : vector<1x128xf32> to vector<32x128xf32>
    %624 = arith.mulf %623, %41 : vector<32x128xf32>
    %625 = arith.addf %621, %624 : vector<32x128xf32>
    %626 = arith.mulf %600, %618 : vector<1x128xf32>
    %627 = vector.broadcast %626 : vector<1x128xf32> to vector<32x128xf32>
    %628 = arith.mulf %627, %42 : vector<32x128xf32>
    %629 = arith.addf %625, %628 : vector<32x128xf32>
    %630 = arith.mulf %602, %618 : vector<1x128xf32>
    %631 = vector.broadcast %630 : vector<1x128xf32> to vector<32x128xf32>
    %632 = arith.mulf %631, %43 : vector<32x128xf32>
    %633 = arith.addf %629, %632 : vector<32x128xf32>
    %634 = arith.mulf %604, %618 : vector<1x128xf32>
    %635 = vector.broadcast %634 : vector<1x128xf32> to vector<32x128xf32>
    %636 = arith.mulf %635, %44 : vector<32x128xf32>
    %637 = arith.addf %633, %636 : vector<32x128xf32>
    %638 = arith.mulf %606, %618 : vector<1x128xf32>
    %639 = vector.broadcast %638 : vector<1x128xf32> to vector<32x128xf32>
    %640 = arith.mulf %639, %45 : vector<32x128xf32>
    %641 = arith.addf %637, %640 : vector<32x128xf32>
    %642 = arith.mulf %608, %618 : vector<1x128xf32>
    %643 = vector.broadcast %642 : vector<1x128xf32> to vector<32x128xf32>
    %644 = arith.mulf %643, %46 : vector<32x128xf32>
    %645 = arith.addf %641, %644 : vector<32x128xf32>
    %646 = arith.mulf %610, %618 : vector<1x128xf32>
    %647 = vector.broadcast %646 : vector<1x128xf32> to vector<32x128xf32>
    %648 = arith.mulf %647, %47 : vector<32x128xf32>
    %649 = arith.addf %645, %648 : vector<32x128xf32>
    %650 = arith.mulf %31, %32 : vector<32x128xf32>
    %cst_69 = arith.constant dense<0.000000e+00> : vector<128xf32>
    %651 = vector.multi_reduction <add>, %650, %cst_69 [0] : vector<32x128xf32> to vector<128xf32>
    %652 = vector.shape_cast %651 : vector<128xf32> to vector<1x128xf32>
    %653 = arith.mulf %31, %33 : vector<32x128xf32>
    %cst_70 = arith.constant dense<0.000000e+00> : vector<128xf32>
    %654 = vector.multi_reduction <add>, %653, %cst_70 [0] : vector<32x128xf32> to vector<128xf32>
    %655 = vector.shape_cast %654 : vector<128xf32> to vector<1x128xf32>
    %656 = arith.mulf %31, %34 : vector<32x128xf32>
    %cst_71 = arith.constant dense<0.000000e+00> : vector<128xf32>
    %657 = vector.multi_reduction <add>, %656, %cst_71 [0] : vector<32x128xf32> to vector<128xf32>
    %658 = vector.shape_cast %657 : vector<128xf32> to vector<1x128xf32>
    %659 = arith.mulf %31, %35 : vector<32x128xf32>
    %cst_72 = arith.constant dense<0.000000e+00> : vector<128xf32>
    %660 = vector.multi_reduction <add>, %659, %cst_72 [0] : vector<32x128xf32> to vector<128xf32>
    %661 = vector.shape_cast %660 : vector<128xf32> to vector<1x128xf32>
    %662 = arith.mulf %31, %36 : vector<32x128xf32>
    %cst_73 = arith.constant dense<0.000000e+00> : vector<128xf32>
    %663 = vector.multi_reduction <add>, %662, %cst_73 [0] : vector<32x128xf32> to vector<128xf32>
    %664 = vector.shape_cast %663 : vector<128xf32> to vector<1x128xf32>
    %665 = arith.mulf %31, %37 : vector<32x128xf32>
    %cst_74 = arith.constant dense<0.000000e+00> : vector<128xf32>
    %666 = vector.multi_reduction <add>, %665, %cst_74 [0] : vector<32x128xf32> to vector<128xf32>
    %667 = vector.shape_cast %666 : vector<128xf32> to vector<1x128xf32>
    %668 = arith.mulf %31, %38 : vector<32x128xf32>
    %cst_75 = arith.constant dense<0.000000e+00> : vector<128xf32>
    %669 = vector.multi_reduction <add>, %668, %cst_75 [0] : vector<32x128xf32> to vector<128xf32>
    %670 = vector.shape_cast %669 : vector<128xf32> to vector<1x128xf32>
    %671 = arith.mulf %31, %39 : vector<32x128xf32>
    %cst_76 = arith.constant dense<0.000000e+00> : vector<128xf32>
    %672 = vector.multi_reduction <add>, %671, %cst_76 [0] : vector<32x128xf32> to vector<128xf32>
    %673 = vector.shape_cast %672 : vector<128xf32> to vector<1x128xf32>
    %674 = arith.maximumf %652, %655 : vector<1x128xf32>
    %675 = arith.maximumf %674, %658 : vector<1x128xf32>
    %676 = arith.maximumf %675, %661 : vector<1x128xf32>
    %677 = arith.maximumf %676, %664 : vector<1x128xf32>
    %678 = arith.maximumf %677, %667 : vector<1x128xf32>
    %679 = arith.maximumf %678, %670 : vector<1x128xf32>
    %680 = arith.maximumf %679, %673 : vector<1x128xf32>
    %681 = arith.subf %652, %680 : vector<1x128xf32>
    %682 = math.exp %681 : vector<1x128xf32>
    %683 = arith.subf %655, %680 : vector<1x128xf32>
    %684 = math.exp %683 : vector<1x128xf32>
    %685 = arith.subf %658, %680 : vector<1x128xf32>
    %686 = math.exp %685 : vector<1x128xf32>
    %687 = arith.subf %661, %680 : vector<1x128xf32>
    %688 = math.exp %687 : vector<1x128xf32>
    %689 = arith.subf %664, %680 : vector<1x128xf32>
    %690 = math.exp %689 : vector<1x128xf32>
    %691 = arith.subf %667, %680 : vector<1x128xf32>
    %692 = math.exp %691 : vector<1x128xf32>
    %693 = arith.subf %670, %680 : vector<1x128xf32>
    %694 = math.exp %693 : vector<1x128xf32>
    %695 = arith.subf %673, %680 : vector<1x128xf32>
    %696 = math.exp %695 : vector<1x128xf32>
    %697 = arith.addf %682, %684 : vector<1x128xf32>
    %698 = arith.addf %697, %686 : vector<1x128xf32>
    %699 = arith.addf %698, %688 : vector<1x128xf32>
    %700 = arith.addf %699, %690 : vector<1x128xf32>
    %701 = arith.addf %700, %692 : vector<1x128xf32>
    %702 = arith.addf %701, %694 : vector<1x128xf32>
    %703 = arith.addf %702, %696 : vector<1x128xf32>
    %704 = tpu.reciprocal %703 {approx = true} : vector<1x128xf32> -> vector<1x128xf32>
    %705 = arith.mulf %682, %704 : vector<1x128xf32>
    %706 = vector.broadcast %705 : vector<1x128xf32> to vector<32x128xf32>
    %707 = arith.mulf %706, %40 : vector<32x128xf32>
    %708 = arith.mulf %684, %704 : vector<1x128xf32>
    %709 = vector.broadcast %708 : vector<1x128xf32> to vector<32x128xf32>
    %710 = arith.mulf %709, %41 : vector<32x128xf32>
    %711 = arith.addf %707, %710 : vector<32x128xf32>
    %712 = arith.mulf %686, %704 : vector<1x128xf32>
    %713 = vector.broadcast %712 : vector<1x128xf32> to vector<32x128xf32>
    %714 = arith.mulf %713, %42 : vector<32x128xf32>
    %715 = arith.addf %711, %714 : vector<32x128xf32>
    %716 = arith.mulf %688, %704 : vector<1x128xf32>
    %717 = vector.broadcast %716 : vector<1x128xf32> to vector<32x128xf32>
    %718 = arith.mulf %717, %43 : vector<32x128xf32>
    %719 = arith.addf %715, %718 : vector<32x128xf32>
    %720 = arith.mulf %690, %704 : vector<1x128xf32>
    %721 = vector.broadcast %720 : vector<1x128xf32> to vector<32x128xf32>
    %722 = arith.mulf %721, %44 : vector<32x128xf32>
    %723 = arith.addf %719, %722 : vector<32x128xf32>
    %724 = arith.mulf %692, %704 : vector<1x128xf32>
    %725 = vector.broadcast %724 : vector<1x128xf32> to vector<32x128xf32>
    %726 = arith.mulf %725, %45 : vector<32x128xf32>
    %727 = arith.addf %723, %726 : vector<32x128xf32>
    %728 = arith.mulf %694, %704 : vector<1x128xf32>
    %729 = vector.broadcast %728 : vector<1x128xf32> to vector<32x128xf32>
    %730 = arith.mulf %729, %46 : vector<32x128xf32>
    %731 = arith.addf %727, %730 : vector<32x128xf32>
    %732 = arith.mulf %696, %704 : vector<1x128xf32>
    %733 = vector.broadcast %732 : vector<1x128xf32> to vector<32x128xf32>
    %734 = arith.mulf %733, %47 : vector<32x128xf32>
    %735 = arith.addf %731, %734 : vector<32x128xf32>
    %736 = tpu.concatenate %133, %219, %305, %391, %477, %563, %649, %735 in 0 : vector<32x128xf32>, vector<32x128xf32>, vector<32x128xf32>, vector<32x128xf32>, vector<32x128xf32>, vector<32x128xf32>, vector<32x128xf32>, vector<32x128xf32> -> vector<256x128xf32>
    %737 = tpu.transpose %736, [1, 0] : vector<256x128xf32> -> vector<128x256xf32>
    %738 = arith.truncf %737 : vector<128x256xf32> to vector<128x256xbf16>
    %c0_77 = arith.constant 0 : index
    %c0_78 = arith.constant 0 : index
    %739 = vector.load %arg4[%c0_77, %c0_78] : memref<256x256xbf16, #tpu.memory_space<vmem>>, vector<256x256xbf16>
    %cst_79 = arith.constant dense<0.000000e+00> : vector<128x256xf32>
    %740 = tpu.matmul %738, %739, %cst_79 {dimension_numbers = #tpu.dot_dimension_numbers<[1], [0], [0], [1], [0, 0, 1, 1], [], []>} : vector<128x256xbf16>, vector<256x256xbf16>, vector<128x256xf32> -> vector<128x256xf32>
    %c0_80 = arith.constant 0 : index
    %c0_81 = arith.constant 0 : index
    %741 = vector.load %arg5[%c0_80, %c0_81] : memref<1x256xf32, #tpu.memory_space<vmem>>, vector<1x256xf32>
    %742 = vector.broadcast %741 : vector<1x256xf32> to vector<128x256xf32>
    %743 = arith.addf %740, %742 : vector<128x256xf32>
    %c0_82 = arith.constant 0 : index
    %c0_83 = arith.constant 0 : index
    %744 = vector.load %arg6[%c0_82, %c0_83] : memref<128x256xf32, #tpu.memory_space<vmem>>, vector<128x256xf32>
    tpu.vector_store %arg6[%c0_82, %c0_83], %743 {strides = array<i32>} : memref<128x256xf32, #tpu.memory_space<vmem>>, vector<128x256xf32>,
    return
  }
  func.func @transform_0(%arg0: i32) -> (i32, i32) {
    %c0_i32 = arith.constant 0 : i32
    %c0_i32_0 = arith.constant 0 : i32
    return %arg0, %c0_i32 : i32, i32
  }
  func.func @transform_1(%arg0: i32) -> (i32, i32) {
    %c0_i32 = arith.constant 0 : i32
    %c0_i32_0 = arith.constant 0 : i32
    %c0_i32_1 = arith.constant 0 : i32
    return %c0_i32, %c0_i32_0 : i32, i32
  }
  func.func @transform_2(%arg0: i32) -> (i32, i32) {
    %c0_i32 = arith.constant 0 : i32
    %c0_i32_0 = arith.constant 0 : i32
    %c0_i32_1 = arith.constant 0 : i32
    return %c0_i32, %c0_i32_0 : i32, i32
  }
  func.func @transform_3(%arg0: i32) -> (i32, i32) {
    %c0_i32 = arith.constant 0 : i32
    %c0_i32_0 = arith.constant 0 : i32
    %c0_i32_1 = arith.constant 0 : i32
    return %c0_i32, %c0_i32_0 : i32, i32
  }
  func.func @transform_4(%arg0: i32) -> (i32, i32) {
    %c0_i32 = arith.constant 0 : i32
    %c0_i32_0 = arith.constant 0 : i32
    %c0_i32_1 = arith.constant 0 : i32
    return %c0_i32, %c0_i32_0 : i32, i32
  }
  func.func @transform_5(%arg0: i32) -> (i32, i32) {
    %c0_i32 = arith.constant 0 : i32
    %c0_i32_0 = arith.constant 0 : i32
    return %arg0, %c0_i32 : i32, i32
  }
}

</mosaic_0001>

<llo_original>
// kernel: _simple_attention_call.1
$region0: #{_simple_attention_call.1}
  #allocation0 [shape = 'u32[]', space=smem, size = 0x4, offset = 0x4, fixed_abs, tag = 'smem constant byte address 0x4 - core index']
  #allocation1 [shape = 'u32[72,128]{1,0:T(1,128)}', space=vmem, size = 0x9000, scoped, tag = 'internal scratch']
  %s0 = inlined_call_operand.hbm [shape: f32[512,256], index: 0, kind: input, shape index: {}]
  %s1 = inlined_call_operand.vmem [shape: bf16[768,256], index: 1, kind: input, shape index: {}]
  %s2 = inlined_call_operand.vmem [shape: f32[768,1], index: 2, kind: input, shape index: {}]
  %s3 = inlined_call_operand.hbm [shape: bf16[256,256], index: 3, kind: input, shape index: {}]
  %s4 = inlined_call_operand.vmem [shape: f32[1,256], index: 4, kind: input, shape index: {}]
  %s5 = inlined_call_operand.hbm [shape: f32[512,256], index: 5, kind: output, shape index: {}]
  %s6 = sld [smem:[#allocation0]]
  $region61: #{_simple_attention_call.1} parent=0
    _
  %s8 = ssub.s32 1, %s6
  %s9 = scalar_select 0, %s8, %s6
  $region1: #{_simple_attention_call.1} parent=0
    #allocation2 [shape = 'u8[262144]{0}', space=vmem, size = 0x40000, scoped, tag = 'input window, operand 0']
    #allocation3 [shape = 's32[2]{0}', space=sflag, size = 0x8, scoped, tag = 'scoped memory for _simple_attention_call.1']
    #allocation4 [shape = 's32[2]{0}', space=sflag, size = 0x8, scoped, tag = 'scoped memory for _simple_attention_call.1']
    #allocation5 [shape = 'u8[131072]{0}', space=vmem, size = 0x20000, scoped, tag = 'input window, operand 3, single buffered']
    #allocation6 [shape = 's32[1]{0}', space=sflag, size = 0x4, scoped, tag = 'scoped memory for _simple_attention_call.1']
    #allocation7 [shape = 'u8[262144]{0}', space=vmem, size = 0x40000, scoped, tag = 'output window, operand 0']
    %10 = vsyncpa [#allocation3], 0
    %s11 = scalar_lea.sflag [#allocation3], 1
    %12 = vsyncpa %s11, 0
    %13 = vsyncpa [#allocation6], 0
    %14 = vsyncpa [#allocation4], 0
    %s15 = scalar_lea.sflag [#allocation4], 1
    %16 = vsyncpa %s15, 0
    loop: start=0, step=1, limit=6
    $region2: #{_simple_attention_call.1} parent=1 // loop_pre_header
      _
    $region3: #{_simple_attention_call.1} parent=1 // loop_header
      %s18 = sphi 0, %s22
      %p19 = scmp.ge.s32.totalorder %s18, 6
      %s28 = sphi 0, %s30
      %s31 = sphi 0, %s28
      %s32 = sphi 0, %s31
      %s48 = sphi 0, %s32
      %s52 = sphi 0, %s52
      %s54 = sphi 0, %s52
      %s55 = sphi 0, %s54
      %s69 = sphi 0, %s55
      %s73 = sphi 0, %s73
      %s75 = sphi 0, %s73
      %s76 = sphi 0, %s75
      %s90 = sphi 0, %s76
      %s94 = sphi 0, %s94
      %s96 = sphi 0, %s94
      %s97 = sphi 0, %s96
      %s111 = sphi 0, %s97
      %s115 = sphi 0, %s115
      %s117 = sphi 0, %s115
      %s118 = sphi 0, %s117
      %s132 = sphi 0, %s118
      %s138 = sphi 0, %s140
      %s141 = sphi 0, %s138
      %s142 = sphi 0, %s141
      %s158 = sphi 0, %s142
    $region4: #{_simple_attention_call.1} parent=1 // loop_header_branch
      %21 = sbr.rel (%p19) target = $region8
    $region5: #{_simple_attention_call.1} parent=1 // loop_body
      %s23 = ssub.s32 %s18, 1
      %s24 = ssub.s32 %s18, 2
      %s25 = sadd.s32 %s18, 1
      %s26 = ssub.s32 %s18, %s25
      %p27 = scmp.eq.s32.totalorder %s26, 0
      %s29 = sadd.s32 %s28, 1
      %s30 = scalar_select %p27, %s28, %s29
      %p33 = pneg %p27
      %p34 = scmp.eq.s32.totalorder %s18, 3
      %p35 = por %p33, %p34
      %p36 = scmp.ne.s32.totalorder %s28, %s31
      %p37 = scmp.eq.s32.totalorder %s18, 0
      %p38 = por %p36, %p37
      %p39 = scmp.ne.s32.totalorder %s28, %s31
      %p40 = scmp.eq.s32.totalorder %s23, 3
      %p41 = por %p39, %p40
      %p42 = scmp.ne.s32.totalorder %s31, %s32
      %p43 = scmp.eq.s32.totalorder %s23, 0
      %p44 = por %p42, %p43
      %p45 = scmp.ne.s32.totalorder %s31, %s32
      %p46 = scmp.eq.s32.totalorder %s24, 3
      %p47 = por %p45, %p46
      %p49 = scmp.ne.s32.totalorder %s32, %s48
      %p50 = scmp.eq.s32.totalorder %s24, 0
      %p51 = por %p49, %p50
      %s53 = sadd.s32 %s52, 1
      %p56 = scmp.eq.s32.totalorder %s18, 3
      %p57 = scmp.ne.s32.totalorder %s52, %s54
      %p58 = scmp.eq.s32.totalorder %s18, 0
      %p59 = por %p57, %p58
      %p60 = scmp.ne.s32.totalorder %s52, %s54
      %p61 = scmp.eq.s32.totalorder %s23, 3
      %p62 = por %p60, %p61
      %p63 = scmp.ne.s32.totalorder %s54, %s55
      %p64 = scmp.eq.s32.totalorder %s23, 0
      %p65 = por %p63, %p64
      %p66 = scmp.ne.s32.totalorder %s54, %s55
      %p67 = scmp.eq.s32.totalorder %s24, 3
      %p68 = por %p66, %p67
      %p70 = scmp.ne.s32.totalorder %s55, %s69
      %p71 = scmp.eq.s32.totalorder %s24, 0
      %p72 = por %p70, %p71
      %s74 = sadd.s32 %s73, 1
      %p77 = scmp.eq.s32.totalorder %s18, 3
      %p78 = scmp.ne.s32.totalorder %s73, %s75
      %p79 = scmp.eq.s32.totalorder %s18, 0
      %p80 = por %p78, %p79
      %p81 = scmp.ne.s32.totalorder %s73, %s75
      %p82 = scmp.eq.s32.totalorder %s23, 3
      %p83 = por %p81, %p82
      %p84 = scmp.ne.s32.totalorder %s75, %s76
      %p85 = scmp.eq.s32.totalorder %s23, 0
      %p86 = por %p84, %p85
      %p87 = scmp.ne.s32.totalorder %s75, %s76
      %p88 = scmp.eq.s32.totalorder %s24, 3
      %p89 = por %p87, %p88
      %p91 = scmp.ne.s32.totalorder %s76, %s90
      %p92 = scmp.eq.s32.totalorder %s24, 0
      %p93 = por %p91, %p92
      %s95 = sadd.s32 %s94, 1
      %p98 = scmp.eq.s32.totalorder %s18, 3
      %p99 = scmp.ne.s32.totalorder %s94, %s96
      %p100 = scmp.eq.s32.totalorder %s18, 0
      %p101 = por %p99, %p100
      %p102 = scmp.ne.s32.totalorder %s94, %s96
      %p103 = scmp.eq.s32.totalorder %s23, 3
      %p104 = por %p102, %p103
      %p105 = scmp.ne.s32.totalorder %s96, %s97
      %p106 = scmp.eq.s32.totalorder %s23, 0
      %p107 = por %p105, %p106
      %p108 = scmp.ne.s32.totalorder %s96, %s97
      %p109 = scmp.eq.s32.totalorder %s24, 3
      %p110 = por %p108, %p109
      %p112 = scmp.ne.s32.totalorder %s97, %s111
      %p113 = scmp.eq.s32.totalorder %s24, 0
      %p114 = por %p112, %p113
      %s116 = sadd.s32 %s115, 1
      %p119 = scmp.eq.s32.totalorder %s18, 3
      %p120 = scmp.ne.s32.totalorder %s115, %s117
      %p121 = scmp.eq.s32.totalorder %s18, 0
      %p122 = por %p120, %p121
      %p123 = scmp.ne.s32.totalorder %s115, %s117
      %p124 = scmp.eq.s32.totalorder %s23, 3
      %p125 = por %p123, %p124
      %p126 = scmp.ne.s32.totalorder %s117, %s118
      %p127 = scmp.eq.s32.totalorder %s23, 0
      %p128 = por %p126, %p127
      %p129 = scmp.ne.s32.totalorder %s117, %s118
      %p130 = scmp.eq.s32.totalorder %s24, 3
      %p131 = por %p129, %p130
      %p133 = scmp.ne.s32.totalorder %s118, %s132
      %p134 = scmp.eq.s32.totalorder %s24, 0
      %p135 = por %p133, %p134
      %s136 = ssub.s32 %s18, %s25
      %p137 = scmp.eq.s32.totalorder %s136, 0
      %s139 = sadd.s32 %s138, 1
      %s140 = scalar_select %p137, %s138, %s139
      %p143 = pneg %p137
      %p144 = scmp.eq.s32.totalorder %s18, 3
      %p145 = por %p143, %p144
      %p146 = scmp.ne.s32.totalorder %s138, %s141
      %p147 = scmp.eq.s32.totalorder %s18, 0
      %p148 = por %p146, %p147
      %p149 = scmp.ne.s32.totalorder %s138, %s141
      %p150 = scmp.eq.s32.totalorder %s23, 3
      %p151 = por %p149, %p150
      %p152 = scmp.ne.s32.totalorder %s141, %s142
      %p153 = scmp.eq.s32.totalorder %s23, 0
      %p154 = por %p152, %p153
      %p155 = scmp.ne.s32.totalorder %s141, %s142
      %p156 = scmp.eq.s32.totalorder %s24, 3
      %p157 = por %p155, %p156
      %p159 = scmp.ne.s32.totalorder %s142, %s158
      %p160 = scmp.eq.s32.totalorder %s24, 0
      %p161 = por %p159, %p160
      %p162 = scmp.le.s32.totalorder 1, %s18
      %p163 = scmp.lt.s32.totalorder %s18, 5
      %p164 = pnand %p162, %p163
      %p165 = pneg %p164
      // Predicated region
      $region9: #{_simple_attention_call.1} parent=5 // pred_check
        _
      $region10: #{_simple_attention_call.1} parent=5 // pred_check_branch
        %167 = sbr.rel (%p164) target = $region12
      $region11: #{_simple_attention_call.1} parent=5 // pred_region
        %s168 = ssub.s32 %s18, 1
        // Predicated region
        $region13: #{_simple_attention_call.1} parent=11 // pred_check
          %p169 = pneg %p65
        $region14: #{_simple_attention_call.1} parent=11 // pred_check_branch
          %171 = sbr.rel (%p169) target = $region16
        $region15: #{_simple_attention_call.1} parent=11 // pred_region
          _
        $region16: #{_simple_attention_call.1} parent=11 // pred_fallthru
          _
        // Predicated region
        $region17: #{_simple_attention_call.1} parent=11 // pred_check
          %p172 = pneg %p86
        $region18: #{_simple_attention_call.1} parent=11 // pred_check_branch
          %174 = sbr.rel (%p172) target = $region20
        $region19: #{_simple_attention_call.1} parent=11 // pred_region
          _
        $region20: #{_simple_attention_call.1} parent=11 // pred_fallthru
          _
        // Predicated region
        $region21: #{_simple_attention_call.1} parent=11 // pred_check
          %p175 = pneg %p107
        $region22: #{_simple_attention_call.1} parent=11 // pred_check_branch
          %177 = sbr.rel (%p175) target = $region24
        $region23: #{_simple_attention_call.1} parent=11 // pred_region
          %179 = vsyncadd [#allocation6], 0
          %s180 = sshll.u32 %s3, 4
          %s181 = int_to_ptr.hbm [resolvable:$true] %s180
          %s182 = sshll.u32 [#allocation5], 4
          %s183 = int_to_ptr.vmem [resolvable:$true] %s182
          %188 = dma.hbm_to_vmem [thread:$0]  %s181, 4096, %s183, [#allocation6], 128, 128, 8
        $region24: #{_simple_attention_call.1} parent=11 // pred_fallthru
          _
        // Predicated region
        $region25: #{_simple_attention_call.1} parent=11 // pred_check
          %p189 = pneg %p128
        $region26: #{_simple_attention_call.1} parent=11 // pred_check_branch
          %191 = sbr.rel (%p189) target = $region28
        $region27: #{_simple_attention_call.1} parent=11 // pred_region
          _
        $region28: #{_simple_attention_call.1} parent=11 // pred_fallthru
          _
      $region12: #{_simple_attention_call.1} parent=5 // pred_fallthru
        _
      %p192 = scmp.lt.s32.totalorder %s18, 4
      // Predicated region
      $region29: #{_simple_attention_call.1} parent=5 // pred_check
        %p193 = pneg %p192
      $region30: #{_simple_attention_call.1} parent=5 // pred_check_branch
        %195 = sbr.rel (%p193) target = $region32
      $region31: #{_simple_attention_call.1} parent=5 // pred_region
        // Predicated region
        $region33: #{_simple_attention_call.1} parent=31 // pred_check
          %p196 = pneg %p38
        $region34: #{_simple_attention_call.1} parent=31 // pred_check_branch
          %198 = sbr.rel (%p196) target = $region36
        $region35: #{_simple_attention_call.1} parent=31 // pred_region
          %s199 = sand.u32 %s28, 1
          %s200 = scalar_lea.sflag [#allocation3], %s199
          %s201 = sand.u32 %s28, 1
          %s202 = smul.addr %s201, 256
          %s203 = scalar_lea.vmem [#allocation2], %s202
          %s204 = smul.u32 16, %s18
          %206 = vsyncadd %s200, 0
          %s207 = smul.addr %s204, 2
          %s208 = smul.addr %s207, 8
          %s209 = scalar_lea.hbm %s0, %s208
          %s210 = sshll.u32 %s209, 4
          %s211 = int_to_ptr.hbm [resolvable:$true] %s210
          %s212 = sshll.u32 %s203, 4
          %s213 = int_to_ptr.vmem [resolvable:$true] %s212
          %218 = dma.hbm_to_vmem [thread:$0]  %s211, 4096, %s213, %s200, 256, 256, 16
        $region36: #{_simple_attention_call.1} parent=31 // pred_fallthru
          _
      $region32: #{_simple_attention_call.1} parent=5 // pred_fallthru
        _
      %p219 = scmp.le.s32.totalorder 1, %s18
      %p220 = scmp.lt.s32.totalorder %s18, 5
      %p221 = pnand %p219, %p220
      %p222 = pneg %p221
      // Predicated region
      $region37: #{_simple_attention_call.1} parent=5 // pred_check
        _
      $region38: #{_simple_attention_call.1} parent=5 // pred_check_branch
        %224 = sbr.rel (%p221) target = $region40
      $region39: #{_simple_attention_call.1} parent=5 // pred_region
        %s225 = ssub.s32 %s18, 1
        %s226 = sand.u32 %s31, 1
        %s227 = scalar_lea.sflag [#allocation3], %s226
        %s228 = sand.u32 %s31, 1
        %s229 = smul.addr %s228, 256
        %s230 = scalar_lea.vmem [#allocation2], %s229
        // Predicated region
        $region41: #{_simple_attention_call.1} parent=39 // pred_check
          %p231 = pneg %p44
        $region42: #{_simple_attention_call.1} parent=39 // pred_check_branch
          %233 = sbr.rel (%p231) target = $region44
        $region43: #{_simple_attention_call.1} parent=39 // pred_region
          %235 = dma.done %s227, 4096
        $region44: #{_simple_attention_call.1} parent=39 // pred_fallthru
          _
        // Predicated region
        $region45: #{_simple_attention_call.1} parent=39 // pred_check
          %p236 = pneg %p107
        $region46: #{_simple_attention_call.1} parent=39 // pred_check_branch
          %238 = sbr.rel (%p236) target = $region48
        $region47: #{_simple_attention_call.1} parent=39 // pred_region
          %240 = dma.done [#allocation6], 4096
        $region48: #{_simple_attention_call.1} parent=39 // pred_fallthru
          _
        %s241 = sand.u32 %s31, 1
        %s242 = scalar_lea.sflag [#allocation3], %s241
        %s243 = sand.u32 %s31, 1
        %s244 = smul.addr %s243, 256
        %s245 = scalar_lea.vmem [#allocation2], %s244
        %p246 = pneg %p44
        %p247 = pneg %p41
        %p248 = pneg %p65
        %p249 = pneg %p62
        %p250 = pneg %p86
        %p251 = pneg %p83
        %p252 = pneg %p107
        %p253 = pneg %p104
        %p254 = pneg %p128
        %p255 = pneg %p125
        %p256 = pneg %p154
        %p257 = pneg %p151
        %s258 = sand.u32 %s141, 1
        %s259 = scalar_lea.sflag [#allocation4], %s258
        %s260 = sand.u32 %s141, 1
        %s261 = smul.addr %s260, 256
        %s262 = scalar_lea.vmem [#allocation7], %s261
        %s263 = smul.u32 16, %s23
        %s264 = smul.u32 16, %s23
        %v265 = vld [vmem:[%s230] sm:$0xff]
        %v266 = vld [vmem:[%s230 + $0x8] sm:$0xff]
        %v267 = vld [vmem:[%s230 + $0x10] sm:$0xff]
        %v268 = vld [vmem:[%s230 + $0x18] sm:$0xff]
        %v269 = vld [vmem:[%s230 + $0x20] sm:$0xff]
        %v270 = vld [vmem:[%s230 + $0x28] sm:$0xff]
        %v271 = vld [vmem:[%s230 + $0x30] sm:$0xff]
        %v272 = vld [vmem:[%s230 + $0x38] sm:$0xff]
        %v273 = vld [vmem:[%s230 + $0x40] sm:$0xff]
        %v274 = vld [vmem:[%s230 + $0x48] sm:$0xff]
        %v275 = vld [vmem:[%s230 + $0x50] sm:$0xff]
        %v276 = vld [vmem:[%s230 + $0x58] sm:$0xff]
        %v277 = vld [vmem:[%s230 + $0x60] sm:$0xff]
        %v278 = vld [vmem:[%s230 + $0x68] sm:$0xff]
        %v279 = vld [vmem:[%s230 + $0x70] sm:$0xff]
        %v280 = vld [vmem:[%s230 + $0x78] sm:$0xff]
        %v281 = vld [vmem:[%s230 + $0x80] sm:$0xff]
        %v282 = vld [vmem:[%s230 + $0x88] sm:$0xff]
        %v283 = vld [vmem:[%s230 + $0x90] sm:$0xff]
        %v284 = vld [vmem:[%s230 + $0x98] sm:$0xff]
        %v285 = vld [vmem:[%s230 + $0xa0] sm:$0xff]
        %v286 = vld [vmem:[%s230 + $0xa8] sm:$0xff]
        %v287 = vld [vmem:[%s230 + $0xb0] sm:$0xff]
        %v288 = vld [vmem:[%s230 + $0xb8] sm:$0xff]
        %v289 = vld [vmem:[%s230 + $0xc0] sm:$0xff]
        %v290 = vld [vmem:[%s230 + $0xc8] sm:$0xff]
        %v291 = vld [vmem:[%s230 + $0xd0] sm:$0xff]
        %v292 = vld [vmem:[%s230 + $0xd8] sm:$0xff]
        %v293 = vld [vmem:[%s230 + $0xe0] sm:$0xff]
        %v294 = vld [vmem:[%s230 + $0xe8] sm:$0xff]
        %v295 = vld [vmem:[%s230 + $0xf0] sm:$0xff]
        %v296 = vld [vmem:[%s230 + $0xf8] sm:$0xff]
        %297 = vxpose.xlu0.b32.start [1/16] %v265, 128
        %298 = vxpose.xlu0.b32.cont [2/16] %v267, 128
        %299 = vxpose.xlu0.b32.cont [3/16] %v269, 128
        %300 = vxpose.xlu0.b32.cont [4/16] %v271, 128
        %301 = vxpose.xlu0.b32.cont [5/16] %v273, 128
        %302 = vxpose.xlu0.b32.cont [6/16] %v275, 128
        %303 = vxpose.xlu0.b32.cont [7/16] %v277, 128
        %304 = vxpose.xlu0.b32.cont [8/16] %v279, 128
        %305 = vxpose.xlu0.b32.cont [9/16] %v281, 128
        %306 = vxpose.xlu0.b32.cont [10/16] %v283, 128
        %307 = vxpose.xlu0.b32.cont [11/16] %v285, 128
        %308 = vxpose.xlu0.b32.cont [12/16] %v287, 128
        %309 = vxpose.xlu0.b32.cont [13/16] %v289, 128
        %310 = vxpose.xlu0.b32.cont [14/16] %v291, 128
        %311 = vxpose.xlu0.b32.cont [15/16] %v293, 128
        %312 = vxpose.xlu0.b32.end [16/16] %v295, 128
        %v313 = vpop.trf.xlu0
        %v314 = vpop.trf.xlu0
        %v315 = vpop.trf.xlu0
        %v316 = vpop.trf.xlu0
        %v317 = vpop.trf.xlu0
        %v318 = vpop.trf.xlu0
        %v319 = vpop.trf.xlu0
        %v320 = vpop.trf.xlu0
        %v321 = vpop.trf.xlu0
        %v322 = vpop.trf.xlu0
        %v323 = vpop.trf.xlu0
        %v324 = vpop.trf.xlu0
        %v325 = vpop.trf.xlu0
        %v326 = vpop.trf.xlu0
        %v327 = vpop.trf.xlu0
        %v328 = vpop.trf.xlu0
        %329 = vxpose.xlu0.b32.start [1/16] %v266, 128
        %330 = vxpose.xlu0.b32.cont [2/16] %v268, 128
        %331 = vxpose.xlu0.b32.cont [3/16] %v270, 128
        %332 = vxpose.xlu0.b32.cont [4/16] %v272, 128
        %333 = vxpose.xlu0.b32.cont [5/16] %v274, 128
        %334 = vxpose.xlu0.b32.cont [6/16] %v276, 128
        %335 = vxpose.xlu0.b32.cont [7/16] %v278, 128
        %336 = vxpose.xlu0.b32.cont [8/16] %v280, 128
        %337 = vxpose.xlu0.b32.cont [9/16] %v282, 128
        %338 = vxpose.xlu0.b32.cont [10/16] %v284, 128
        %339 = vxpose.xlu0.b32.cont [11/16] %v286, 128
        %340 = vxpose.xlu0.b32.cont [12/16] %v288, 128
        %341 = vxpose.xlu0.b32.cont [13/16] %v290, 128
        %342 = vxpose.xlu0.b32.cont [14/16] %v292, 128
        %343 = vxpose.xlu0.b32.cont [15/16] %v294, 128
        %344 = vxpose.xlu0.b32.end [16/16] %v296, 128
        %v345 = vpop.trf.xlu0
        %v346 = vpop.trf.xlu0
        %v347 = vpop.trf.xlu0
        %v348 = vpop.trf.xlu0
        %v349 = vpop.trf.xlu0
        %v350 = vpop.trf.xlu0
        %v351 = vpop.trf.xlu0
        %v352 = vpop.trf.xlu0
        %v353 = vpop.trf.xlu0
        %v354 = vpop.trf.xlu0
        %v355 = vpop.trf.xlu0
        %v356 = vpop.trf.xlu0
        %v357 = vpop.trf.xlu0
        %v358 = vpop.trf.xlu0
        %v359 = vpop.trf.xlu0
        %v360 = vpop.trf.xlu0
        %v361 = vpack.c.bf16 %v314, %v313
        %v362 = vpack.c.bf16 %v316, %v315
        %v363 = vpack.c.bf16 %v318, %v317
        %v364 = vpack.c.bf16 %v320, %v319
        %v365 = vpack.c.bf16 %v322, %v321
        %v366 = vpack.c.bf16 %v324, %v323
        %v367 = vpack.c.bf16 %v326, %v325
        %v368 = vpack.c.bf16 %v328, %v327
        %v369 = vpack.c.bf16 %v346, %v345
        %v370 = vpack.c.bf16 %v348, %v347
        %v371 = vpack.c.bf16 %v350, %v349
        %v372 = vpack.c.bf16 %v352, %v351
        %v373 = vpack.c.bf16 %v354, %v353
        %v374 = vpack.c.bf16 %v356, %v355
        %v375 = vpack.c.bf16 %v358, %v357
        %v376 = vpack.c.bf16 %v360, %v359
        %v377 = vld [vmem:[%s1] sm:$0xff]
        %v378 = vld [vmem:[%s1 + $0x8] sm:$0xff]
        %v379 = vld [vmem:[%s1 + $0x10] sm:$0xff]
        %v380 = vld [vmem:[%s1 + $0x18] sm:$0xff]
        %v381 = vld [vmem:[%s1 + $0x20] sm:$0xff]
        %v382 = vld [vmem:[%s1 + $0x28] sm:$0xff]
        %v383 = vld [vmem:[%s1 + $0x30] sm:$0xff]
        %v384 = vld [vmem:[%s1 + $0x38] sm:$0xff]
        %v385 = vld [vmem:[%s1 + $0x40] sm:$0xff]
        %v386 = vld [vmem:[%s1 + $0x48] sm:$0xff]
        %v387 = vld [vmem:[%s1 + $0x50] sm:$0xff]
        %v388 = vld [vmem:[%s1 + $0x58] sm:$0xff]
        %v389 = vld [vmem:[%s1 + $0x60] sm:$0xff]
        %v390 = vld [vmem:[%s1 + $0x68] sm:$0xff]
        %v391 = vld [vmem:[%s1 + $0x70] sm:$0xff]
        %v392 = vld [vmem:[%s1 + $0x78] sm:$0xff]
        %v393 = vld [vmem:[%s1 + $0x80] sm:$0xff]
        %v394 = vld [vmem:[%s1 + $0x88] sm:$0xff]
        %v395 = vld [vmem:[%s1 + $0x90] sm:$0xff]
        %v396 = vld [vmem:[%s1 + $0x98] sm:$0xff]
        %v397 = vld [vmem:[%s1 + $0xa0] sm:$0xff]
        %v398 = vld [vmem:[%s1 + $0xa8] sm:$0xff]
        %v399 = vld [vmem:[%s1 + $0xb0] sm:$0xff]
        %v400 = vld [vmem:[%s1 + $0xb8] sm:$0xff]
        %v401 = vld [vmem:[%s1 + $0xc0] sm:$0xff]
        %v402 = vld [vmem:[%s1 + $0xc8] sm:$0xff]
        %v403 = vld [vmem:[%s1 + $0xd0] sm:$0xff]
        %v404 = vld [vmem:[%s1 + $0xd8] sm:$0xff]
        %v405 = vld [vmem:[%s1 + $0xe0] sm:$0xff]
        %v406 = vld [vmem:[%s1 + $0xe8] sm:$0xff]
        %v407 = vld [vmem:[%s1 + $0xf0] sm:$0xff]
        %v408 = vld [vmem:[%s1 + $0xf8] sm:$0xff]
        %v409 = vld [vmem:[%s1 + $0x100] sm:$0xff]
        %v410 = vld [vmem:[%s1 + $0x108] sm:$0xff]
        %v411 = vld [vmem:[%s1 + $0x110] sm:$0xff]
        %v412 = vld [vmem:[%s1 + $0x118] sm:$0xff]
        %v413 = vld [vmem:[%s1 + $0x120] sm:$0xff]
        %v414 = vld [vmem:[%s1 + $0x128] sm:$0xff]
        %v415 = vld [vmem:[%s1 + $0x130] sm:$0xff]
        %v416 = vld [vmem:[%s1 + $0x138] sm:$0xff]
        %v417 = vld [vmem:[%s1 + $0x140] sm:$0xff]
        %v418 = vld [vmem:[%s1 + $0x148] sm:$0xff]
        %v419 = vld [vmem:[%s1 + $0x150] sm:$0xff]
        %v420 = vld [vmem:[%s1 + $0x158] sm:$0xff]
        %v421 = vld [vmem:[%s1 + $0x160] sm:$0xff]
        %v422 = vld [vmem:[%s1 + $0x168] sm:$0xff]
        %v423 = vld [vmem:[%s1 + $0x170] sm:$0xff]
        %v424 = vld [vmem:[%s1 + $0x178] sm:$0xff]
        %v425 = vld [vmem:[%s1 + $0x180] sm:$0xff]
        %v426 = vld [vmem:[%s1 + $0x188] sm:$0xff]
        %v427 = vld [vmem:[%s1 + $0x190] sm:$0xff]
        %v428 = vld [vmem:[%s1 + $0x198] sm:$0xff]
        %v429 = vld [vmem:[%s1 + $0x1a0] sm:$0xff]
        %v430 = vld [vmem:[%s1 + $0x1a8] sm:$0xff]
        %v431 = vld [vmem:[%s1 + $0x1b0] sm:$0xff]
        %v432 = vld [vmem:[%s1 + $0x1b8] sm:$0xff]
        %v433 = vld [vmem:[%s1 + $0x1c0] sm:$0xff]
        %v434 = vld [vmem:[%s1 + $0x1c8] sm:$0xff]
        %v435 = vld [vmem:[%s1 + $0x1d0] sm:$0xff]
        %v436 = vld [vmem:[%s1 + $0x1d8] sm:$0xff]
        %v437 = vld [vmem:[%s1 + $0x1e0] sm:$0xff]
        %v438 = vld [vmem:[%s1 + $0x1e8] sm:$0xff]
        %v439 = vld [vmem:[%s1 + $0x1f0] sm:$0xff]
        %v440 = vld [vmem:[%s1 + $0x1f8] sm:$0xff]
        %v441 = vld [vmem:[%s1 + $0x200] sm:$0xff]
        %v442 = vld [vmem:[%s1 + $0x208] sm:$0xff]
        %v443 = vld [vmem:[%s1 + $0x210] sm:$0xff]
        %v444 = vld [vmem:[%s1 + $0x218] sm:$0xff]
        %v445 = vld [vmem:[%s1 + $0x220] sm:$0xff]
        %v446 = vld [vmem:[%s1 + $0x228] sm:$0xff]
        %v447 = vld [vmem:[%s1 + $0x230] sm:$0xff]
        %v448 = vld [vmem:[%s1 + $0x238] sm:$0xff]
        %v449 = vld [vmem:[%s1 + $0x240] sm:$0xff]
        %v450 = vld [vmem:[%s1 + $0x248] sm:$0xff]
        %v451 = vld [vmem:[%s1 + $0x250] sm:$0xff]
        %v452 = vld [vmem:[%s1 + $0x258] sm:$0xff]
        %v453 = vld [vmem:[%s1 + $0x260] sm:$0xff]
        %v454 = vld [vmem:[%s1 + $0x268] sm:$0xff]
        %v455 = vld [vmem:[%s1 + $0x270] sm:$0xff]
        %v456 = vld [vmem:[%s1 + $0x278] sm:$0xff]
        %v457 = vld [vmem:[%s1 + $0x280] sm:$0xff]
        %v458 = vld [vmem:[%s1 + $0x288] sm:$0xff]
        %v459 = vld [vmem:[%s1 + $0x290] sm:$0xff]
        %v460 = vld [vmem:[%s1 + $0x298] sm:$0xff]
        %v461 = vld [vmem:[%s1 + $0x2a0] sm:$0xff]
        %v462 = vld [vmem:[%s1 + $0x2a8] sm:$0xff]
        %v463 = vld [vmem:[%s1 + $0x2b0] sm:$0xff]
        %v464 = vld [vmem:[%s1 + $0x2b8] sm:$0xff]
        %v465 = vld [vmem:[%s1 + $0x2c0] sm:$0xff]
        %v466 = vld [vmem:[%s1 + $0x2c8] sm:$0xff]
        %v467 = vld [vmem:[%s1 + $0x2d0] sm:$0xff]
        %v468 = vld [vmem:[%s1 + $0x2d8] sm:$0xff]
        %v469 = vld [vmem:[%s1 + $0x2e0] sm:$0xff]
        %v470 = vld [vmem:[%s1 + $0x2e8] sm:$0xff]
        %v471 = vld [vmem:[%s1 + $0x2f0] sm:$0xff]
        %v472 = vld [vmem:[%s1 + $0x2f8] sm:$0xff]
        %v473 = vld [vmem:[%s2] sm:$0xff]
        %v474 = vld [vmem:[%s2 + $0x8] sm:$0xff]
        %v475 = vld [vmem:[%s2 + $0x10] sm:$0xff]
        %v476 = vld [vmem:[%s2 + $0x18] sm:$0xff]
        %v477 = vld [vmem:[%s2 + $0x20] sm:$0xff]
        %v478 = vld [vmem:[%s2 + $0x28] sm:$0xff]
        %v479 = vld [vmem:[%s2 + $0x30] sm:$0xff]
        %v480 = vld [vmem:[%s2 + $0x38] sm:$0xff]
        %v481 = vld [vmem:[%s2 + $0x40] sm:$0xff]
        %v482 = vld [vmem:[%s2 + $0x48] sm:$0xff]
        %v483 = vld [vmem:[%s2 + $0x50] sm:$0xff]
        %v484 = vld [vmem:[%s2 + $0x58] sm:$0xff]
        %v485 = vld [vmem:[%s2 + $0x60] sm:$0xff]
        %v486 = vld [vmem:[%s2 + $0x68] sm:$0xff]
        %v487 = vld [vmem:[%s2 + $0x70] sm:$0xff]
        %v488 = vld [vmem:[%s2 + $0x78] sm:$0xff]
        %v489 = vld [vmem:[%s2 + $0x80] sm:$0xff]
        %v490 = vld [vmem:[%s2 + $0x88] sm:$0xff]
        %v491 = vld [vmem:[%s2 + $0x90] sm:$0xff]
        %v492 = vld [vmem:[%s2 + $0x98] sm:$0xff]
        %v493 = vld [vmem:[%s2 + $0xa0] sm:$0xff]
        %v494 = vld [vmem:[%s2 + $0xa8] sm:$0xff]
        %v495 = vld [vmem:[%s2 + $0xb0] sm:$0xff]
        %v496 = vld [vmem:[%s2 + $0xb8] sm:$0xff]
        %v497 = vld [vmem:[%s2 + $0xc0] sm:$0xff]
        %v498 = vld [vmem:[%s2 + $0xc8] sm:$0xff]
        %v499 = vld [vmem:[%s2 + $0xd0] sm:$0xff]
        %v500 = vld [vmem:[%s2 + $0xd8] sm:$0xff]
        %v501 = vld [vmem:[%s2 + $0xe0] sm:$0xff]
        %v502 = vld [vmem:[%s2 + $0xe8] sm:$0xff]
        %v503 = vld [vmem:[%s2 + $0xf0] sm:$0xff]
        %v504 = vld [vmem:[%s2 + $0xf8] sm:$0xff]
        %v505 = vld [vmem:[%s2 + $0x100] sm:$0xff]
        %v506 = vld [vmem:[%s2 + $0x108] sm:$0xff]
        %v507 = vld [vmem:[%s2 + $0x110] sm:$0xff]
        %v508 = vld [vmem:[%s2 + $0x118] sm:$0xff]
        %v509 = vld [vmem:[%s2 + $0x120] sm:$0xff]
        %v510 = vld [vmem:[%s2 + $0x128] sm:$0xff]
        %v511 = vld [vmem:[%s2 + $0x130] sm:$0xff]
        %v512 = vld [vmem:[%s2 + $0x138] sm:$0xff]
        %v513 = vld [vmem:[%s2 + $0x140] sm:$0xff]
        %v514 = vld [vmem:[%s2 + $0x148] sm:$0xff]
        %v515 = vld [vmem:[%s2 + $0x150] sm:$0xff]
        %v516 = vld [vmem:[%s2 + $0x158] sm:$0xff]
        %v517 = vld [vmem:[%s2 + $0x160] sm:$0xff]
        %v518 = vld [vmem:[%s2 + $0x168] sm:$0xff]
        %v519 = vld [vmem:[%s2 + $0x170] sm:$0xff]
        %v520 = vld [vmem:[%s2 + $0x178] sm:$0xff]
        %v521 = vld [vmem:[%s2 + $0x180] sm:$0xff]
        %v522 = vld [vmem:[%s2 + $0x188] sm:$0xff]
        %v523 = vld [vmem:[%s2 + $0x190] sm:$0xff]
        %v524 = vld [vmem:[%s2 + $0x198] sm:$0xff]
        %v525 = vld [vmem:[%s2 + $0x1a0] sm:$0xff]
        %v526 = vld [vmem:[%s2 + $0x1a8] sm:$0xff]
        %v527 = vld [vmem:[%s2 + $0x1b0] sm:$0xff]
        %v528 = vld [vmem:[%s2 + $0x1b8] sm:$0xff]
        %v529 = vld [vmem:[%s2 + $0x1c0] sm:$0xff]
        %v530 = vld [vmem:[%s2 + $0x1c8] sm:$0xff]
        %v531 = vld [vmem:[%s2 + $0x1d0] sm:$0xff]
        %v532 = vld [vmem:[%s2 + $0x1d8] sm:$0xff]
        %v533 = vld [vmem:[%s2 + $0x1e0] sm:$0xff]
        %v534 = vld [vmem:[%s2 + $0x1e8] sm:$0xff]
        %v535 = vld [vmem:[%s2 + $0x1f0] sm:$0xff]
        %v536 = vld [vmem:[%s2 + $0x1f8] sm:$0xff]
        %v537 = vld [vmem:[%s2 + $0x200] sm:$0xff]
        %v538 = vld [vmem:[%s2 + $0x208] sm:$0xff]
        %v539 = vld [vmem:[%s2 + $0x210] sm:$0xff]
        %v540 = vld [vmem:[%s2 + $0x218] sm:$0xff]
        %v541 = vld [vmem:[%s2 + $0x220] sm:$0xff]
        %v542 = vld [vmem:[%s2 + $0x228] sm:$0xff]
        %v543 = vld [vmem:[%s2 + $0x230] sm:$0xff]
        %v544 = vld [vmem:[%s2 + $0x238] sm:$0xff]
        %v545 = vld [vmem:[%s2 + $0x240] sm:$0xff]
        %v546 = vld [vmem:[%s2 + $0x248] sm:$0xff]
        %v547 = vld [vmem:[%s2 + $0x250] sm:$0xff]
        %v548 = vld [vmem:[%s2 + $0x258] sm:$0xff]
        %v549 = vld [vmem:[%s2 + $0x260] sm:$0xff]
        %v550 = vld [vmem:[%s2 + $0x268] sm:$0xff]
        %v551 = vld [vmem:[%s2 + $0x270] sm:$0xff]
        %v552 = vld [vmem:[%s2 + $0x278] sm:$0xff]
        %v553 = vld [vmem:[%s2 + $0x280] sm:$0xff]
        %v554 = vld [vmem:[%s2 + $0x288] sm:$0xff]
        %v555 = vld [vmem:[%s2 + $0x290] sm:$0xff]
        %v556 = vld [vmem:[%s2 + $0x298] sm:$0xff]
        %v557 = vld [vmem:[%s2 + $0x2a0] sm:$0xff]
        %v558 = vld [vmem:[%s2 + $0x2a8] sm:$0xff]
        %v559 = vld [vmem:[%s2 + $0x2b0] sm:$0xff]
        %v560 = vld [vmem:[%s2 + $0x2b8] sm:$0xff]
        %v561 = vld [vmem:[%s2 + $0x2c0] sm:$0xff]
        %v562 = vld [vmem:[%s2 + $0x2c8] sm:$0xff]
        %v563 = vld [vmem:[%s2 + $0x2d0] sm:$0xff]
        %v564 = vld [vmem:[%s2 + $0x2d8] sm:$0xff]
        %v565 = vld [vmem:[%s2 + $0x2e0] sm:$0xff]
        %v566 = vld [vmem:[%s2 + $0x2e8] sm:$0xff]
        %v567 = vld [vmem:[%s2 + $0x2f0] sm:$0xff]
        %v568 = vld [vmem:[%s2 + $0x2f8] sm:$0xff]
        %570 = vset.pattern.permute.xlu0 0
        %571 = vperm.xlu0 %570, %v473
        %v572 = vpop.permute.xlu0 %571
        %575 = vset.pattern.permute.xlu0 0
        %576 = vperm.xlu0 %575, %v474
        %v577 = vpop.permute.xlu0 %576
        %580 = vset.pattern.permute.xlu0 0
        %581 = vperm.xlu0 %580, %v475
        %v582 = vpop.permute.xlu0 %581
        %585 = vset.pattern.permute.xlu0 0
        %586 = vperm.xlu0 %585, %v476
        %v587 = vpop.permute.xlu0 %586
        %590 = vset.pattern.permute.xlu0 0
        %591 = vperm.xlu0 %590, %v477
        %v592 = vpop.permute.xlu0 %591
        %595 = vset.pattern.permute.xlu0 0
        %596 = vperm.xlu0 %595, %v478
        %v597 = vpop.permute.xlu0 %596
        %600 = vset.pattern.permute.xlu0 0
        %601 = vperm.xlu0 %600, %v479
        %v602 = vpop.permute.xlu0 %601
        %605 = vset.pattern.permute.xlu0 0
        %606 = vperm.xlu0 %605, %v480
        %v607 = vpop.permute.xlu0 %606
        %610 = vset.pattern.permute.xlu0 0
        %611 = vperm.xlu0 %610, %v481
        %v612 = vpop.permute.xlu0 %611
        %615 = vset.pattern.permute.xlu0 0
        %616 = vperm.xlu0 %615, %v482
        %v617 = vpop.permute.xlu0 %616
        %620 = vset.pattern.permute.xlu0 0
        %621 = vperm.xlu0 %620, %v483
        %v622 = vpop.permute.xlu0 %621
        %625 = vset.pattern.permute.xlu0 0
        %626 = vperm.xlu0 %625, %v484
        %v627 = vpop.permute.xlu0 %626
        %630 = vset.pattern.permute.xlu0 0
        %631 = vperm.xlu0 %630, %v485
        %v632 = vpop.permute.xlu0 %631
        %635 = vset.pattern.permute.xlu0 0
        %636 = vperm.xlu0 %635, %v486
        %v637 = vpop.permute.xlu0 %636
        %640 = vset.pattern.permute.xlu0 0
        %641 = vperm.xlu0 %640, %v487
        %v642 = vpop.permute.xlu0 %641
        %645 = vset.pattern.permute.xlu0 0
        %646 = vperm.xlu0 %645, %v488
        %v647 = vpop.permute.xlu0 %646
        %650 = vset.pattern.permute.xlu0 0
        %651 = vperm.xlu0 %650, %v489
        %v652 = vpop.permute.xlu0 %651
        %655 = vset.pattern.permute.xlu0 0
        %656 = vperm.xlu0 %655, %v490
        %v657 = vpop.permute.xlu0 %656
        %660 = vset.pattern.permute.xlu0 0
        %661 = vperm.xlu0 %660, %v491
        %v662 = vpop.permute.xlu0 %661
        %665 = vset.pattern.permute.xlu0 0
        %666 = vperm.xlu0 %665, %v492
        %v667 = vpop.permute.xlu0 %666
        %670 = vset.pattern.permute.xlu0 0
        %671 = vperm.xlu0 %670, %v493
        %v672 = vpop.permute.xlu0 %671
        %675 = vset.pattern.permute.xlu0 0
        %676 = vperm.xlu0 %675, %v494
        %v677 = vpop.permute.xlu0 %676
        %680 = vset.pattern.permute.xlu0 0
        %681 = vperm.xlu0 %680, %v495
        %v682 = vpop.permute.xlu0 %681
        %685 = vset.pattern.permute.xlu0 0
        %686 = vperm.xlu0 %685, %v496
        %v687 = vpop.permute.xlu0 %686
        %690 = vset.pattern.permute.xlu0 0
        %691 = vperm.xlu0 %690, %v497
        %v692 = vpop.permute.xlu0 %691
        %695 = vset.pattern.permute.xlu0 0
        %696 = vperm.xlu0 %695, %v498
        %v697 = vpop.permute.xlu0 %696
        %700 = vset.pattern.permute.xlu0 0
        %701 = vperm.xlu0 %700, %v499
        %v702 = vpop.permute.xlu0 %701
        %705 = vset.pattern.permute.xlu0 0
        %706 = vperm.xlu0 %705, %v500
        %v707 = vpop.permute.xlu0 %706
        %710 = vset.pattern.permute.xlu0 0
        %711 = vperm.xlu0 %710, %v501
        %v712 = vpop.permute.xlu0 %711
        %715 = vset.pattern.permute.xlu0 0
        %716 = vperm.xlu0 %715, %v502
        %v717 = vpop.permute.xlu0 %716
        %720 = vset.pattern.permute.xlu0 0
        %721 = vperm.xlu0 %720, %v503
        %v722 = vpop.permute.xlu0 %721
        %725 = vset.pattern.permute.xlu0 0
        %726 = vperm.xlu0 %725, %v504
        %v727 = vpop.permute.xlu0 %726
        %730 = vset.pattern.permute.xlu0 0
        %731 = vperm.xlu0 %730, %v505
        %v732 = vpop.permute.xlu0 %731
        %735 = vset.pattern.permute.xlu0 0
        %736 = vperm.xlu0 %735, %v506
        %v737 = vpop.permute.xlu0 %736
        %740 = vset.pattern.permute.xlu0 0
        %741 = vperm.xlu0 %740, %v507
        %v742 = vpop.permute.xlu0 %741
        %745 = vset.pattern.permute.xlu0 0
        %746 = vperm.xlu0 %745, %v508
        %v747 = vpop.permute.xlu0 %746
        %750 = vset.pattern.permute.xlu0 0
        %751 = vperm.xlu0 %750, %v509
        %v752 = vpop.permute.xlu0 %751
        %755 = vset.pattern.permute.xlu0 0
        %756 = vperm.xlu0 %755, %v510
        %v757 = vpop.permute.xlu0 %756
        %760 = vset.pattern.permute.xlu0 0
        %761 = vperm.xlu0 %760, %v511
        %v762 = vpop.permute.xlu0 %761
        %765 = vset.pattern.permute.xlu0 0
        %766 = vperm.xlu0 %765, %v512
        %v767 = vpop.permute.xlu0 %766
        %770 = vset.pattern.permute.xlu0 0
        %771 = vperm.xlu0 %770, %v513
        %v772 = vpop.permute.xlu0 %771
        %775 = vset.pattern.permute.xlu0 0
        %776 = vperm.xlu0 %775, %v514
        %v777 = vpop.permute.xlu0 %776
        %780 = vset.pattern.permute.xlu0 0
        %781 = vperm.xlu0 %780, %v515
        %v782 = vpop.permute.xlu0 %781
        %785 = vset.pattern.permute.xlu0 0
        %786 = vperm.xlu0 %785, %v516
        %v787 = vpop.permute.xlu0 %786
        %790 = vset.pattern.permute.xlu0 0
        %791 = vperm.xlu0 %790, %v517
        %v792 = vpop.permute.xlu0 %791
        %795 = vset.pattern.permute.xlu0 0
        %796 = vperm.xlu0 %795, %v518
        %v797 = vpop.permute.xlu0 %796
        %800 = vset.pattern.permute.xlu0 0
        %801 = vperm.xlu0 %800, %v519
        %v802 = vpop.permute.xlu0 %801
        %805 = vset.pattern.permute.xlu0 0
        %806 = vperm.xlu0 %805, %v520
        %v807 = vpop.permute.xlu0 %806
        %810 = vset.pattern.permute.xlu0 0
        %811 = vperm.xlu0 %810, %v521
        %v812 = vpop.permute.xlu0 %811
        %815 = vset.pattern.permute.xlu0 0
        %816 = vperm.xlu0 %815, %v522
        %v817 = vpop.permute.xlu0 %816
        %820 = vset.pattern.permute.xlu0 0
        %821 = vperm.xlu0 %820, %v523
        %v822 = vpop.permute.xlu0 %821
        %825 = vset.pattern.permute.xlu0 0
        %826 = vperm.xlu0 %825, %v524
        %v827 = vpop.permute.xlu0 %826
        %830 = vset.pattern.permute.xlu0 0
        %831 = vperm.xlu0 %830, %v525
        %v832 = vpop.permute.xlu0 %831
        %835 = vset.pattern.permute.xlu0 0
        %836 = vperm.xlu0 %835, %v526
        %v837 = vpop.permute.xlu0 %836
        %840 = vset.pattern.permute.xlu0 0
        %841 = vperm.xlu0 %840, %v527
        %v842 = vpop.permute.xlu0 %841
        %845 = vset.pattern.permute.xlu0 0
        %846 = vperm.xlu0 %845, %v528
        %v847 = vpop.permute.xlu0 %846
        %850 = vset.pattern.permute.xlu0 0
        %851 = vperm.xlu0 %850, %v529
        %v852 = vpop.permute.xlu0 %851
        %855 = vset.pattern.permute.xlu0 0
        %856 = vperm.xlu0 %855, %v530
        %v857 = vpop.permute.xlu0 %856
        %860 = vset.pattern.permute.xlu0 0
        %861 = vperm.xlu0 %860, %v531
        %v862 = vpop.permute.xlu0 %861
        %865 = vset.pattern.permute.xlu0 0
        %866 = vperm.xlu0 %865, %v532
        %v867 = vpop.permute.xlu0 %866
        %870 = vset.pattern.permute.xlu0 0
        %871 = vperm.xlu0 %870, %v533
        %v872 = vpop.permute.xlu0 %871
        %875 = vset.pattern.permute.xlu0 0
        %876 = vperm.xlu0 %875, %v534
        %v877 = vpop.permute.xlu0 %876
        %880 = vset.pattern.permute.xlu0 0
        %881 = vperm.xlu0 %880, %v535
        %v882 = vpop.permute.xlu0 %881
        %885 = vset.pattern.permute.xlu0 0
        %886 = vperm.xlu0 %885, %v536
        %v887 = vpop.permute.xlu0 %886
        %890 = vset.pattern.permute.xlu0 0
        %891 = vperm.xlu0 %890, %v537
        %v892 = vpop.permute.xlu0 %891
        %895 = vset.pattern.permute.xlu0 0
        %896 = vperm.xlu0 %895, %v538
        %v897 = vpop.permute.xlu0 %896
        %900 = vset.pattern.permute.xlu0 0
        %901 = vperm.xlu0 %900, %v539
        %v902 = vpop.permute.xlu0 %901
        %905 = vset.pattern.permute.xlu0 0
        %906 = vperm.xlu0 %905, %v540
        %v907 = vpop.permute.xlu0 %906
        %910 = vset.pattern.permute.xlu0 0
        %911 = vperm.xlu0 %910, %v541
        %v912 = vpop.permute.xlu0 %911
        %915 = vset.pattern.permute.xlu0 0
        %916 = vperm.xlu0 %915, %v542
        %v917 = vpop.permute.xlu0 %916
        %920 = vset.pattern.permute.xlu0 0
        %921 = vperm.xlu0 %920, %v543
        %v922 = vpop.permute.xlu0 %921
        %925 = vset.pattern.permute.xlu0 0
        %926 = vperm.xlu0 %925, %v544
        %v927 = vpop.permute.xlu0 %926
        %930 = vset.pattern.permute.xlu0 0
        %931 = vperm.xlu0 %930, %v545
        %v932 = vpop.permute.xlu0 %931
        %935 = vset.pattern.permute.xlu0 0
        %936 = vperm.xlu0 %935, %v546
        %v937 = vpop.permute.xlu0 %936
        %940 = vset.pattern.permute.xlu0 0
        %941 = vperm.xlu0 %940, %v547
        %v942 = vpop.permute.xlu0 %941
        %945 = vset.pattern.permute.xlu0 0
        %946 = vperm.xlu0 %945, %v548
        %v947 = vpop.permute.xlu0 %946
        %950 = vset.pattern.permute.xlu0 0
        %951 = vperm.xlu0 %950, %v549
        %v952 = vpop.permute.xlu0 %951
        %955 = vset.pattern.permute.xlu0 0
        %956 = vperm.xlu0 %955, %v550
        %v957 = vpop.permute.xlu0 %956
        %960 = vset.pattern.permute.xlu0 0
        %961 = vperm.xlu0 %960, %v551
        %v962 = vpop.permute.xlu0 %961
        %965 = vset.pattern.permute.xlu0 0
        %966 = vperm.xlu0 %965, %v552
        %v967 = vpop.permute.xlu0 %966
        %970 = vset.pattern.permute.xlu0 0
        %971 = vperm.xlu0 %970, %v553
        %v972 = vpop.permute.xlu0 %971
        %975 = vset.pattern.permute.xlu0 0
        %976 = vperm.xlu0 %975, %v554
        %v977 = vpop.permute.xlu0 %976
        %980 = vset.pattern.permute.xlu0 0
        %981 = vperm.xlu0 %980, %v555
        %v982 = vpop.permute.xlu0 %981
        %985 = vset.pattern.permute.xlu0 0
        %986 = vperm.xlu0 %985, %v556
        %v987 = vpop.permute.xlu0 %986
        %990 = vset.pattern.permute.xlu0 0
        %991 = vperm.xlu0 %990, %v557
        %v992 = vpop.permute.xlu0 %991
        %995 = vset.pattern.permute.xlu0 0
        %996 = vperm.xlu0 %995, %v558
        %v997 = vpop.permute.xlu0 %996
        %1000 = vset.pattern.permute.xlu0 0
        %1001 = vperm.xlu0 %1000, %v559
        %v1002 = vpop.permute.xlu0 %1001
        %1005 = vset.pattern.permute.xlu0 0
        %1006 = vperm.xlu0 %1005, %v560
        %v1007 = vpop.permute.xlu0 %1006
        %1010 = vset.pattern.permute.xlu0 0
        %1011 = vperm.xlu0 %1010, %v561
        %v1012 = vpop.permute.xlu0 %1011
        %1015 = vset.pattern.permute.xlu0 0
        %1016 = vperm.xlu0 %1015, %v562
        %v1017 = vpop.permute.xlu0 %1016
        %1020 = vset.pattern.permute.xlu0 0
        %1021 = vperm.xlu0 %1020, %v563
        %v1022 = vpop.permute.xlu0 %1021
        %1025 = vset.pattern.permute.xlu0 0
        %1026 = vperm.xlu0 %1025, %v564
        %v1027 = vpop.permute.xlu0 %1026
        %1030 = vset.pattern.permute.xlu0 0
        %1031 = vperm.xlu0 %1030, %v565
        %v1032 = vpop.permute.xlu0 %1031
        %1035 = vset.pattern.permute.xlu0 0
        %1036 = vperm.xlu0 %1035, %v566
        %v1037 = vpop.permute.xlu0 %1036
        %1040 = vset.pattern.permute.xlu0 0
        %1041 = vperm.xlu0 %1040, %v567
        %v1042 = vpop.permute.xlu0 %1041
        %1045 = vset.pattern.permute.xlu0 0
        %1046 = vperm.xlu0 %1045, %v568
        %v1047 = vpop.permute.xlu0 %1046
        %v1145 = vunpack.c.l.b16 %v377
        %v1146 = vunpack.c.h.b16 %v377
        %v1147 = vunpack.c.l.b16 %v378
        %v1148 = vunpack.c.h.b16 %v378
        %v1149 = vunpack.c.l.b16 %v379
        %v1150 = vunpack.c.h.b16 %v379
        %v1151 = vunpack.c.l.b16 %v380
        %v1152 = vunpack.c.h.b16 %v380
        %v1153 = vunpack.c.l.b16 %v381
        %v1154 = vunpack.c.h.b16 %v381
        %v1155 = vunpack.c.l.b16 %v382
        %v1156 = vunpack.c.h.b16 %v382
        %v1157 = vunpack.c.l.b16 %v383
        %v1158 = vunpack.c.h.b16 %v383
        %v1159 = vunpack.c.l.b16 %v384
        %v1160 = vunpack.c.h.b16 %v384
        %v1161 = vunpack.c.l.b16 %v385
        %v1162 = vunpack.c.h.b16 %v385
        %v1163 = vunpack.c.l.b16 %v386
        %v1164 = vunpack.c.h.b16 %v386
        %v1165 = vunpack.c.l.b16 %v387
        %v1166 = vunpack.c.h.b16 %v387
        %v1167 = vunpack.c.l.b16 %v388
        %v1168 = vunpack.c.h.b16 %v388
        %v1169 = vunpack.c.l.b16 %v389
        %v1170 = vunpack.c.h.b16 %v389
        %v1171 = vunpack.c.l.b16 %v390
        %v1172 = vunpack.c.h.b16 %v390
        %v1173 = vunpack.c.l.b16 %v391
        %v1174 = vunpack.c.h.b16 %v391
        %v1175 = vunpack.c.l.b16 %v392
        %v1176 = vunpack.c.h.b16 %v392
        %v1177 = vunpack.c.l.b16 %v393
        %v1178 = vunpack.c.h.b16 %v393
        %v1179 = vunpack.c.l.b16 %v394
        %v1180 = vunpack.c.h.b16 %v394
        %v1181 = vunpack.c.l.b16 %v395
        %v1182 = vunpack.c.h.b16 %v395
        %v1183 = vunpack.c.l.b16 %v396
        %v1184 = vunpack.c.h.b16 %v396
        %v1185 = vunpack.c.l.b16 %v397
        %v1186 = vunpack.c.h.b16 %v397
        %v1187 = vunpack.c.l.b16 %v398
        %v1188 = vunpack.c.h.b16 %v398
        %v1189 = vunpack.c.l.b16 %v399
        %v1190 = vunpack.c.h.b16 %v399
        %v1191 = vunpack.c.l.b16 %v400
        %v1192 = vunpack.c.h.b16 %v400
        %v1193 = vunpack.c.l.b16 %v401
        %v1194 = vunpack.c.h.b16 %v401
        %v1195 = vunpack.c.l.b16 %v402
        %v1196 = vunpack.c.h.b16 %v402
        %v1197 = vunpack.c.l.b16 %v403
        %v1198 = vunpack.c.h.b16 %v403
        %v1199 = vunpack.c.l.b16 %v404
        %v1200 = vunpack.c.h.b16 %v404
        %v1201 = vunpack.c.l.b16 %v405
        %v1202 = vunpack.c.h.b16 %v405
        %v1203 = vunpack.c.l.b16 %v406
        %v1204 = vunpack.c.h.b16 %v406
        %v1205 = vunpack.c.l.b16 %v407
        %v1206 = vunpack.c.h.b16 %v407
        %v1207 = vunpack.c.l.b16 %v408
        %v1208 = vunpack.c.h.b16 %v408
        %v1209 = vunpack.c.l.b16 %v409
        %v1210 = vunpack.c.h.b16 %v409
        %v1211 = vunpack.c.l.b16 %v410
        %v1212 = vunpack.c.h.b16 %v410
        %v1213 = vunpack.c.l.b16 %v411
        %v1214 = vunpack.c.h.b16 %v411
        %v1215 = vunpack.c.l.b16 %v412
        %v1216 = vunpack.c.h.b16 %v412
        %v1217 = vunpack.c.l.b16 %v413
        %v1218 = vunpack.c.h.b16 %v413
        %v1219 = vunpack.c.l.b16 %v414
        %v1220 = vunpack.c.h.b16 %v414
        %v1221 = vunpack.c.l.b16 %v415
        %v1222 = vunpack.c.h.b16 %v415
        %v1223 = vunpack.c.l.b16 %v416
        %v1224 = vunpack.c.h.b16 %v416
        %v1225 = vunpack.c.l.b16 %v417
        %v1226 = vunpack.c.h.b16 %v417
        %v1227 = vunpack.c.l.b16 %v418
        %v1228 = vunpack.c.h.b16 %v418
        %v1229 = vunpack.c.l.b16 %v419
        %v1230 = vunpack.c.h.b16 %v419
        %v1231 = vunpack.c.l.b16 %v420
        %v1232 = vunpack.c.h.b16 %v420
        %v1233 = vunpack.c.l.b16 %v421
        %v1234 = vunpack.c.h.b16 %v421
        %v1235 = vunpack.c.l.b16 %v422
        %v1236 = vunpack.c.h.b16 %v422
        %v1237 = vunpack.c.l.b16 %v423
        %v1238 = vunpack.c.h.b16 %v423
        %v1239 = vunpack.c.l.b16 %v424
        %v1240 = vunpack.c.h.b16 %v424
        %v1241 = vunpack.c.l.b16 %v425
        %v1242 = vunpack.c.h.b16 %v425
        %v1243 = vunpack.c.l.b16 %v426
        %v1244 = vunpack.c.h.b16 %v426
        %v1245 = vunpack.c.l.b16 %v427
        %v1246 = vunpack.c.h.b16 %v427
        %v1247 = vunpack.c.l.b16 %v428
        %v1248 = vunpack.c.h.b16 %v428
        %v1249 = vunpack.c.l.b16 %v429
        %v1250 = vunpack.c.h.b16 %v429
        %v1251 = vunpack.c.l.b16 %v430
        %v1252 = vunpack.c.h.b16 %v430
        %v1253 = vunpack.c.l.b16 %v431
        %v1254 = vunpack.c.h.b16 %v431
        %v1255 = vunpack.c.l.b16 %v432
        %v1256 = vunpack.c.h.b16 %v432
        %v1257 = vunpack.c.l.b16 %v433
        %v1258 = vunpack.c.h.b16 %v433
        %v1259 = vunpack.c.l.b16 %v434
        %v1260 = vunpack.c.h.b16 %v434
        %v1261 = vunpack.c.l.b16 %v435
        %v1262 = vunpack.c.h.b16 %v435
        %v1263 = vunpack.c.l.b16 %v436
        %v1264 = vunpack.c.h.b16 %v436
        %v1265 = vunpack.c.l.b16 %v437
        %v1266 = vunpack.c.h.b16 %v437
        %v1267 = vunpack.c.l.b16 %v438
        %v1268 = vunpack.c.h.b16 %v438
        %v1269 = vunpack.c.l.b16 %v439
        %v1270 = vunpack.c.h.b16 %v439
        %v1271 = vunpack.c.l.b16 %v440
        %v1272 = vunpack.c.h.b16 %v440
        %v1273 = vunpack.c.l.b16 %v441
        %v1274 = vunpack.c.h.b16 %v441
        %v1275 = vunpack.c.l.b16 %v442
        %v1276 = vunpack.c.h.b16 %v442
        %v1277 = vunpack.c.l.b16 %v443
        %v1278 = vunpack.c.h.b16 %v443
        %v1279 = vunpack.c.l.b16 %v444
        %v1280 = vunpack.c.h.b16 %v444
        %v1281 = vunpack.c.l.b16 %v445
        %v1282 = vunpack.c.h.b16 %v445
        %v1283 = vunpack.c.l.b16 %v446
        %v1284 = vunpack.c.h.b16 %v446
        %v1285 = vunpack.c.l.b16 %v447
        %v1286 = vunpack.c.h.b16 %v447
        %v1287 = vunpack.c.l.b16 %v448
        %v1288 = vunpack.c.h.b16 %v448
        %v1289 = vunpack.c.l.b16 %v449
        %v1290 = vunpack.c.h.b16 %v449
        %v1291 = vunpack.c.l.b16 %v450
        %v1292 = vunpack.c.h.b16 %v450
        %v1293 = vunpack.c.l.b16 %v451
        %v1294 = vunpack.c.h.b16 %v451
        %v1295 = vunpack.c.l.b16 %v452
        %v1296 = vunpack.c.h.b16 %v452
        %v1297 = vunpack.c.l.b16 %v453
        %v1298 = vunpack.c.h.b16 %v453
        %v1299 = vunpack.c.l.b16 %v454
        %v1300 = vunpack.c.h.b16 %v454
        %v1301 = vunpack.c.l.b16 %v455
        %v1302 = vunpack.c.h.b16 %v455
        %v1303 = vunpack.c.l.b16 %v456
        %v1304 = vunpack.c.h.b16 %v456
        %v1305 = vunpack.c.l.b16 %v457
        %v1306 = vunpack.c.h.b16 %v457
        %v1307 = vunpack.c.l.b16 %v458
        %v1308 = vunpack.c.h.b16 %v458
        %v1309 = vunpack.c.l.b16 %v459
        %v1310 = vunpack.c.h.b16 %v459
        %v1311 = vunpack.c.l.b16 %v460
        %v1312 = vunpack.c.h.b16 %v460
        %v1313 = vunpack.c.l.b16 %v461
        %v1314 = vunpack.c.h.b16 %v461
        %v1315 = vunpack.c.l.b16 %v462
        %v1316 = vunpack.c.h.b16 %v462
        %v1317 = vunpack.c.l.b16 %v463
        %v1318 = vunpack.c.h.b16 %v463
        %v1319 = vunpack.c.l.b16 %v464
        %v1320 = vunpack.c.h.b16 %v464
        %v1321 = vunpack.c.l.b16 %v465
        %v1322 = vunpack.c.h.b16 %v465
        %v1323 = vunpack.c.l.b16 %v466
        %v1324 = vunpack.c.h.b16 %v466
        %v1325 = vunpack.c.l.b16 %v467
        %v1326 = vunpack.c.h.b16 %v467
        %v1327 = vunpack.c.l.b16 %v468
        %v1328 = vunpack.c.h.b16 %v468
        %v1329 = vunpack.c.l.b16 %v469
        %v1330 = vunpack.c.h.b16 %v469
        %v1331 = vunpack.c.l.b16 %v470
        %v1332 = vunpack.c.h.b16 %v470
        %v1333 = vunpack.c.l.b16 %v471
        %v1334 = vunpack.c.h.b16 %v471
        %v1335 = vunpack.c.l.b16 %v472
        %v1336 = vunpack.c.h.b16 %v472
        %v1337 = vpack.c.b16 %v1147, %v1145
        %v1338 = vpack.c.b16 %v1148, %v1146
        %v1339 = vpack.c.b16 %v1151, %v1149
        %v1340 = vpack.c.b16 %v1152, %v1150
        %v1341 = vpack.c.b16 %v1155, %v1153
        %v1342 = vpack.c.b16 %v1156, %v1154
        %v1343 = vpack.c.b16 %v1159, %v1157
        %v1344 = vpack.c.b16 %v1160, %v1158
        %v1345 = vpack.c.b16 %v1163, %v1161
        %v1346 = vpack.c.b16 %v1164, %v1162
        %v1347 = vpack.c.b16 %v1167, %v1165
        %v1348 = vpack.c.b16 %v1168, %v1166
        %v1349 = vpack.c.b16 %v1171, %v1169
        %v1350 = vpack.c.b16 %v1172, %v1170
        %v1351 = vpack.c.b16 %v1175, %v1173
        %v1352 = vpack.c.b16 %v1176, %v1174
        %v1353 = vpack.c.b16 %v1179, %v1177
        %v1354 = vpack.c.b16 %v1180, %v1178
        %v1355 = vpack.c.b16 %v1183, %v1181
        %v1356 = vpack.c.b16 %v1184, %v1182
        %v1357 = vpack.c.b16 %v1187, %v1185
        %v1358 = vpack.c.b16 %v1188, %v1186
        %v1359 = vpack.c.b16 %v1191, %v1189
        %v1360 = vpack.c.b16 %v1192, %v1190
        %v1361 = vpack.c.b16 %v1195, %v1193
        %v1362 = vpack.c.b16 %v1196, %v1194
        %v1363 = vpack.c.b16 %v1199, %v1197
        %v1364 = vpack.c.b16 %v1200, %v1198
        %v1365 = vpack.c.b16 %v1203, %v1201
        %v1366 = vpack.c.b16 %v1204, %v1202
        %v1367 = vpack.c.b16 %v1207, %v1205
        %v1368 = vpack.c.b16 %v1208, %v1206
        %v1369 = vpack.c.b16 %v1211, %v1209
        %v1370 = vpack.c.b16 %v1212, %v1210
        %v1371 = vpack.c.b16 %v1215, %v1213
        %v1372 = vpack.c.b16 %v1216, %v1214
        %v1373 = vpack.c.b16 %v1219, %v1217
        %v1374 = vpack.c.b16 %v1220, %v1218
        %v1375 = vpack.c.b16 %v1223, %v1221
        %v1376 = vpack.c.b16 %v1224, %v1222
        %v1377 = vpack.c.b16 %v1227, %v1225
        %v1378 = vpack.c.b16 %v1228, %v1226
        %v1379 = vpack.c.b16 %v1231, %v1229
        %v1380 = vpack.c.b16 %v1232, %v1230
        %v1381 = vpack.c.b16 %v1235, %v1233
        %v1382 = vpack.c.b16 %v1236, %v1234
        %v1383 = vpack.c.b16 %v1239, %v1237
        %v1384 = vpack.c.b16 %v1240, %v1238
        %v1385 = vpack.c.b16 %v1243, %v1241
        %v1386 = vpack.c.b16 %v1244, %v1242
        %v1387 = vpack.c.b16 %v1247, %v1245
        %v1388 = vpack.c.b16 %v1248, %v1246
        %v1389 = vpack.c.b16 %v1251, %v1249
        %v1390 = vpack.c.b16 %v1252, %v1250
        %v1391 = vpack.c.b16 %v1255, %v1253
        %v1392 = vpack.c.b16 %v1256, %v1254
        %v1393 = vpack.c.b16 %v1259, %v1257
        %v1394 = vpack.c.b16 %v1260, %v1258
        %v1395 = vpack.c.b16 %v1263, %v1261
        %v1396 = vpack.c.b16 %v1264, %v1262
        %v1397 = vpack.c.b16 %v1267, %v1265
        %v1398 = vpack.c.b16 %v1268, %v1266
        %v1399 = vpack.c.b16 %v1271, %v1269
        %v1400 = vpack.c.b16 %v1272, %v1270
        %v1401 = vpack.c.b16 %v1275, %v1273
        %v1402 = vpack.c.b16 %v1276, %v1274
        %v1403 = vpack.c.b16 %v1279, %v1277
        %v1404 = vpack.c.b16 %v1280, %v1278
        %v1405 = vpack.c.b16 %v1283, %v1281
        %v1406 = vpack.c.b16 %v1284, %v1282
        %v1407 = vpack.c.b16 %v1287, %v1285
        %v1408 = vpack.c.b16 %v1288, %v1286
        %v1409 = vpack.c.b16 %v1291, %v1289
        %v1410 = vpack.c.b16 %v1292, %v1290
        %v1411 = vpack.c.b16 %v1295, %v1293
        %v1412 = vpack.c.b16 %v1296, %v1294
        %v1413 = vpack.c.b16 %v1299, %v1297
        %v1414 = vpack.c.b16 %v1300, %v1298
        %v1415 = vpack.c.b16 %v1303, %v1301
        %v1416 = vpack.c.b16 %v1304, %v1302
        %v1417 = vpack.c.b16 %v1307, %v1305
        %v1418 = vpack.c.b16 %v1308, %v1306
        %v1419 = vpack.c.b16 %v1311, %v1309
        %v1420 = vpack.c.b16 %v1312, %v1310
        %v1421 = vpack.c.b16 %v1315, %v1313
        %v1422 = vpack.c.b16 %v1316, %v1314
        %v1423 = vpack.c.b16 %v1319, %v1317
        %v1424 = vpack.c.b16 %v1320, %v1318
        %v1425 = vpack.c.b16 %v1323, %v1321
        %v1426 = vpack.c.b16 %v1324, %v1322
        %v1427 = vpack.c.b16 %v1327, %v1325
        %v1428 = vpack.c.b16 %v1328, %v1326
        %v1429 = vpack.c.b16 %v1331, %v1329
        %v1430 = vpack.c.b16 %v1332, %v1330
        %v1431 = vpack.c.b16 %v1335, %v1333
        %v1432 = vpack.c.b16 %v1336, %v1334
        %1529 = vmatpush.bf16.msra.mxu0 %v368
        %1530 = vmatpush.bf16.msra.mxu0 %v367
        %1531 = vmatpush.bf16.msra.mxu0 %v366
        %1532 = vmatpush.bf16.msra.mxu0 %v365
        %1533 = vmatpush.bf16.msra.mxu0 %v364
        %1534 = vmatpush.bf16.msra.mxu0 %v363
        %1535 = vmatpush.bf16.msra.mxu0 %v362
        %1536 = vmatpush.bf16.msra.mxu0 %v361
        %1537 = vmatmul.bf16.gmra.mxu0 %v1337
        %v1538 = vpop.f32.mrf.mxu0
        %v1539 = vadd.f32 %v572, %v1538
        %v1540 = vpop.f32.mrf.mxu0
        %v1541 = vadd.f32 %v577, %v1540
        %1542 = vmatmul.bf16.gmra.mxu0 %v1339
        %v1543 = vpop.f32.mrf.mxu0
        %v1544 = vadd.f32 %v582, %v1543
        %v1545 = vpop.f32.mrf.mxu0
        %v1546 = vadd.f32 %v587, %v1545
        %1547 = vmatmul.bf16.gmra.mxu0 %v1341
        %v1548 = vpop.f32.mrf.mxu0
        %v1549 = vadd.f32 %v592, %v1548
        %v1550 = vpop.f32.mrf.mxu0
        %v1551 = vadd.f32 %v597, %v1550
        %1552 = vmatmul.bf16.gmra.mxu0 %v1343
        %v1553 = vpop.f32.mrf.mxu0
        %v1554 = vadd.f32 %v602, %v1553
        %v1555 = vpop.f32.mrf.mxu0
        %v1556 = vadd.f32 %v607, %v1555
        %1557 = vmatmul.bf16.gmra.mxu0 %v1345
        %v1558 = vpop.f32.mrf.mxu0
        %v1559 = vadd.f32 %v612, %v1558
        %v1560 = vpop.f32.mrf.mxu0
        %v1561 = vadd.f32 %v617, %v1560
        %1562 = vmatmul.bf16.gmra.mxu0 %v1347
        %v1563 = vpop.f32.mrf.mxu0
        %v1564 = vadd.f32 %v622, %v1563
        %v1565 = vpop.f32.mrf.mxu0
        %v1566 = vadd.f32 %v627, %v1565
        %1567 = vmatmul.bf16.gmra.mxu0 %v1349
        %v1568 = vpop.f32.mrf.mxu0
        %v1569 = vadd.f32 %v632, %v1568
        %v1570 = vpop.f32.mrf.mxu0
        %v1571 = vadd.f32 %v637, %v1570
        %1572 = vmatmul.bf16.gmra.mxu0 %v1351
        %v1573 = vpop.f32.mrf.mxu0
        %v1574 = vadd.f32 %v642, %v1573
        %v1575 = vpop.f32.mrf.mxu0
        %v1576 = vadd.f32 %v647, %v1575
        %1577 = vmatmul.bf16.gmra.mxu0 %v1353
        %v1578 = vpop.f32.mrf.mxu0
        %v1579 = vadd.f32 %v652, %v1578
        %v1580 = vpop.f32.mrf.mxu0
        %v1581 = vadd.f32 %v657, %v1580
        %1582 = vmatmul.bf16.gmra.mxu0 %v1355
        %v1583 = vpop.f32.mrf.mxu0
        %v1584 = vadd.f32 %v662, %v1583
        %v1585 = vpop.f32.mrf.mxu0
        %v1586 = vadd.f32 %v667, %v1585
        %1587 = vmatmul.bf16.gmra.mxu0 %v1357
        %v1588 = vpop.f32.mrf.mxu0
        %v1589 = vadd.f32 %v672, %v1588
        %v1590 = vpop.f32.mrf.mxu0
        %v1591 = vadd.f32 %v677, %v1590
        %1592 = vmatmul.bf16.gmra.mxu0 %v1359
        %v1593 = vpop.f32.mrf.mxu0
        %v1594 = vadd.f32 %v682, %v1593
        %v1595 = vpop.f32.mrf.mxu0
        %v1596 = vadd.f32 %v687, %v1595
        %1597 = vmatmul.bf16.gmra.mxu0 %v1361
        %v1598 = vpop.f32.mrf.mxu0
        %v1599 = vadd.f32 %v692, %v1598
        %v1600 = vpop.f32.mrf.mxu0
        %v1601 = vadd.f32 %v697, %v1600
        %1602 = vmatmul.bf16.gmra.mxu0 %v1363
        %v1603 = vpop.f32.mrf.mxu0
        %v1604 = vadd.f32 %v702, %v1603
        %v1605 = vpop.f32.mrf.mxu0
        %v1606 = vadd.f32 %v707, %v1605
        %1607 = vmatmul.bf16.gmra.mxu0 %v1365
        %v1608 = vpop.f32.mrf.mxu0
        %v1609 = vadd.f32 %v712, %v1608
        %v1610 = vpop.f32.mrf.mxu0
        %v1611 = vadd.f32 %v717, %v1610
        %1612 = vmatmul.bf16.gmra.mxu0 %v1367
        %v1613 = vpop.f32.mrf.mxu0
        %v1614 = vadd.f32 %v722, %v1613
        %v1615 = vpop.f32.mrf.mxu0
        %v1616 = vadd.f32 %v727, %v1615
        %1617 = vmatmul.bf16.gmra.mxu0 %v1369
        %v1618 = vpop.f32.mrf.mxu0
        %v1619 = vadd.f32 %v732, %v1618
        %v1620 = vpop.f32.mrf.mxu0
        %v1621 = vadd.f32 %v737, %v1620
        %1622 = vmatmul.bf16.gmra.mxu0 %v1371
        %v1623 = vpop.f32.mrf.mxu0
        %v1624 = vadd.f32 %v742, %v1623
        %v1625 = vpop.f32.mrf.mxu0
        %v1626 = vadd.f32 %v747, %v1625
        %1627 = vmatmul.bf16.gmra.mxu0 %v1373
        %v1628 = vpop.f32.mrf.mxu0
        %v1629 = vadd.f32 %v752, %v1628
        %v1630 = vpop.f32.mrf.mxu0
        %v1631 = vadd.f32 %v757, %v1630
        %1632 = vmatmul.bf16.gmra.mxu0 %v1375
        %v1633 = vpop.f32.mrf.mxu0
        %v1634 = vadd.f32 %v762, %v1633
        %v1635 = vpop.f32.mrf.mxu0
        %v1636 = vadd.f32 %v767, %v1635
        %1637 = vmatmul.bf16.gmra.mxu0 %v1377
        %v1638 = vpop.f32.mrf.mxu0
        %v1639 = vadd.f32 %v772, %v1638
        %v1640 = vpop.f32.mrf.mxu0
        %v1641 = vadd.f32 %v777, %v1640
        %1642 = vmatmul.bf16.gmra.mxu0 %v1379
        %v1643 = vpop.f32.mrf.mxu0
        %v1644 = vadd.f32 %v782, %v1643
        %v1645 = vpop.f32.mrf.mxu0
        %v1646 = vadd.f32 %v787, %v1645
        %1647 = vmatmul.bf16.gmra.mxu0 %v1381
        %v1648 = vpop.f32.mrf.mxu0
        %v1649 = vadd.f32 %v792, %v1648
        %v1650 = vpop.f32.mrf.mxu0
        %v1651 = vadd.f32 %v797, %v1650
        %1652 = vmatmul.bf16.gmra.mxu0 %v1383
        %v1653 = vpop.f32.mrf.mxu0
        %v1654 = vadd.f32 %v802, %v1653
        %v1655 = vpop.f32.mrf.mxu0
        %v1656 = vadd.f32 %v807, %v1655
        %1657 = vmatmul.bf16.gmra.mxu0 %v1385
        %v1658 = vpop.f32.mrf.mxu0
        %v1659 = vadd.f32 %v812, %v1658
        %v1660 = vpop.f32.mrf.mxu0
        %v1661 = vadd.f32 %v817, %v1660
        %1662 = vmatmul.bf16.gmra.mxu0 %v1387
        %v1663 = vpop.f32.mrf.mxu0
        %v1664 = vadd.f32 %v822, %v1663
        %v1665 = vpop.f32.mrf.mxu0
        %v1666 = vadd.f32 %v827, %v1665
        %1667 = vmatmul.bf16.gmra.mxu0 %v1389
        %v1668 = vpop.f32.mrf.mxu0
        %v1669 = vadd.f32 %v832, %v1668
        %v1670 = vpop.f32.mrf.mxu0
        %v1671 = vadd.f32 %v837, %v1670
        %1672 = vmatmul.bf16.gmra.mxu0 %v1391
        %v1673 = vpop.f32.mrf.mxu0
        %v1674 = vadd.f32 %v842, %v1673
        %v1675 = vpop.f32.mrf.mxu0
        %v1676 = vadd.f32 %v847, %v1675
        %1677 = vmatmul.bf16.gmra.mxu0 %v1393
        %v1678 = vpop.f32.mrf.mxu0
        %v1679 = vadd.f32 %v852, %v1678
        %v1680 = vpop.f32.mrf.mxu0
        %v1681 = vadd.f32 %v857, %v1680
        %1682 = vmatmul.bf16.gmra.mxu0 %v1395
        %v1683 = vpop.f32.mrf.mxu0
        %v1684 = vadd.f32 %v862, %v1683
        %v1685 = vpop.f32.mrf.mxu0
        %v1686 = vadd.f32 %v867, %v1685
        %1687 = vmatmul.bf16.gmra.mxu0 %v1397
        %v1688 = vpop.f32.mrf.mxu0
        %v1689 = vadd.f32 %v872, %v1688
        %v1690 = vpop.f32.mrf.mxu0
        %v1691 = vadd.f32 %v877, %v1690
        %1692 = vmatmul.bf16.gmra.mxu0 %v1399
        %v1693 = vpop.f32.mrf.mxu0
        %v1694 = vadd.f32 %v882, %v1693
        %v1695 = vpop.f32.mrf.mxu0
        %v1696 = vadd.f32 %v887, %v1695
        %1697 = vmatmul.bf16.gmra.mxu0 %v1401
        %v1698 = vpop.f32.mrf.mxu0
        %v1699 = vadd.f32 %v892, %v1698
        %v1700 = vpop.f32.mrf.mxu0
        %v1701 = vadd.f32 %v897, %v1700
        %1702 = vmatmul.bf16.gmra.mxu0 %v1403
        %v1703 = vpop.f32.mrf.mxu0
        %v1704 = vadd.f32 %v902, %v1703
        %v1705 = vpop.f32.mrf.mxu0
        %v1706 = vadd.f32 %v907, %v1705
        %1707 = vmatmul.bf16.gmra.mxu0 %v1405
        %v1708 = vpop.f32.mrf.mxu0
        %v1709 = vadd.f32 %v912, %v1708
        %v1710 = vpop.f32.mrf.mxu0
        %v1711 = vadd.f32 %v917, %v1710
        %1712 = vmatmul.bf16.gmra.mxu0 %v1407
        %v1713 = vpop.f32.mrf.mxu0
        %v1714 = vadd.f32 %v922, %v1713
        %v1715 = vpop.f32.mrf.mxu0
        %v1716 = vadd.f32 %v927, %v1715
        %1717 = vmatmul.bf16.gmra.mxu0 %v1409
        %v1718 = vpop.f32.mrf.mxu0
        %v1719 = vadd.f32 %v932, %v1718
        %v1720 = vpop.f32.mrf.mxu0
        %v1721 = vadd.f32 %v937, %v1720
        %1722 = vmatmul.bf16.gmra.mxu0 %v1411
        %v1723 = vpop.f32.mrf.mxu0
        %v1724 = vadd.f32 %v942, %v1723
        %v1725 = vpop.f32.mrf.mxu0
        %v1726 = vadd.f32 %v947, %v1725
        %1727 = vmatmul.bf16.gmra.mxu0 %v1413
        %v1728 = vpop.f32.mrf.mxu0
        %v1729 = vadd.f32 %v952, %v1728
        %v1730 = vpop.f32.mrf.mxu0
        %v1731 = vadd.f32 %v957, %v1730
        %1732 = vmatmul.bf16.gmra.mxu0 %v1415
        %v1733 = vpop.f32.mrf.mxu0
        %v1734 = vadd.f32 %v962, %v1733
        %v1735 = vpop.f32.mrf.mxu0
        %v1736 = vadd.f32 %v967, %v1735
        %1737 = vmatmul.bf16.gmra.mxu0 %v1417
        %v1738 = vpop.f32.mrf.mxu0
        %v1739 = vadd.f32 %v972, %v1738
        %v1740 = vpop.f32.mrf.mxu0
        %v1741 = vadd.f32 %v977, %v1740
        %1742 = vmatmul.bf16.gmra.mxu0 %v1419
        %v1743 = vpop.f32.mrf.mxu0
        %v1744 = vadd.f32 %v982, %v1743
        %v1745 = vpop.f32.mrf.mxu0
        %v1746 = vadd.f32 %v987, %v1745
        %1747 = vmatmul.bf16.gmra.mxu0 %v1421
        %v1748 = vpop.f32.mrf.mxu0
        %v1749 = vadd.f32 %v992, %v1748
        %v1750 = vpop.f32.mrf.mxu0
        %v1751 = vadd.f32 %v997, %v1750
        %1752 = vmatmul.bf16.gmra.mxu0 %v1423
        %v1753 = vpop.f32.mrf.mxu0
        %v1754 = vadd.f32 %v1002, %v1753
        %v1755 = vpop.f32.mrf.mxu0
        %v1756 = vadd.f32 %v1007, %v1755
        %1757 = vmatmul.bf16.gmra.mxu0 %v1425
        %v1758 = vpop.f32.mrf.mxu0
        %v1759 = vadd.f32 %v1012, %v1758
        %v1760 = vpop.f32.mrf.mxu0
        %v1761 = vadd.f32 %v1017, %v1760
        %1762 = vmatmul.bf16.gmra.mxu0 %v1427
        %v1763 = vpop.f32.mrf.mxu0
        %v1764 = vadd.f32 %v1022, %v1763
        %v1765 = vpop.f32.mrf.mxu0
        %v1766 = vadd.f32 %v1027, %v1765
        %1767 = vmatmul.bf16.gmra.mxu0 %v1429
        %v1768 = vpop.f32.mrf.mxu0
        %v1769 = vadd.f32 %v1032, %v1768
        %v1770 = vpop.f32.mrf.mxu0
        %v1771 = vadd.f32 %v1037, %v1770
        %1772 = vmatmul.bf16.gmra.mxu0 %v1431
        %v1773 = vpop.f32.mrf.mxu0
        %v1774 = vadd.f32 %v1042, %v1773
        %v1775 = vpop.f32.mrf.mxu0
        %v1776 = vadd.f32 %v1047, %v1775
        %1777 = vdwg.mxu0
        %1778 = vmatpush.bf16.msra.mxu0 %v376
        %1779 = vmatpush.bf16.msra.mxu0 %v375
        %1780 = vmatpush.bf16.msra.mxu0 %v374
        %1781 = vmatpush.bf16.msra.mxu0 %v373
        %1782 = vmatpush.bf16.msra.mxu0 %v372
        %1783 = vmatpush.bf16.msra.mxu0 %v371
        %1784 = vmatpush.bf16.msra.mxu0 %v370
        %1785 = vmatpush.bf16.msra.mxu0 %v369
        %1786 = vmatmul.bf16.gmra.mxu0 %v1338
        %v1787 = vpop.f32.mrf.mxu0
        %v1788 = vadd.f32 %v1539, %v1787
        %v1789 = vpop.f32.mrf.mxu0
        %v1790 = vadd.f32 %v1541, %v1789
        %1791 = vmatmul.bf16.gmra.mxu0 %v1340
        %v1792 = vpop.f32.mrf.mxu0
        %v1793 = vadd.f32 %v1544, %v1792
        %v1794 = vpop.f32.mrf.mxu0
        %v1795 = vadd.f32 %v1546, %v1794
        %1796 = vmatmul.bf16.gmra.mxu0 %v1342
        %v1797 = vpop.f32.mrf.mxu0
        %v1798 = vadd.f32 %v1549, %v1797
        %v1799 = vpop.f32.mrf.mxu0
        %v1800 = vadd.f32 %v1551, %v1799
        %1801 = vmatmul.bf16.gmra.mxu0 %v1344
        %v1802 = vpop.f32.mrf.mxu0
        %v1803 = vadd.f32 %v1554, %v1802
        %v1804 = vpop.f32.mrf.mxu0
        %v1805 = vadd.f32 %v1556, %v1804
        %1806 = vmatmul.bf16.gmra.mxu0 %v1346
        %v1807 = vpop.f32.mrf.mxu0
        %v1808 = vadd.f32 %v1559, %v1807
        %v1809 = vpop.f32.mrf.mxu0
        %v1810 = vadd.f32 %v1561, %v1809
        %1811 = vmatmul.bf16.gmra.mxu0 %v1348
        %v1812 = vpop.f32.mrf.mxu0
        %v1813 = vadd.f32 %v1564, %v1812
        %v1814 = vpop.f32.mrf.mxu0
        %v1815 = vadd.f32 %v1566, %v1814
        %1816 = vmatmul.bf16.gmra.mxu0 %v1350
        %v1817 = vpop.f32.mrf.mxu0
        %v1818 = vadd.f32 %v1569, %v1817
        %v1819 = vpop.f32.mrf.mxu0
        %v1820 = vadd.f32 %v1571, %v1819
        %1821 = vmatmul.bf16.gmra.mxu0 %v1352
        %v1822 = vpop.f32.mrf.mxu0
        %v1823 = vadd.f32 %v1574, %v1822
        %v1824 = vpop.f32.mrf.mxu0
        %v1825 = vadd.f32 %v1576, %v1824
        %1826 = vmatmul.bf16.gmra.mxu0 %v1354
        %v1827 = vpop.f32.mrf.mxu0
        %v1828 = vadd.f32 %v1579, %v1827
        %v1829 = vpop.f32.mrf.mxu0
        %v1830 = vadd.f32 %v1581, %v1829
        %1831 = vmatmul.bf16.gmra.mxu0 %v1356
        %v1832 = vpop.f32.mrf.mxu0
        %v1833 = vadd.f32 %v1584, %v1832
        %v1834 = vpop.f32.mrf.mxu0
        %v1835 = vadd.f32 %v1586, %v1834
        %1836 = vmatmul.bf16.gmra.mxu0 %v1358
        %v1837 = vpop.f32.mrf.mxu0
        %v1838 = vadd.f32 %v1589, %v1837
        %v1839 = vpop.f32.mrf.mxu0
        %v1840 = vadd.f32 %v1591, %v1839
        %1841 = vmatmul.bf16.gmra.mxu0 %v1360
        %v1842 = vpop.f32.mrf.mxu0
        %v1843 = vadd.f32 %v1594, %v1842
        %v1844 = vpop.f32.mrf.mxu0
        %v1845 = vadd.f32 %v1596, %v1844
        %1846 = vmatmul.bf16.gmra.mxu0 %v1362
        %v1847 = vpop.f32.mrf.mxu0
        %v1848 = vadd.f32 %v1599, %v1847
        %v1849 = vpop.f32.mrf.mxu0
        %v1850 = vadd.f32 %v1601, %v1849
        %1851 = vmatmul.bf16.gmra.mxu0 %v1364
        %v1852 = vpop.f32.mrf.mxu0
        %v1853 = vadd.f32 %v1604, %v1852
        %v1854 = vpop.f32.mrf.mxu0
        %v1855 = vadd.f32 %v1606, %v1854
        %1856 = vmatmul.bf16.gmra.mxu0 %v1366
        %v1857 = vpop.f32.mrf.mxu0
        %v1858 = vadd.f32 %v1609, %v1857
        %v1859 = vpop.f32.mrf.mxu0
        %v1860 = vadd.f32 %v1611, %v1859
        %1861 = vmatmul.bf16.gmra.mxu0 %v1368
        %v1862 = vpop.f32.mrf.mxu0
        %v1863 = vadd.f32 %v1614, %v1862
        %v1864 = vpop.f32.mrf.mxu0
        %v1865 = vadd.f32 %v1616, %v1864
        %1866 = vmatmul.bf16.gmra.mxu0 %v1370
        %v1867 = vpop.f32.mrf.mxu0
        %v1868 = vadd.f32 %v1619, %v1867
        %v1869 = vpop.f32.mrf.mxu0
        %v1870 = vadd.f32 %v1621, %v1869
        %1871 = vmatmul.bf16.gmra.mxu0 %v1372
        %v1872 = vpop.f32.mrf.mxu0
        %v1873 = vadd.f32 %v1624, %v1872
        %v1874 = vpop.f32.mrf.mxu0
        %v1875 = vadd.f32 %v1626, %v1874
        %1876 = vmatmul.bf16.gmra.mxu0 %v1374
        %v1877 = vpop.f32.mrf.mxu0
        %v1878 = vadd.f32 %v1629, %v1877
        %v1879 = vpop.f32.mrf.mxu0
        %v1880 = vadd.f32 %v1631, %v1879
        %1881 = vmatmul.bf16.gmra.mxu0 %v1376
        %v1882 = vpop.f32.mrf.mxu0
        %v1883 = vadd.f32 %v1634, %v1882
        %v1884 = vpop.f32.mrf.mxu0
        %v1885 = vadd.f32 %v1636, %v1884
        %1886 = vmatmul.bf16.gmra.mxu0 %v1378
        %v1887 = vpop.f32.mrf.mxu0
        %v1888 = vadd.f32 %v1639, %v1887
        %v1889 = vpop.f32.mrf.mxu0
        %v1890 = vadd.f32 %v1641, %v1889
        %1891 = vmatmul.bf16.gmra.mxu0 %v1380
        %v1892 = vpop.f32.mrf.mxu0
        %v1893 = vadd.f32 %v1644, %v1892
        %v1894 = vpop.f32.mrf.mxu0
        %v1895 = vadd.f32 %v1646, %v1894
        %1896 = vmatmul.bf16.gmra.mxu0 %v1382
        %v1897 = vpop.f32.mrf.mxu0
        %v1898 = vadd.f32 %v1649, %v1897
        %v1899 = vpop.f32.mrf.mxu0
        %v1900 = vadd.f32 %v1651, %v1899
        %1901 = vmatmul.bf16.gmra.mxu0 %v1384
        %v1902 = vpop.f32.mrf.mxu0
        %v1903 = vadd.f32 %v1654, %v1902
        %v1904 = vpop.f32.mrf.mxu0
        %v1905 = vadd.f32 %v1656, %v1904
        %1906 = vmatmul.bf16.gmra.mxu0 %v1386
        %v1907 = vpop.f32.mrf.mxu0
        %v1908 = vadd.f32 %v1659, %v1907
        %v1909 = vpop.f32.mrf.mxu0
        %v1910 = vadd.f32 %v1661, %v1909
        %1911 = vmatmul.bf16.gmra.mxu0 %v1388
        %v1912 = vpop.f32.mrf.mxu0
        %v1913 = vadd.f32 %v1664, %v1912
        %v1914 = vpop.f32.mrf.mxu0
        %v1915 = vadd.f32 %v1666, %v1914
        %1916 = vmatmul.bf16.gmra.mxu0 %v1390
        %v1917 = vpop.f32.mrf.mxu0
        %v1918 = vadd.f32 %v1669, %v1917
        %v1919 = vpop.f32.mrf.mxu0
        %v1920 = vadd.f32 %v1671, %v1919
        %1921 = vmatmul.bf16.gmra.mxu0 %v1392
        %v1922 = vpop.f32.mrf.mxu0
        %v1923 = vadd.f32 %v1674, %v1922
        %v1924 = vpop.f32.mrf.mxu0
        %v1925 = vadd.f32 %v1676, %v1924
        %1926 = vmatmul.bf16.gmra.mxu0 %v1394
        %v1927 = vpop.f32.mrf.mxu0
        %v1928 = vadd.f32 %v1679, %v1927
        %v1929 = vpop.f32.mrf.mxu0
        %v1930 = vadd.f32 %v1681, %v1929
        %1931 = vmatmul.bf16.gmra.mxu0 %v1396
        %v1932 = vpop.f32.mrf.mxu0
        %v1933 = vadd.f32 %v1684, %v1932
        %v1934 = vpop.f32.mrf.mxu0
        %v1935 = vadd.f32 %v1686, %v1934
        %1936 = vmatmul.bf16.gmra.mxu0 %v1398
        %v1937 = vpop.f32.mrf.mxu0
        %v1938 = vadd.f32 %v1689, %v1937
        %v1939 = vpop.f32.mrf.mxu0
        %v1940 = vadd.f32 %v1691, %v1939
        %1941 = vmatmul.bf16.gmra.mxu0 %v1400
        %v1942 = vpop.f32.mrf.mxu0
        %v1943 = vadd.f32 %v1694, %v1942
        %v1944 = vpop.f32.mrf.mxu0
        %v1945 = vadd.f32 %v1696, %v1944
        %1946 = vmatmul.bf16.gmra.mxu0 %v1402
        %v1947 = vpop.f32.mrf.mxu0
        %v1948 = vadd.f32 %v1699, %v1947
        %v1949 = vpop.f32.mrf.mxu0
        %v1950 = vadd.f32 %v1701, %v1949
        %1951 = vmatmul.bf16.gmra.mxu0 %v1404
        %v1952 = vpop.f32.mrf.mxu0
        %v1953 = vadd.f32 %v1704, %v1952
        %v1954 = vpop.f32.mrf.mxu0
        %v1955 = vadd.f32 %v1706, %v1954
        %1956 = vmatmul.bf16.gmra.mxu0 %v1406
        %v1957 = vpop.f32.mrf.mxu0
        %v1958 = vadd.f32 %v1709, %v1957
        %v1959 = vpop.f32.mrf.mxu0
        %v1960 = vadd.f32 %v1711, %v1959
        %1961 = vmatmul.bf16.gmra.mxu0 %v1408
        %v1962 = vpop.f32.mrf.mxu0
        %v1963 = vadd.f32 %v1714, %v1962
        %v1964 = vpop.f32.mrf.mxu0
        %v1965 = vadd.f32 %v1716, %v1964
        %1966 = vmatmul.bf16.gmra.mxu0 %v1410
        %v1967 = vpop.f32.mrf.mxu0
        %v1968 = vadd.f32 %v1719, %v1967
        %v1969 = vpop.f32.mrf.mxu0
        %v1970 = vadd.f32 %v1721, %v1969
        %1971 = vmatmul.bf16.gmra.mxu0 %v1412
        %v1972 = vpop.f32.mrf.mxu0
        %v1973 = vadd.f32 %v1724, %v1972
        %v1974 = vpop.f32.mrf.mxu0
        %v1975 = vadd.f32 %v1726, %v1974
        %1976 = vmatmul.bf16.gmra.mxu0 %v1414
        %v1977 = vpop.f32.mrf.mxu0
        %v1978 = vadd.f32 %v1729, %v1977
        %v1979 = vpop.f32.mrf.mxu0
        %v1980 = vadd.f32 %v1731, %v1979
        %1981 = vmatmul.bf16.gmra.mxu0 %v1416
        %v1982 = vpop.f32.mrf.mxu0
        %v1983 = vadd.f32 %v1734, %v1982
        %v1984 = vpop.f32.mrf.mxu0
        %v1985 = vadd.f32 %v1736, %v1984
        %1986 = vmatmul.bf16.gmra.mxu0 %v1418
        %v1987 = vpop.f32.mrf.mxu0
        %v1988 = vadd.f32 %v1739, %v1987
        %v1989 = vpop.f32.mrf.mxu0
        %v1990 = vadd.f32 %v1741, %v1989
        %1991 = vmatmul.bf16.gmra.mxu0 %v1420
        %v1992 = vpop.f32.mrf.mxu0
        %v1993 = vadd.f32 %v1744, %v1992
        %v1994 = vpop.f32.mrf.mxu0
        %v1995 = vadd.f32 %v1746, %v1994
        %1996 = vmatmul.bf16.gmra.mxu0 %v1422
        %v1997 = vpop.f32.mrf.mxu0
        %v1998 = vadd.f32 %v1749, %v1997
        %v1999 = vpop.f32.mrf.mxu0
        %v2000 = vadd.f32 %v1751, %v1999
        %2001 = vmatmul.bf16.gmra.mxu0 %v1424
        %v2002 = vpop.f32.mrf.mxu0
        %v2003 = vadd.f32 %v1754, %v2002
        %v2004 = vpop.f32.mrf.mxu0
        %v2005 = vadd.f32 %v1756, %v2004
        %2006 = vmatmul.bf16.gmra.mxu0 %v1426
        %v2007 = vpop.f32.mrf.mxu0
        %v2008 = vadd.f32 %v1759, %v2007
        %v2009 = vpop.f32.mrf.mxu0
        %v2010 = vadd.f32 %v1761, %v2009
        %2011 = vmatmul.bf16.gmra.mxu0 %v1428
        %v2012 = vpop.f32.mrf.mxu0
        %v2013 = vadd.f32 %v1764, %v2012
        %v2014 = vpop.f32.mrf.mxu0
        %v2015 = vadd.f32 %v1766, %v2014
        %2016 = vmatmul.bf16.gmra.mxu0 %v1430
        %v2017 = vpop.f32.mrf.mxu0
        %v2018 = vadd.f32 %v1769, %v2017
        %v2019 = vpop.f32.mrf.mxu0
        %v2020 = vadd.f32 %v1771, %v2019
        %2021 = vmatmul.bf16.gmra.mxu0 %v1432
        %v2022 = vpop.f32.mrf.mxu0
        %v2023 = vadd.f32 %v1774, %v2022
        %v2024 = vpop.f32.mrf.mxu0
        %v2025 = vadd.f32 %v1776, %v2024
        %2026 = vdwg.mxu0
        %v2027 = vmul.f32 %v1788, 0.17677669
        %v2028 = vmul.f32 %v1790, 0.17677669
        %v2029 = vmul.f32 %v1793, 0.17677669
        %v2030 = vmul.f32 %v1795, 0.17677669
        %v2031 = vmul.f32 %v1798, 0.17677669
        %v2032 = vmul.f32 %v1800, 0.17677669
        %v2033 = vmul.f32 %v1803, 0.17677669
        %v2034 = vmul.f32 %v1805, 0.17677669
        %v2035 = vmul.f32 %v1808, 0.17677669
        %v2036 = vmul.f32 %v1810, 0.17677669
        %v2037 = vmul.f32 %v1813, 0.17677669
        %v2038 = vmul.f32 %v1815, 0.17677669
        %v2039 = vmul.f32 %v1818, 0.17677669
        %v2040 = vmul.f32 %v1820, 0.17677669
        %v2041 = vmul.f32 %v1823, 0.17677669
        %v2042 = vmul.f32 %v1825, 0.17677669
        %v2043 = vmul.f32 %v1828, 0.17677669
        %v2044 = vmul.f32 %v1830, 0.17677669
        %v2045 = vmul.f32 %v1833, 0.17677669
        %v2046 = vmul.f32 %v1835, 0.17677669
        %v2047 = vmul.f32 %v1838, 0.17677669
        %v2048 = vmul.f32 %v1840, 0.17677669
        %v2049 = vmul.f32 %v1843, 0.17677669
        %v2050 = vmul.f32 %v1845, 0.17677669
        %v2051 = vmul.f32 %v1848, 0.17677669
        %v2052 = vmul.f32 %v1850, 0.17677669
        %v2053 = vmul.f32 %v1853, 0.17677669
        %v2054 = vmul.f32 %v1855, 0.17677669
        %v2055 = vmul.f32 %v1858, 0.17677669
        %v2056 = vmul.f32 %v1860, 0.17677669
        %v2057 = vmul.f32 %v1863, 0.17677669
        %v2058 = vmul.f32 %v1865, 0.17677669
        %v2059 = vmul.f32 %v2027, %v1868
        %v2060 = vmul.f32 %v2028, %v1870
        %v2061 = vmul.f32 %v2029, %v1873
        %v2062 = vmul.f32 %v2030, %v1875
        %v2063 = vadd.f32 %v2059, %v2060
        %v2064 = vadd.f32 %v2063, %v2061
        %v2065 = vadd.f32 %v2064, %v2062
        %v2066 = vrot.slane %v2065, 4
        %v2067 = vadd.f32 %v2065, %v2066
        %v2068 = vrot.slane %v2067, 2
        %v2069 = vadd.f32 %v2067, %v2068
        %v2070 = vrot.slane %v2069, 1
        %v2071 = vadd.f32 %v2069, %v2070
        %v2072 = vmul.f32 %v2027, %v1878
        %v2073 = vmul.f32 %v2028, %v1880
        %v2074 = vmul.f32 %v2029, %v1883
        %v2075 = vmul.f32 %v2030, %v1885
        %v2076 = vadd.f32 %v2072, %v2073
        %v2077 = vadd.f32 %v2076, %v2074
        %v2078 = vadd.f32 %v2077, %v2075
        %v2079 = vrot.slane %v2078, 4
        %v2080 = vadd.f32 %v2078, %v2079
        %v2081 = vrot.slane %v2080, 2
        %v2082 = vadd.f32 %v2080, %v2081
        %v2083 = vrot.slane %v2082, 1
        %v2084 = vadd.f32 %v2082, %v2083
        %v2085 = vmul.f32 %v2027, %v1888
        %v2086 = vmul.f32 %v2028, %v1890
        %v2087 = vmul.f32 %v2029, %v1893
        %v2088 = vmul.f32 %v2030, %v1895
        %v2089 = vadd.f32 %v2085, %v2086
        %v2090 = vadd.f32 %v2089, %v2087
        %v2091 = vadd.f32 %v2090, %v2088
        %v2092 = vrot.slane %v2091, 4
        %v2093 = vadd.f32 %v2091, %v2092
        %v2094 = vrot.slane %v2093, 2
        %v2095 = vadd.f32 %v2093, %v2094
        %v2096 = vrot.slane %v2095, 1
        %v2097 = vadd.f32 %v2095, %v2096
        %v2098 = vmul.f32 %v2027, %v1898
        %v2099 = vmul.f32 %v2028, %v1900
        %v2100 = vmul.f32 %v2029, %v1903
        %v2101 = vmul.f32 %v2030, %v1905
        %v2102 = vadd.f32 %v2098, %v2099
        %v2103 = vadd.f32 %v2102, %v2100
        %v2104 = vadd.f32 %v2103, %v2101
        %v2105 = vrot.slane %v2104, 4
        %v2106 = vadd.f32 %v2104, %v2105
        %v2107 = vrot.slane %v2106, 2
        %v2108 = vadd.f32 %v2106, %v2107
        %v2109 = vrot.slane %v2108, 1
        %v2110 = vadd.f32 %v2108, %v2109
        %v2111 = vmul.f32 %v2027, %v1908
        %v2112 = vmul.f32 %v2028, %v1910
        %v2113 = vmul.f32 %v2029, %v1913
        %v2114 = vmul.f32 %v2030, %v1915
        %v2115 = vadd.f32 %v2111, %v2112
        %v2116 = vadd.f32 %v2115, %v2113
        %v2117 = vadd.f32 %v2116, %v2114
        %v2118 = vrot.slane %v2117, 4
        %v2119 = vadd.f32 %v2117, %v2118
        %v2120 = vrot.slane %v2119, 2
        %v2121 = vadd.f32 %v2119, %v2120
        %v2122 = vrot.slane %v2121, 1
        %v2123 = vadd.f32 %v2121, %v2122
        %v2124 = vmul.f32 %v2027, %v1918
        %v2125 = vmul.f32 %v2028, %v1920
        %v2126 = vmul.f32 %v2029, %v1923
        %v2127 = vmul.f32 %v2030, %v1925
        %v2128 = vadd.f32 %v2124, %v2125
        %v2129 = vadd.f32 %v2128, %v2126
        %v2130 = vadd.f32 %v2129, %v2127
        %v2131 = vrot.slane %v2130, 4
        %v2132 = vadd.f32 %v2130, %v2131
        %v2133 = vrot.slane %v2132, 2
        %v2134 = vadd.f32 %v2132, %v2133
        %v2135 = vrot.slane %v2134, 1
        %v2136 = vadd.f32 %v2134, %v2135
        %v2137 = vmul.f32 %v2027, %v1928
        %v2138 = vmul.f32 %v2028, %v1930
        %v2139 = vmul.f32 %v2029, %v1933
        %v2140 = vmul.f32 %v2030, %v1935
        %v2141 = vadd.f32 %v2137, %v2138
        %v2142 = vadd.f32 %v2141, %v2139
        %v2143 = vadd.f32 %v2142, %v2140
        %v2144 = vrot.slane %v2143, 4
        %v2145 = vadd.f32 %v2143, %v2144
        %v2146 = vrot.slane %v2145, 2
        %v2147 = vadd.f32 %v2145, %v2146
        %v2148 = vrot.slane %v2147, 1
        %v2149 = vadd.f32 %v2147, %v2148
        %v2150 = vmul.f32 %v2027, %v1938
        %v2151 = vmul.f32 %v2028, %v1940
        %v2152 = vmul.f32 %v2029, %v1943
        %v2153 = vmul.f32 %v2030, %v1945
        %v2154 = vadd.f32 %v2150, %v2151
        %v2155 = vadd.f32 %v2154, %v2152
        %v2156 = vadd.f32 %v2155, %v2153
        %v2157 = vrot.slane %v2156, 4
        %v2158 = vadd.f32 %v2156, %v2157
        %v2159 = vrot.slane %v2158, 2
        %v2160 = vadd.f32 %v2158, %v2159
        %v2161 = vrot.slane %v2160, 1
        %v2162 = vadd.f32 %v2160, %v2161
        %v2163 = vmax.f32 %v2071, %v2084
        %v2164 = vmax.f32 %v2163, %v2097
        %v2165 = vmax.f32 %v2164, %v2110
        %v2166 = vmax.f32 %v2165, %v2123
        %v2167 = vmax.f32 %v2166, %v2136
        %v2168 = vmax.f32 %v2167, %v2149
        %v2169 = vmax.f32 %v2168, %v2162
        %v2170 = vsub.f32 %v2071, %v2169
        %v2171 = vmul.f32 %v2170, 1.442695
        %v2172 = vpow.pop %v2171
        %v2173 = vsub.f32 %v2084, %v2169
        %v2174 = vmul.f32 %v2173, 1.442695
        %v2175 = vpow.pop %v2174
        %v2176 = vsub.f32 %v2097, %v2169
        %v2177 = vmul.f32 %v2176, 1.442695
        %v2178 = vpow.pop %v2177
        %v2179 = vsub.f32 %v2110, %v2169
        %v2180 = vmul.f32 %v2179, 1.442695
        %v2181 = vpow.pop %v2180
        %v2182 = vsub.f32 %v2123, %v2169
        %v2183 = vmul.f32 %v2182, 1.442695
        %v2184 = vpow.pop %v2183
        %v2185 = vsub.f32 %v2136, %v2169
        %v2186 = vmul.f32 %v2185, 1.442695
        %v2187 = vpow.pop %v2186
        %v2188 = vsub.f32 %v2149, %v2169
        %v2189 = vmul.f32 %v2188, 1.442695
        %v2190 = vpow.pop %v2189
        %v2191 = vsub.f32 %v2162, %v2169
        %v2192 = vmul.f32 %v2191, 1.442695
        %v2193 = vpow.pop %v2192
        %v2194 = vadd.f32 %v2172, %v2175
        %v2195 = vadd.f32 %v2194, %v2178
        %v2196 = vadd.f32 %v2195, %v2181
        %v2197 = vadd.f32 %v2196, %v2184
        %v2198 = vadd.f32 %v2197, %v2187
        %v2199 = vadd.f32 %v2198, %v2190
        %v2200 = vadd.f32 %v2199, %v2193
        %v2201 = vrcp.pop %v2200
        %v2202 = vmul.f32 %v2172, %v2201
        %v2203 = vmul.f32 %v2202, %v1948
        %v2204 = vmul.f32 %v2202, %v1950
        %v2205 = vmul.f32 %v2202, %v1953
        %v2206 = vmul.f32 %v2202, %v1955
        %v2207 = vmul.f32 %v2175, %v2201
        %v2208 = vmul.f32 %v2207, %v1958
        %v2209 = vmul.f32 %v2207, %v1960
        %v2210 = vmul.f32 %v2207, %v1963
        %v2211 = vmul.f32 %v2207, %v1965
        %v2212 = vadd.f32 %v2203, %v2208
        %v2213 = vadd.f32 %v2204, %v2209
        %v2214 = vadd.f32 %v2205, %v2210
        %v2215 = vadd.f32 %v2206, %v2211
        %v2216 = vmul.f32 %v2178, %v2201
        %v2217 = vmul.f32 %v2216, %v1968
        %v2218 = vmul.f32 %v2216, %v1970
        %v2219 = vmul.f32 %v2216, %v1973
        %v2220 = vmul.f32 %v2216, %v1975
        %v2221 = vadd.f32 %v2212, %v2217
        %v2222 = vadd.f32 %v2213, %v2218
        %v2223 = vadd.f32 %v2214, %v2219
        %v2224 = vadd.f32 %v2215, %v2220
        %v2225 = vmul.f32 %v2181, %v2201
        %v2226 = vmul.f32 %v2225, %v1978
        %v2227 = vmul.f32 %v2225, %v1980
        %v2228 = vmul.f32 %v2225, %v1983
        %v2229 = vmul.f32 %v2225, %v1985
        %v2230 = vadd.f32 %v2221, %v2226
        %v2231 = vadd.f32 %v2222, %v2227
        %v2232 = vadd.f32 %v2223, %v2228
        %v2233 = vadd.f32 %v2224, %v2229
        %v2234 = vmul.f32 %v2184, %v2201
        %v2235 = vmul.f32 %v2234, %v1988
        %v2236 = vmul.f32 %v2234, %v1990
        %v2237 = vmul.f32 %v2234, %v1993
        %v2238 = vmul.f32 %v2234, %v1995
        %v2239 = vadd.f32 %v2230, %v2235
        %v2240 = vadd.f32 %v2231, %v2236
        %v2241 = vadd.f32 %v2232, %v2237
        %v2242 = vadd.f32 %v2233, %v2238
        %v2243 = vmul.f32 %v2187, %v2201
        %v2244 = vmul.f32 %v2243, %v1998
        %v2245 = vmul.f32 %v2243, %v2000
        %v2246 = vmul.f32 %v2243, %v2003
        %v2247 = vmul.f32 %v2243, %v2005
        %v2248 = vadd.f32 %v2239, %v2244
        %v2249 = vadd.f32 %v2240, %v2245
        %v2250 = vadd.f32 %v2241, %v2246
        %v2251 = vadd.f32 %v2242, %v2247
        %v2252 = vmul.f32 %v2190, %v2201
        %v2253 = vmul.f32 %v2252, %v2008
        %v2254 = vmul.f32 %v2252, %v2010
        %v2255 = vmul.f32 %v2252, %v2013
        %v2256 = vmul.f32 %v2252, %v2015
        %v2257 = vadd.f32 %v2248, %v2253
        %v2258 = vadd.f32 %v2249, %v2254
        %v2259 = vadd.f32 %v2250, %v2255
        %v2260 = vadd.f32 %v2251, %v2256
        %v2261 = vmul.f32 %v2193, %v2201
        %v2262 = vmul.f32 %v2261, %v2018
        %v2263 = vmul.f32 %v2261, %v2020
        %v2264 = vmul.f32 %v2261, %v2023
        %v2265 = vmul.f32 %v2261, %v2025
        %v2266 = vadd.f32 %v2257, %v2262
        %v2267 = vadd.f32 %v2258, %v2263
        %v2268 = vadd.f32 %v2259, %v2264
        %v2269 = vadd.f32 %v2260, %v2265
        %v2270 = vmul.f32 %v2031, %v1868
        %v2271 = vmul.f32 %v2032, %v1870
        %v2272 = vmul.f32 %v2033, %v1873
        %v2273 = vmul.f32 %v2034, %v1875
        %v2274 = vadd.f32 %v2270, %v2271
        %v2275 = vadd.f32 %v2274, %v2272
        %v2276 = vadd.f32 %v2275, %v2273
        %v2277 = vrot.slane %v2276, 4
        %v2278 = vadd.f32 %v2276, %v2277
        %v2279 = vrot.slane %v2278, 2
        %v2280 = vadd.f32 %v2278, %v2279
        %v2281 = vrot.slane %v2280, 1
        %v2282 = vadd.f32 %v2280, %v2281
        %v2283 = vmul.f32 %v2031, %v1878
        %v2284 = vmul.f32 %v2032, %v1880
        %v2285 = vmul.f32 %v2033, %v1883
        %v2286 = vmul.f32 %v2034, %v1885
        %v2287 = vadd.f32 %v2283, %v2284
        %v2288 = vadd.f32 %v2287, %v2285
        %v2289 = vadd.f32 %v2288, %v2286
        %v2290 = vrot.slane %v2289, 4
        %v2291 = vadd.f32 %v2289, %v2290
        %v2292 = vrot.slane %v2291, 2
        %v2293 = vadd.f32 %v2291, %v2292
        %v2294 = vrot.slane %v2293, 1
        %v2295 = vadd.f32 %v2293, %v2294
        %v2296 = vmul.f32 %v2031, %v1888
        %v2297 = vmul.f32 %v2032, %v1890
        %v2298 = vmul.f32 %v2033, %v1893
        %v2299 = vmul.f32 %v2034, %v1895
        %v2300 = vadd.f32 %v2296, %v2297
        %v2301 = vadd.f32 %v2300, %v2298
        %v2302 = vadd.f32 %v2301, %v2299
        %v2303 = vrot.slane %v2302, 4
        %v2304 = vadd.f32 %v2302, %v2303
        %v2305 = vrot.slane %v2304, 2
        %v2306 = vadd.f32 %v2304, %v2305
        %v2307 = vrot.slane %v2306, 1
        %v2308 = vadd.f32 %v2306, %v2307
        %v2309 = vmul.f32 %v2031, %v1898
        %v2310 = vmul.f32 %v2032, %v1900
        %v2311 = vmul.f32 %v2033, %v1903
        %v2312 = vmul.f32 %v2034, %v1905
        %v2313 = vadd.f32 %v2309, %v2310
        %v2314 = vadd.f32 %v2313, %v2311
        %v2315 = vadd.f32 %v2314, %v2312
        %v2316 = vrot.slane %v2315, 4
        %v2317 = vadd.f32 %v2315, %v2316
        %v2318 = vrot.slane %v2317, 2
        %v2319 = vadd.f32 %v2317, %v2318
        %v2320 = vrot.slane %v2319, 1
        %v2321 = vadd.f32 %v2319, %v2320
        %v2322 = vmul.f32 %v2031, %v1908
        %v2323 = vmul.f32 %v2032, %v1910
        %v2324 = vmul.f32 %v2033, %v1913
        %v2325 = vmul.f32 %v2034, %v1915
        %v2326 = vadd.f32 %v2322, %v2323
        %v2327 = vadd.f32 %v2326, %v2324
        %v2328 = vadd.f32 %v2327, %v2325
        %v2329 = vrot.slane %v2328, 4
        %v2330 = vadd.f32 %v2328, %v2329
        %v2331 = vrot.slane %v2330, 2
        %v2332 = vadd.f32 %v2330, %v2331
        %v2333 = vrot.slane %v2332, 1
        %v2334 = vadd.f32 %v2332, %v2333
        %v2335 = vmul.f32 %v2031, %v1918
        %v2336 = vmul.f32 %v2032, %v1920
        %v2337 = vmul.f32 %v2033, %v1923
        %v2338 = vmul.f32 %v2034, %v1925
        %v2339 = vadd.f32 %v2335, %v2336
        %v2340 = vadd.f32 %v2339, %v2337
        %v2341 = vadd.f32 %v2340, %v2338
        %v2342 = vrot.slane %v2341, 4
        %v2343 = vadd.f32 %v2341, %v2342
        %v2344 = vrot.slane %v2343, 2
        %v2345 = vadd.f32 %v2343, %v2344
        %v2346 = vrot.slane %v2345, 1
        %v2347 = vadd.f32 %v2345, %v2346
        %v2348 = vmul.f32 %v2031, %v1928
        %v2349 = vmul.f32 %v2032, %v1930
        %v2350 = vmul.f32 %v2033, %v1933
        %v2351 = vmul.f32 %v2034, %v1935
        %v2352 = vadd.f32 %v2348, %v2349
        %v2353 = vadd.f32 %v2352, %v2350
        %v2354 = vadd.f32 %v2353, %v2351
        %v2355 = vrot.slane %v2354, 4
        %v2356 = vadd.f32 %v2354, %v2355
        %v2357 = vrot.slane %v2356, 2
        %v2358 = vadd.f32 %v2356, %v2357
        %v2359 = vrot.slane %v2358, 1
        %v2360 = vadd.f32 %v2358, %v2359
        %v2361 = vmul.f32 %v2031, %v1938
        %v2362 = vmul.f32 %v2032, %v1940
        %v2363 = vmul.f32 %v2033, %v1943
        %v2364 = vmul.f32 %v2034, %v1945
        %v2365 = vadd.f32 %v2361, %v2362
        %v2366 = vadd.f32 %v2365, %v2363
        %v2367 = vadd.f32 %v2366, %v2364
        %v2368 = vrot.slane %v2367, 4
        %v2369 = vadd.f32 %v2367, %v2368
        %v2370 = vrot.slane %v2369, 2
        %v2371 = vadd.f32 %v2369, %v2370
        %v2372 = vrot.slane %v2371, 1
        %v2373 = vadd.f32 %v2371, %v2372
        %v2374 = vmax.f32 %v2282, %v2295
        %v2375 = vmax.f32 %v2374, %v2308
        %v2376 = vmax.f32 %v2375, %v2321
        %v2377 = vmax.f32 %v2376, %v2334
        %v2378 = vmax.f32 %v2377, %v2347
        %v2379 = vmax.f32 %v2378, %v2360
        %v2380 = vmax.f32 %v2379, %v2373
        %v2381 = vsub.f32 %v2282, %v2380
        %v2382 = vmul.f32 %v2381, 1.442695
        %v2383 = vpow.pop %v2382
        %v2384 = vsub.f32 %v2295, %v2380
        %v2385 = vmul.f32 %v2384, 1.442695
        %v2386 = vpow.pop %v2385
        %v2387 = vsub.f32 %v2308, %v2380
        %v2388 = vmul.f32 %v2387, 1.442695
        %v2389 = vpow.pop %v2388
        %v2390 = vsub.f32 %v2321, %v2380
        %v2391 = vmul.f32 %v2390, 1.442695
        %v2392 = vpow.pop %v2391
        %v2393 = vsub.f32 %v2334, %v2380
        %v2394 = vmul.f32 %v2393, 1.442695
        %v2395 = vpow.pop %v2394
        %v2396 = vsub.f32 %v2347, %v2380
        %v2397 = vmul.f32 %v2396, 1.442695
        %v2398 = vpow.pop %v2397
        %v2399 = vsub.f32 %v2360, %v2380
        %v2400 = vmul.f32 %v2399, 1.442695
        %v2401 = vpow.pop %v2400
        %v2402 = vsub.f32 %v2373, %v2380
        %v2403 = vmul.f32 %v2402, 1.442695
        %v2404 = vpow.pop %v2403
        %v2405 = vadd.f32 %v2383, %v2386
        %v2406 = vadd.f32 %v2405, %v2389
        %v2407 = vadd.f32 %v2406, %v2392
        %v2408 = vadd.f32 %v2407, %v2395
        %v2409 = vadd.f32 %v2408, %v2398
        %v2410 = vadd.f32 %v2409, %v2401
        %v2411 = vadd.f32 %v2410, %v2404
        %v2412 = vrcp.pop %v2411
        %v2413 = vmul.f32 %v2383, %v2412
        %v2414 = vmul.f32 %v2413, %v1948
        %v2415 = vmul.f32 %v2413, %v1950
        %v2416 = vmul.f32 %v2413, %v1953
        %v2417 = vmul.f32 %v2413, %v1955
        %v2418 = vmul.f32 %v2386, %v2412
        %v2419 = vmul.f32 %v2418, %v1958
        %v2420 = vmul.f32 %v2418, %v1960
        %v2421 = vmul.f32 %v2418, %v1963
        %v2422 = vmul.f32 %v2418, %v1965
        %v2423 = vadd.f32 %v2414, %v2419
        %v2424 = vadd.f32 %v2415, %v2420
        %v2425 = vadd.f32 %v2416, %v2421
        %v2426 = vadd.f32 %v2417, %v2422
        %v2427 = vmul.f32 %v2389, %v2412
        %v2428 = vmul.f32 %v2427, %v1968
        %v2429 = vmul.f32 %v2427, %v1970
        %v2430 = vmul.f32 %v2427, %v1973
        %v2431 = vmul.f32 %v2427, %v1975
        %v2432 = vadd.f32 %v2423, %v2428
        %v2433 = vadd.f32 %v2424, %v2429
        %v2434 = vadd.f32 %v2425, %v2430
        %v2435 = vadd.f32 %v2426, %v2431
        %v2436 = vmul.f32 %v2392, %v2412
        %v2437 = vmul.f32 %v2436, %v1978
        %v2438 = vmul.f32 %v2436, %v1980
        %v2439 = vmul.f32 %v2436, %v1983
        %v2440 = vmul.f32 %v2436, %v1985
        %v2441 = vadd.f32 %v2432, %v2437
        %v2442 = vadd.f32 %v2433, %v2438
        %v2443 = vadd.f32 %v2434, %v2439
        %v2444 = vadd.f32 %v2435, %v2440
        %v2445 = vmul.f32 %v2395, %v2412
        %v2446 = vmul.f32 %v2445, %v1988
        %v2447 = vmul.f32 %v2445, %v1990
        %v2448 = vmul.f32 %v2445, %v1993
        %v2449 = vmul.f32 %v2445, %v1995
        %v2450 = vadd.f32 %v2441, %v2446
        %v2451 = vadd.f32 %v2442, %v2447
        %v2452 = vadd.f32 %v2443, %v2448
        %v2453 = vadd.f32 %v2444, %v2449
        %v2454 = vmul.f32 %v2398, %v2412
        %v2455 = vmul.f32 %v2454, %v1998
        %v2456 = vmul.f32 %v2454, %v2000
        %v2457 = vmul.f32 %v2454, %v2003
        %v2458 = vmul.f32 %v2454, %v2005
        %v2459 = vadd.f32 %v2450, %v2455
        %v2460 = vadd.f32 %v2451, %v2456
        %v2461 = vadd.f32 %v2452, %v2457
        %v2462 = vadd.f32 %v2453, %v2458
        %v2463 = vmul.f32 %v2401, %v2412
        %v2464 = vmul.f32 %v2463, %v2008
        %v2465 = vmul.f32 %v2463, %v2010
        %v2466 = vmul.f32 %v2463, %v2013
        %v2467 = vmul.f32 %v2463, %v2015
        %v2468 = vadd.f32 %v2459, %v2464
        %v2469 = vadd.f32 %v2460, %v2465
        %v2470 = vadd.f32 %v2461, %v2466
        %v2471 = vadd.f32 %v2462, %v2467
        %v2472 = vmul.f32 %v2404, %v2412
        %v2473 = vmul.f32 %v2472, %v2018
        %v2474 = vmul.f32 %v2472, %v2020
        %v2475 = vmul.f32 %v2472, %v2023
        %v2476 = vmul.f32 %v2472, %v2025
        %v2477 = vadd.f32 %v2468, %v2473
        %v2478 = vadd.f32 %v2469, %v2474
        %v2479 = vadd.f32 %v2470, %v2475
        %v2480 = vadd.f32 %v2471, %v2476
        %v2481 = vmul.f32 %v2035, %v1868
        %v2482 = vmul.f32 %v2036, %v1870
        %v2483 = vmul.f32 %v2037, %v1873
        %v2484 = vmul.f32 %v2038, %v1875
        %v2485 = vadd.f32 %v2481, %v2482
        %v2486 = vadd.f32 %v2485, %v2483
        %v2487 = vadd.f32 %v2486, %v2484
        %v2488 = vrot.slane %v2487, 4
        %v2489 = vadd.f32 %v2487, %v2488
        %v2490 = vrot.slane %v2489, 2
        %v2491 = vadd.f32 %v2489, %v2490
        %v2492 = vrot.slane %v2491, 1
        %v2493 = vadd.f32 %v2491, %v2492
        %v2494 = vmul.f32 %v2035, %v1878
        %v2495 = vmul.f32 %v2036, %v1880
        %v2496 = vmul.f32 %v2037, %v1883
        %v2497 = vmul.f32 %v2038, %v1885
        %v2498 = vadd.f32 %v2494, %v2495
        %v2499 = vadd.f32 %v2498, %v2496
        %v2500 = vadd.f32 %v2499, %v2497
        %v2501 = vrot.slane %v2500, 4
        %v2502 = vadd.f32 %v2500, %v2501
        %v2503 = vrot.slane %v2502, 2
        %v2504 = vadd.f32 %v2502, %v2503
        %v2505 = vrot.slane %v2504, 1
        %v2506 = vadd.f32 %v2504, %v2505
        %v2507 = vmul.f32 %v2035, %v1888
        %v2508 = vmul.f32 %v2036, %v1890
        %v2509 = vmul.f32 %v2037, %v1893
        %v2510 = vmul.f32 %v2038, %v1895
        %v2511 = vadd.f32 %v2507, %v2508
        %v2512 = vadd.f32 %v2511, %v2509
        %v2513 = vadd.f32 %v2512, %v2510
        %v2514 = vrot.slane %v2513, 4
        %v2515 = vadd.f32 %v2513, %v2514
        %v2516 = vrot.slane %v2515, 2
        %v2517 = vadd.f32 %v2515, %v2516
        %v2518 = vrot.slane %v2517, 1
        %v2519 = vadd.f32 %v2517, %v2518
        %v2520 = vmul.f32 %v2035, %v1898
        %v2521 = vmul.f32 %v2036, %v1900
        %v2522 = vmul.f32 %v2037, %v1903
        %v2523 = vmul.f32 %v2038, %v1905
        %v2524 = vadd.f32 %v2520, %v2521
        %v2525 = vadd.f32 %v2524, %v2522
        %v2526 = vadd.f32 %v2525, %v2523
        %v2527 = vrot.slane %v2526, 4
        %v2528 = vadd.f32 %v2526, %v2527
        %v2529 = vrot.slane %v2528, 2
        %v2530 = vadd.f32 %v2528, %v2529
        %v2531 = vrot.slane %v2530, 1
        %v2532 = vadd.f32 %v2530, %v2531
        %v2533 = vmul.f32 %v2035, %v1908
        %v2534 = vmul.f32 %v2036, %v1910
        %v2535 = vmul.f32 %v2037, %v1913
        %v2536 = vmul.f32 %v2038, %v1915
        %v2537 = vadd.f32 %v2533, %v2534
        %v2538 = vadd.f32 %v2537, %v2535
        %v2539 = vadd.f32 %v2538, %v2536
        %v2540 = vrot.slane %v2539, 4
        %v2541 = vadd.f32 %v2539, %v2540
        %v2542 = vrot.slane %v2541, 2
        %v2543 = vadd.f32 %v2541, %v2542
        %v2544 = vrot.slane %v2543, 1
        %v2545 = vadd.f32 %v2543, %v2544
        %v2546 = vmul.f32 %v2035, %v1918
        %v2547 = vmul.f32 %v2036, %v1920
        %v2548 = vmul.f32 %v2037, %v1923
        %v2549 = vmul.f32 %v2038, %v1925
        %v2550 = vadd.f32 %v2546, %v2547
        %v2551 = vadd.f32 %v2550, %v2548
        %v2552 = vadd.f32 %v2551, %v2549
        %v2553 = vrot.slane %v2552, 4
        %v2554 = vadd.f32 %v2552, %v2553
        %v2555 = vrot.slane %v2554, 2
        %v2556 = vadd.f32 %v2554, %v2555
        %v2557 = vrot.slane %v2556, 1
        %v2558 = vadd.f32 %v2556, %v2557
        %v2559 = vmul.f32 %v2035, %v1928
        %v2560 = vmul.f32 %v2036, %v1930
        %v2561 = vmul.f32 %v2037, %v1933
        %v2562 = vmul.f32 %v2038, %v1935
        %v2563 = vadd.f32 %v2559, %v2560
        %v2564 = vadd.f32 %v2563, %v2561
        %v2565 = vadd.f32 %v2564, %v2562
        %v2566 = vrot.slane %v2565, 4
        %v2567 = vadd.f32 %v2565, %v2566
        %v2568 = vrot.slane %v2567, 2
        %v2569 = vadd.f32 %v2567, %v2568
        %v2570 = vrot.slane %v2569, 1
        %v2571 = vadd.f32 %v2569, %v2570
        %v2572 = vmul.f32 %v2035, %v1938
        %v2573 = vmul.f32 %v2036, %v1940
        %v2574 = vmul.f32 %v2037, %v1943
        %v2575 = vmul.f32 %v2038, %v1945
        %v2576 = vadd.f32 %v2572, %v2573
        %v2577 = vadd.f32 %v2576, %v2574
        %v2578 = vadd.f32 %v2577, %v2575
        %v2579 = vrot.slane %v2578, 4
        %v2580 = vadd.f32 %v2578, %v2579
        %v2581 = vrot.slane %v2580, 2
        %v2582 = vadd.f32 %v2580, %v2581
        %v2583 = vrot.slane %v2582, 1
        %v2584 = vadd.f32 %v2582, %v2583
        %v2585 = vmax.f32 %v2493, %v2506
        %v2586 = vmax.f32 %v2585, %v2519
        %v2587 = vmax.f32 %v2586, %v2532
        %v2588 = vmax.f32 %v2587, %v2545
        %v2589 = vmax.f32 %v2588, %v2558
        %v2590 = vmax.f32 %v2589, %v2571
        %v2591 = vmax.f32 %v2590, %v2584
        %v2592 = vsub.f32 %v2493, %v2591
        %v2593 = vmul.f32 %v2592, 1.442695
        %v2594 = vpow.pop %v2593
        %v2595 = vsub.f32 %v2506, %v2591
        %v2596 = vmul.f32 %v2595, 1.442695
        %v2597 = vpow.pop %v2596
        %v2598 = vsub.f32 %v2519, %v2591
        %v2599 = vmul.f32 %v2598, 1.442695
        %v2600 = vpow.pop %v2599
        %v2601 = vsub.f32 %v2532, %v2591
        %v2602 = vmul.f32 %v2601, 1.442695
        %v2603 = vpow.pop %v2602
        %v2604 = vsub.f32 %v2545, %v2591
        %v2605 = vmul.f32 %v2604, 1.442695
        %v2606 = vpow.pop %v2605
        %v2607 = vsub.f32 %v2558, %v2591
        %v2608 = vmul.f32 %v2607, 1.442695
        %v2609 = vpow.pop %v2608
        %v2610 = vsub.f32 %v2571, %v2591
        %v2611 = vmul.f32 %v2610, 1.442695
        %v2612 = vpow.pop %v2611
        %v2613 = vsub.f32 %v2584, %v2591
        %v2614 = vmul.f32 %v2613, 1.442695
        %v2615 = vpow.pop %v2614
        %v2616 = vadd.f32 %v2594, %v2597
        %v2617 = vadd.f32 %v2616, %v2600
        %v2618 = vadd.f32 %v2617, %v2603
        %v2619 = vadd.f32 %v2618, %v2606
        %v2620 = vadd.f32 %v2619, %v2609
        %v2621 = vadd.f32 %v2620, %v2612
        %v2622 = vadd.f32 %v2621, %v2615
        %v2623 = vrcp.pop %v2622
        %v2624 = vmul.f32 %v2594, %v2623
        %v2625 = vmul.f32 %v2624, %v1948
        %v2626 = vmul.f32 %v2624, %v1950
        %v2627 = vmul.f32 %v2624, %v1953
        %v2628 = vmul.f32 %v2624, %v1955
        %v2629 = vmul.f32 %v2597, %v2623
        %v2630 = vmul.f32 %v2629, %v1958
        %v2631 = vmul.f32 %v2629, %v1960
        %v2632 = vmul.f32 %v2629, %v1963
        %v2633 = vmul.f32 %v2629, %v1965
        %v2634 = vadd.f32 %v2625, %v2630
        %v2635 = vadd.f32 %v2626, %v2631
        %v2636 = vadd.f32 %v2627, %v2632
        %v2637 = vadd.f32 %v2628, %v2633
        %v2638 = vmul.f32 %v2600, %v2623
        %v2639 = vmul.f32 %v2638, %v1968
        %v2640 = vmul.f32 %v2638, %v1970
        %v2641 = vmul.f32 %v2638, %v1973
        %v2642 = vmul.f32 %v2638, %v1975
        %v2643 = vadd.f32 %v2634, %v2639
        %v2644 = vadd.f32 %v2635, %v2640
        %v2645 = vadd.f32 %v2636, %v2641
        %v2646 = vadd.f32 %v2637, %v2642
        %v2647 = vmul.f32 %v2603, %v2623
        %v2648 = vmul.f32 %v2647, %v1978
        %v2649 = vmul.f32 %v2647, %v1980
        %v2650 = vmul.f32 %v2647, %v1983
        %v2651 = vmul.f32 %v2647, %v1985
        %v2652 = vadd.f32 %v2643, %v2648
        %v2653 = vadd.f32 %v2644, %v2649
        %v2654 = vadd.f32 %v2645, %v2650
        %v2655 = vadd.f32 %v2646, %v2651
        %v2656 = vmul.f32 %v2606, %v2623
        %v2657 = vmul.f32 %v2656, %v1988
        %v2658 = vmul.f32 %v2656, %v1990
        %v2659 = vmul.f32 %v2656, %v1993
        %v2660 = vmul.f32 %v2656, %v1995
        %v2661 = vadd.f32 %v2652, %v2657
        %v2662 = vadd.f32 %v2653, %v2658
        %v2663 = vadd.f32 %v2654, %v2659
        %v2664 = vadd.f32 %v2655, %v2660
        %v2665 = vmul.f32 %v2609, %v2623
        %v2666 = vmul.f32 %v2665, %v1998
        %v2667 = vmul.f32 %v2665, %v2000
        %v2668 = vmul.f32 %v2665, %v2003
        %v2669 = vmul.f32 %v2665, %v2005
        %v2670 = vadd.f32 %v2661, %v2666
        %v2671 = vadd.f32 %v2662, %v2667
        %v2672 = vadd.f32 %v2663, %v2668
        %v2673 = vadd.f32 %v2664, %v2669
        %v2674 = vmul.f32 %v2612, %v2623
        %v2675 = vmul.f32 %v2674, %v2008
        %v2676 = vmul.f32 %v2674, %v2010
        %v2677 = vmul.f32 %v2674, %v2013
        %v2678 = vmul.f32 %v2674, %v2015
        %v2679 = vadd.f32 %v2670, %v2675
        %v2680 = vadd.f32 %v2671, %v2676
        %v2681 = vadd.f32 %v2672, %v2677
        %v2682 = vadd.f32 %v2673, %v2678
        %v2683 = vmul.f32 %v2615, %v2623
        %v2684 = vmul.f32 %v2683, %v2018
        %v2685 = vmul.f32 %v2683, %v2020
        %v2686 = vmul.f32 %v2683, %v2023
        %v2687 = vmul.f32 %v2683, %v2025
        %v2688 = vadd.f32 %v2679, %v2684
        %v2689 = vadd.f32 %v2680, %v2685
        %v2690 = vadd.f32 %v2681, %v2686
        %v2691 = vadd.f32 %v2682, %v2687
        %v2692 = vmul.f32 %v2039, %v1868
        %v2693 = vmul.f32 %v2040, %v1870
        %v2694 = vmul.f32 %v2041, %v1873
        %v2695 = vmul.f32 %v2042, %v1875
        %v2696 = vadd.f32 %v2692, %v2693
        %v2697 = vadd.f32 %v2696, %v2694
        %v2698 = vadd.f32 %v2697, %v2695
        %v2699 = vrot.slane %v2698, 4
        %v2700 = vadd.f32 %v2698, %v2699
        %v2701 = vrot.slane %v2700, 2
        %v2702 = vadd.f32 %v2700, %v2701
        %v2703 = vrot.slane %v2702, 1
        %v2704 = vadd.f32 %v2702, %v2703
        %v2705 = vmul.f32 %v2039, %v1878
        %v2706 = vmul.f32 %v2040, %v1880
        %v2707 = vmul.f32 %v2041, %v1883
        %v2708 = vmul.f32 %v2042, %v1885
        %v2709 = vadd.f32 %v2705, %v2706
        %v2710 = vadd.f32 %v2709, %v2707
        %v2711 = vadd.f32 %v2710, %v2708
        %v2712 = vrot.slane %v2711, 4
        %v2713 = vadd.f32 %v2711, %v2712
        %v2714 = vrot.slane %v2713, 2
        %v2715 = vadd.f32 %v2713, %v2714
        %v2716 = vrot.slane %v2715, 1
        %v2717 = vadd.f32 %v2715, %v2716
        %v2718 = vmul.f32 %v2039, %v1888
        %v2719 = vmul.f32 %v2040, %v1890
        %v2720 = vmul.f32 %v2041, %v1893
        %v2721 = vmul.f32 %v2042, %v1895
        %v2722 = vadd.f32 %v2718, %v2719
        %v2723 = vadd.f32 %v2722, %v2720
        %v2724 = vadd.f32 %v2723, %v2721
        %v2725 = vrot.slane %v2724, 4
        %v2726 = vadd.f32 %v2724, %v2725
        %v2727 = vrot.slane %v2726, 2
        %v2728 = vadd.f32 %v2726, %v2727
        %v2729 = vrot.slane %v2728, 1
        %v2730 = vadd.f32 %v2728, %v2729
        %v2731 = vmul.f32 %v2039, %v1898
        %v2732 = vmul.f32 %v2040, %v1900
        %v2733 = vmul.f32 %v2041, %v1903
        %v2734 = vmul.f32 %v2042, %v1905
        %v2735 = vadd.f32 %v2731, %v2732
        %v2736 = vadd.f32 %v2735, %v2733
        %v2737 = vadd.f32 %v2736, %v2734
        %v2738 = vrot.slane %v2737, 4
        %v2739 = vadd.f32 %v2737, %v2738
        %v2740 = vrot.slane %v2739, 2
        %v2741 = vadd.f32 %v2739, %v2740
        %v2742 = vrot.slane %v2741, 1
        %v2743 = vadd.f32 %v2741, %v2742
        %v2744 = vmul.f32 %v2039, %v1908
        %v2745 = vmul.f32 %v2040, %v1910
        %v2746 = vmul.f32 %v2041, %v1913
        %v2747 = vmul.f32 %v2042, %v1915
        %v2748 = vadd.f32 %v2744, %v2745
        %v2749 = vadd.f32 %v2748, %v2746
        %v2750 = vadd.f32 %v2749, %v2747
        %v2751 = vrot.slane %v2750, 4
        %v2752 = vadd.f32 %v2750, %v2751
        %v2753 = vrot.slane %v2752, 2
        %v2754 = vadd.f32 %v2752, %v2753
        %v2755 = vrot.slane %v2754, 1
        %v2756 = vadd.f32 %v2754, %v2755
        %v2757 = vmul.f32 %v2039, %v1918
        %v2758 = vmul.f32 %v2040, %v1920
        %v2759 = vmul.f32 %v2041, %v1923
        %v2760 = vmul.f32 %v2042, %v1925
        %v2761 = vadd.f32 %v2757, %v2758
        %v2762 = vadd.f32 %v2761, %v2759
        %v2763 = vadd.f32 %v2762, %v2760
        %v2764 = vrot.slane %v2763, 4
        %v2765 = vadd.f32 %v2763, %v2764
        %v2766 = vrot.slane %v2765, 2
        %v2767 = vadd.f32 %v2765, %v2766
        %v2768 = vrot.slane %v2767, 1
        %v2769 = vadd.f32 %v2767, %v2768
        %v2770 = vmul.f32 %v2039, %v1928
        %v2771 = vmul.f32 %v2040, %v1930
        %v2772 = vmul.f32 %v2041, %v1933
        %v2773 = vmul.f32 %v2042, %v1935
        %v2774 = vadd.f32 %v2770, %v2771
        %v2775 = vadd.f32 %v2774, %v2772
        %v2776 = vadd.f32 %v2775, %v2773
        %v2777 = vrot.slane %v2776, 4
        %v2778 = vadd.f32 %v2776, %v2777
        %v2779 = vrot.slane %v2778, 2
        %v2780 = vadd.f32 %v2778, %v2779
        %v2781 = vrot.slane %v2780, 1
        %v2782 = vadd.f32 %v2780, %v2781
        %v2783 = vmul.f32 %v2039, %v1938
        %v2784 = vmul.f32 %v2040, %v1940
        %v2785 = vmul.f32 %v2041, %v1943
        %v2786 = vmul.f32 %v2042, %v1945
        %v2787 = vadd.f32 %v2783, %v2784
        %v2788 = vadd.f32 %v2787, %v2785
        %v2789 = vadd.f32 %v2788, %v2786
        %v2790 = vrot.slane %v2789, 4
        %v2791 = vadd.f32 %v2789, %v2790
        %v2792 = vrot.slane %v2791, 2
        %v2793 = vadd.f32 %v2791, %v2792
        %v2794 = vrot.slane %v2793, 1
        %v2795 = vadd.f32 %v2793, %v2794
        %v2796 = vmax.f32 %v2704, %v2717
        %v2797 = vmax.f32 %v2796, %v2730
        %v2798 = vmax.f32 %v2797, %v2743
        %v2799 = vmax.f32 %v2798, %v2756
        %v2800 = vmax.f32 %v2799, %v2769
        %v2801 = vmax.f32 %v2800, %v2782
        %v2802 = vmax.f32 %v2801, %v2795
        %v2803 = vsub.f32 %v2704, %v2802
        %v2804 = vmul.f32 %v2803, 1.442695
        %v2805 = vpow.pop %v2804
        %v2806 = vsub.f32 %v2717, %v2802
        %v2807 = vmul.f32 %v2806, 1.442695
        %v2808 = vpow.pop %v2807
        %v2809 = vsub.f32 %v2730, %v2802
        %v2810 = vmul.f32 %v2809, 1.442695
        %v2811 = vpow.pop %v2810
        %v2812 = vsub.f32 %v2743, %v2802
        %v2813 = vmul.f32 %v2812, 1.442695
        %v2814 = vpow.pop %v2813
        %v2815 = vsub.f32 %v2756, %v2802
        %v2816 = vmul.f32 %v2815, 1.442695
        %v2817 = vpow.pop %v2816
        %v2818 = vsub.f32 %v2769, %v2802
        %v2819 = vmul.f32 %v2818, 1.442695
        %v2820 = vpow.pop %v2819
        %v2821 = vsub.f32 %v2782, %v2802
        %v2822 = vmul.f32 %v2821, 1.442695
        %v2823 = vpow.pop %v2822
        %v2824 = vsub.f32 %v2795, %v2802
        %v2825 = vmul.f32 %v2824, 1.442695
        %v2826 = vpow.pop %v2825
        %v2827 = vadd.f32 %v2805, %v2808
        %v2828 = vadd.f32 %v2827, %v2811
        %v2829 = vadd.f32 %v2828, %v2814
        %v2830 = vadd.f32 %v2829, %v2817
        %v2831 = vadd.f32 %v2830, %v2820
        %v2832 = vadd.f32 %v2831, %v2823
        %v2833 = vadd.f32 %v2832, %v2826
        %v2834 = vrcp.pop %v2833
        %v2835 = vmul.f32 %v2805, %v2834
        %v2836 = vmul.f32 %v2835, %v1948
        %v2837 = vmul.f32 %v2835, %v1950
        %v2838 = vmul.f32 %v2835, %v1953
        %v2839 = vmul.f32 %v2835, %v1955
        %v2840 = vmul.f32 %v2808, %v2834
        %v2841 = vmul.f32 %v2840, %v1958
        %v2842 = vmul.f32 %v2840, %v1960
        %v2843 = vmul.f32 %v2840, %v1963
        %v2844 = vmul.f32 %v2840, %v1965
        %v2845 = vadd.f32 %v2836, %v2841
        %v2846 = vadd.f32 %v2837, %v2842
        %v2847 = vadd.f32 %v2838, %v2843
        %v2848 = vadd.f32 %v2839, %v2844
        %v2849 = vmul.f32 %v2811, %v2834
        %v2850 = vmul.f32 %v2849, %v1968
        %v2851 = vmul.f32 %v2849, %v1970
        %v2852 = vmul.f32 %v2849, %v1973
        %v2853 = vmul.f32 %v2849, %v1975
        %v2854 = vadd.f32 %v2845, %v2850
        %v2855 = vadd.f32 %v2846, %v2851
        %v2856 = vadd.f32 %v2847, %v2852
        %v2857 = vadd.f32 %v2848, %v2853
        %v2858 = vmul.f32 %v2814, %v2834
        %v2859 = vmul.f32 %v2858, %v1978
        %v2860 = vmul.f32 %v2858, %v1980
        %v2861 = vmul.f32 %v2858, %v1983
        %v2862 = vmul.f32 %v2858, %v1985
        %v2863 = vadd.f32 %v2854, %v2859
        %v2864 = vadd.f32 %v2855, %v2860
        %v2865 = vadd.f32 %v2856, %v2861
        %v2866 = vadd.f32 %v2857, %v2862
        %v2867 = vmul.f32 %v2817, %v2834
        %v2868 = vmul.f32 %v2867, %v1988
        %v2869 = vmul.f32 %v2867, %v1990
        %v2870 = vmul.f32 %v2867, %v1993
        %v2871 = vmul.f32 %v2867, %v1995
        %v2872 = vadd.f32 %v2863, %v2868
        %v2873 = vadd.f32 %v2864, %v2869
        %v2874 = vadd.f32 %v2865, %v2870
        %v2875 = vadd.f32 %v2866, %v2871
        %v2876 = vmul.f32 %v2820, %v2834
        %v2877 = vmul.f32 %v2876, %v1998
        %v2878 = vmul.f32 %v2876, %v2000
        %v2879 = vmul.f32 %v2876, %v2003
        %v2880 = vmul.f32 %v2876, %v2005
        %v2881 = vadd.f32 %v2872, %v2877
        %v2882 = vadd.f32 %v2873, %v2878
        %v2883 = vadd.f32 %v2874, %v2879
        %v2884 = vadd.f32 %v2875, %v2880
        %v2885 = vmul.f32 %v2823, %v2834
        %v2886 = vmul.f32 %v2885, %v2008
        %v2887 = vmul.f32 %v2885, %v2010
        %v2888 = vmul.f32 %v2885, %v2013
        %v2889 = vmul.f32 %v2885, %v2015
        %v2890 = vadd.f32 %v2881, %v2886
        %v2891 = vadd.f32 %v2882, %v2887
        %v2892 = vadd.f32 %v2883, %v2888
        %v2893 = vadd.f32 %v2884, %v2889
        %v2894 = vmul.f32 %v2826, %v2834
        %v2895 = vmul.f32 %v2894, %v2018
        %v2896 = vmul.f32 %v2894, %v2020
        %v2897 = vmul.f32 %v2894, %v2023
        %v2898 = vmul.f32 %v2894, %v2025
        %v2899 = vadd.f32 %v2890, %v2895
        %v2900 = vadd.f32 %v2891, %v2896
        %v2901 = vadd.f32 %v2892, %v2897
        %v2902 = vadd.f32 %v2893, %v2898
        %v2903 = vmul.f32 %v2043, %v1868
        %v2904 = vmul.f32 %v2044, %v1870
        %v2905 = vmul.f32 %v2045, %v1873
        %v2906 = vmul.f32 %v2046, %v1875
        %v2907 = vadd.f32 %v2903, %v2904
        %v2908 = vadd.f32 %v2907, %v2905
        %v2909 = vadd.f32 %v2908, %v2906
        %v2910 = vrot.slane %v2909, 4
        %v2911 = vadd.f32 %v2909, %v2910
        %v2912 = vrot.slane %v2911, 2
        %v2913 = vadd.f32 %v2911, %v2912
        %v2914 = vrot.slane %v2913, 1
        %v2915 = vadd.f32 %v2913, %v2914
        %v2916 = vmul.f32 %v2043, %v1878
        %v2917 = vmul.f32 %v2044, %v1880
        %v2918 = vmul.f32 %v2045, %v1883
        %v2919 = vmul.f32 %v2046, %v1885
        %v2920 = vadd.f32 %v2916, %v2917
        %v2921 = vadd.f32 %v2920, %v2918
        %v2922 = vadd.f32 %v2921, %v2919
        %v2923 = vrot.slane %v2922, 4
        %v2924 = vadd.f32 %v2922, %v2923
        %v2925 = vrot.slane %v2924, 2
        %v2926 = vadd.f32 %v2924, %v2925
        %v2927 = vrot.slane %v2926, 1
        %v2928 = vadd.f32 %v2926, %v2927
        %v2929 = vmul.f32 %v2043, %v1888
        %v2930 = vmul.f32 %v2044, %v1890
        %v2931 = vmul.f32 %v2045, %v1893
        %v2932 = vmul.f32 %v2046, %v1895
        %v2933 = vadd.f32 %v2929, %v2930
        %v2934 = vadd.f32 %v2933, %v2931
        %v2935 = vadd.f32 %v2934, %v2932
        %v2936 = vrot.slane %v2935, 4
        %v2937 = vadd.f32 %v2935, %v2936
        %v2938 = vrot.slane %v2937, 2
        %v2939 = vadd.f32 %v2937, %v2938
        %v2940 = vrot.slane %v2939, 1
        %v2941 = vadd.f32 %v2939, %v2940
        %v2942 = vmul.f32 %v2043, %v1898
        %v2943 = vmul.f32 %v2044, %v1900
        %v2944 = vmul.f32 %v2045, %v1903
        %v2945 = vmul.f32 %v2046, %v1905
        %v2946 = vadd.f32 %v2942, %v2943
        %v2947 = vadd.f32 %v2946, %v2944
        %v2948 = vadd.f32 %v2947, %v2945
        %v2949 = vrot.slane %v2948, 4
        %v2950 = vadd.f32 %v2948, %v2949
        %v2951 = vrot.slane %v2950, 2
        %v2952 = vadd.f32 %v2950, %v2951
        %v2953 = vrot.slane %v2952, 1
        %v2954 = vadd.f32 %v2952, %v2953
        %v2955 = vmul.f32 %v2043, %v1908
        %v2956 = vmul.f32 %v2044, %v1910
        %v2957 = vmul.f32 %v2045, %v1913
        %v2958 = vmul.f32 %v2046, %v1915
        %v2959 = vadd.f32 %v2955, %v2956
        %v2960 = vadd.f32 %v2959, %v2957
        %v2961 = vadd.f32 %v2960, %v2958
        %v2962 = vrot.slane %v2961, 4
        %v2963 = vadd.f32 %v2961, %v2962
        %v2964 = vrot.slane %v2963, 2
        %v2965 = vadd.f32 %v2963, %v2964
        %v2966 = vrot.slane %v2965, 1
        %v2967 = vadd.f32 %v2965, %v2966
        %v2968 = vmul.f32 %v2043, %v1918
        %v2969 = vmul.f32 %v2044, %v1920
        %v2970 = vmul.f32 %v2045, %v1923
        %v2971 = vmul.f32 %v2046, %v1925
        %v2972 = vadd.f32 %v2968, %v2969
        %v2973 = vadd.f32 %v2972, %v2970
        %v2974 = vadd.f32 %v2973, %v2971
        %v2975 = vrot.slane %v2974, 4
        %v2976 = vadd.f32 %v2974, %v2975
        %v2977 = vrot.slane %v2976, 2
        %v2978 = vadd.f32 %v2976, %v2977
        %v2979 = vrot.slane %v2978, 1
        %v2980 = vadd.f32 %v2978, %v2979
        %v2981 = vmul.f32 %v2043, %v1928
        %v2982 = vmul.f32 %v2044, %v1930
        %v2983 = vmul.f32 %v2045, %v1933
        %v2984 = vmul.f32 %v2046, %v1935
        %v2985 = vadd.f32 %v2981, %v2982
        %v2986 = vadd.f32 %v2985, %v2983
        %v2987 = vadd.f32 %v2986, %v2984
        %v2988 = vrot.slane %v2987, 4
        %v2989 = vadd.f32 %v2987, %v2988
        %v2990 = vrot.slane %v2989, 2
        %v2991 = vadd.f32 %v2989, %v2990
        %v2992 = vrot.slane %v2991, 1
        %v2993 = vadd.f32 %v2991, %v2992
        %v2994 = vmul.f32 %v2043, %v1938
        %v2995 = vmul.f32 %v2044, %v1940
        %v2996 = vmul.f32 %v2045, %v1943
        %v2997 = vmul.f32 %v2046, %v1945
        %v2998 = vadd.f32 %v2994, %v2995
        %v2999 = vadd.f32 %v2998, %v2996
        %v3000 = vadd.f32 %v2999, %v2997
        %v3001 = vrot.slane %v3000, 4
        %v3002 = vadd.f32 %v3000, %v3001
        %v3003 = vrot.slane %v3002, 2
        %v3004 = vadd.f32 %v3002, %v3003
        %v3005 = vrot.slane %v3004, 1
        %v3006 = vadd.f32 %v3004, %v3005
        %v3007 = vmax.f32 %v2915, %v2928
        %v3008 = vmax.f32 %v3007, %v2941
        %v3009 = vmax.f32 %v3008, %v2954
        %v3010 = vmax.f32 %v3009, %v2967
        %v3011 = vmax.f32 %v3010, %v2980
        %v3012 = vmax.f32 %v3011, %v2993
        %v3013 = vmax.f32 %v3012, %v3006
        %v3014 = vsub.f32 %v2915, %v3013
        %v3015 = vmul.f32 %v3014, 1.442695
        %v3016 = vpow.pop %v3015
        %v3017 = vsub.f32 %v2928, %v3013
        %v3018 = vmul.f32 %v3017, 1.442695
        %v3019 = vpow.pop %v3018
        %v3020 = vsub.f32 %v2941, %v3013
        %v3021 = vmul.f32 %v3020, 1.442695
        %v3022 = vpow.pop %v3021
        %v3023 = vsub.f32 %v2954, %v3013
        %v3024 = vmul.f32 %v3023, 1.442695
        %v3025 = vpow.pop %v3024
        %v3026 = vsub.f32 %v2967, %v3013
        %v3027 = vmul.f32 %v3026, 1.442695
        %v3028 = vpow.pop %v3027
        %v3029 = vsub.f32 %v2980, %v3013
        %v3030 = vmul.f32 %v3029, 1.442695
        %v3031 = vpow.pop %v3030
        %v3032 = vsub.f32 %v2993, %v3013
        %v3033 = vmul.f32 %v3032, 1.442695
        %v3034 = vpow.pop %v3033
        %v3035 = vsub.f32 %v3006, %v3013
        %v3036 = vmul.f32 %v3035, 1.442695
        %v3037 = vpow.pop %v3036
        %v3038 = vadd.f32 %v3016, %v3019
        %v3039 = vadd.f32 %v3038, %v3022
        %v3040 = vadd.f32 %v3039, %v3025
        %v3041 = vadd.f32 %v3040, %v3028
        %v3042 = vadd.f32 %v3041, %v3031
        %v3043 = vadd.f32 %v3042, %v3034
        %v3044 = vadd.f32 %v3043, %v3037
        %v3045 = vrcp.pop %v3044
        %v3046 = vmul.f32 %v3016, %v3045
        %v3047 = vmul.f32 %v3046, %v1948
        %v3048 = vmul.f32 %v3046, %v1950
        %v3049 = vmul.f32 %v3046, %v1953
        %v3050 = vmul.f32 %v3046, %v1955
        %v3051 = vmul.f32 %v3019, %v3045
        %v3052 = vmul.f32 %v3051, %v1958
        %v3053 = vmul.f32 %v3051, %v1960
        %v3054 = vmul.f32 %v3051, %v1963
        %v3055 = vmul.f32 %v3051, %v1965
        %v3056 = vadd.f32 %v3047, %v3052
        %v3057 = vadd.f32 %v3048, %v3053
        %v3058 = vadd.f32 %v3049, %v3054
        %v3059 = vadd.f32 %v3050, %v3055
        %v3060 = vmul.f32 %v3022, %v3045
        %v3061 = vmul.f32 %v3060, %v1968
        %v3062 = vmul.f32 %v3060, %v1970
        %v3063 = vmul.f32 %v3060, %v1973
        %v3064 = vmul.f32 %v3060, %v1975
        %v3065 = vadd.f32 %v3056, %v3061
        %v3066 = vadd.f32 %v3057, %v3062
        %v3067 = vadd.f32 %v3058, %v3063
        %v3068 = vadd.f32 %v3059, %v3064
        %v3069 = vmul.f32 %v3025, %v3045
        %v3070 = vmul.f32 %v3069, %v1978
        %v3071 = vmul.f32 %v3069, %v1980
        %v3072 = vmul.f32 %v3069, %v1983
        %v3073 = vmul.f32 %v3069, %v1985
        %v3074 = vadd.f32 %v3065, %v3070
        %v3075 = vadd.f32 %v3066, %v3071
        %v3076 = vadd.f32 %v3067, %v3072
        %v3077 = vadd.f32 %v3068, %v3073
        %v3078 = vmul.f32 %v3028, %v3045
        %v3079 = vmul.f32 %v3078, %v1988
        %v3080 = vmul.f32 %v3078, %v1990
        %v3081 = vmul.f32 %v3078, %v1993
        %v3082 = vmul.f32 %v3078, %v1995
        %v3083 = vadd.f32 %v3074, %v3079
        %v3084 = vadd.f32 %v3075, %v3080
        %v3085 = vadd.f32 %v3076, %v3081
        %v3086 = vadd.f32 %v3077, %v3082
        %v3087 = vmul.f32 %v3031, %v3045
        %v3088 = vmul.f32 %v3087, %v1998
        %v3089 = vmul.f32 %v3087, %v2000
        %v3090 = vmul.f32 %v3087, %v2003
        %v3091 = vmul.f32 %v3087, %v2005
        %v3092 = vadd.f32 %v3083, %v3088
        %v3093 = vadd.f32 %v3084, %v3089
        %v3094 = vadd.f32 %v3085, %v3090
        %v3095 = vadd.f32 %v3086, %v3091
        %v3096 = vmul.f32 %v3034, %v3045
        %v3097 = vmul.f32 %v3096, %v2008
        %v3098 = vmul.f32 %v3096, %v2010
        %v3099 = vmul.f32 %v3096, %v2013
        %v3100 = vmul.f32 %v3096, %v2015
        %v3101 = vadd.f32 %v3092, %v3097
        %v3102 = vadd.f32 %v3093, %v3098
        %v3103 = vadd.f32 %v3094, %v3099
        %v3104 = vadd.f32 %v3095, %v3100
        %v3105 = vmul.f32 %v3037, %v3045
        %v3106 = vmul.f32 %v3105, %v2018
        %v3107 = vmul.f32 %v3105, %v2020
        %v3108 = vmul.f32 %v3105, %v2023
        %v3109 = vmul.f32 %v3105, %v2025
        %v3110 = vadd.f32 %v3101, %v3106
        %v3111 = vadd.f32 %v3102, %v3107
        %v3112 = vadd.f32 %v3103, %v3108
        %v3113 = vadd.f32 %v3104, %v3109
        %v3114 = vmul.f32 %v2047, %v1868
        %v3115 = vmul.f32 %v2048, %v1870
        %v3116 = vmul.f32 %v2049, %v1873
        %v3117 = vmul.f32 %v2050, %v1875
        %v3118 = vadd.f32 %v3114, %v3115
        %v3119 = vadd.f32 %v3118, %v3116
        %v3120 = vadd.f32 %v3119, %v3117
        %v3121 = vrot.slane %v3120, 4
        %v3122 = vadd.f32 %v3120, %v3121
        %v3123 = vrot.slane %v3122, 2
        %v3124 = vadd.f32 %v3122, %v3123
        %v3125 = vrot.slane %v3124, 1
        %v3126 = vadd.f32 %v3124, %v3125
        %v3127 = vmul.f32 %v2047, %v1878
        %v3128 = vmul.f32 %v2048, %v1880
        %v3129 = vmul.f32 %v2049, %v1883
        %v3130 = vmul.f32 %v2050, %v1885
        %v3131 = vadd.f32 %v3127, %v3128
        %v3132 = vadd.f32 %v3131, %v3129
        %v3133 = vadd.f32 %v3132, %v3130
        %v3134 = vrot.slane %v3133, 4
        %v3135 = vadd.f32 %v3133, %v3134
        %v3136 = vrot.slane %v3135, 2
        %v3137 = vadd.f32 %v3135, %v3136
        %v3138 = vrot.slane %v3137, 1
        %v3139 = vadd.f32 %v3137, %v3138
        %v3140 = vmul.f32 %v2047, %v1888
        %v3141 = vmul.f32 %v2048, %v1890
        %v3142 = vmul.f32 %v2049, %v1893
        %v3143 = vmul.f32 %v2050, %v1895
        %v3144 = vadd.f32 %v3140, %v3141
        %v3145 = vadd.f32 %v3144, %v3142
        %v3146 = vadd.f32 %v3145, %v3143
        %v3147 = vrot.slane %v3146, 4
        %v3148 = vadd.f32 %v3146, %v3147
        %v3149 = vrot.slane %v3148, 2
        %v3150 = vadd.f32 %v3148, %v3149
        %v3151 = vrot.slane %v3150, 1
        %v3152 = vadd.f32 %v3150, %v3151
        %v3153 = vmul.f32 %v2047, %v1898
        %v3154 = vmul.f32 %v2048, %v1900
        %v3155 = vmul.f32 %v2049, %v1903
        %v3156 = vmul.f32 %v2050, %v1905
        %v3157 = vadd.f32 %v3153, %v3154
        %v3158 = vadd.f32 %v3157, %v3155
        %v3159 = vadd.f32 %v3158, %v3156
        %v3160 = vrot.slane %v3159, 4
        %v3161 = vadd.f32 %v3159, %v3160
        %v3162 = vrot.slane %v3161, 2
        %v3163 = vadd.f32 %v3161, %v3162
        %v3164 = vrot.slane %v3163, 1
        %v3165 = vadd.f32 %v3163, %v3164
        %v3166 = vmul.f32 %v2047, %v1908
        %v3167 = vmul.f32 %v2048, %v1910
        %v3168 = vmul.f32 %v2049, %v1913
        %v3169 = vmul.f32 %v2050, %v1915
        %v3170 = vadd.f32 %v3166, %v3167
        %v3171 = vadd.f32 %v3170, %v3168
        %v3172 = vadd.f32 %v3171, %v3169
        %v3173 = vrot.slane %v3172, 4
        %v3174 = vadd.f32 %v3172, %v3173
        %v3175 = vrot.slane %v3174, 2
        %v3176 = vadd.f32 %v3174, %v3175
        %v3177 = vrot.slane %v3176, 1
        %v3178 = vadd.f32 %v3176, %v3177
        %v3179 = vmul.f32 %v2047, %v1918
        %v3180 = vmul.f32 %v2048, %v1920
        %v3181 = vmul.f32 %v2049, %v1923
        %v3182 = vmul.f32 %v2050, %v1925
        %v3183 = vadd.f32 %v3179, %v3180
        %v3184 = vadd.f32 %v3183, %v3181
        %v3185 = vadd.f32 %v3184, %v3182
        %v3186 = vrot.slane %v3185, 4
        %v3187 = vadd.f32 %v3185, %v3186
        %v3188 = vrot.slane %v3187, 2
        %v3189 = vadd.f32 %v3187, %v3188
        %v3190 = vrot.slane %v3189, 1
        %v3191 = vadd.f32 %v3189, %v3190
        %v3192 = vmul.f32 %v2047, %v1928
        %v3193 = vmul.f32 %v2048, %v1930
        %v3194 = vmul.f32 %v2049, %v1933
        %v3195 = vmul.f32 %v2050, %v1935
        %v3196 = vadd.f32 %v3192, %v3193
        %v3197 = vadd.f32 %v3196, %v3194
        %v3198 = vadd.f32 %v3197, %v3195
        %v3199 = vrot.slane %v3198, 4
        %v3200 = vadd.f32 %v3198, %v3199
        %v3201 = vrot.slane %v3200, 2
        %v3202 = vadd.f32 %v3200, %v3201
        %v3203 = vrot.slane %v3202, 1
        %v3204 = vadd.f32 %v3202, %v3203
        %v3205 = vmul.f32 %v2047, %v1938
        %v3206 = vmul.f32 %v2048, %v1940
        %v3207 = vmul.f32 %v2049, %v1943
        %v3208 = vmul.f32 %v2050, %v1945
        %v3209 = vadd.f32 %v3205, %v3206
        %v3210 = vadd.f32 %v3209, %v3207
        %v3211 = vadd.f32 %v3210, %v3208
        %v3212 = vrot.slane %v3211, 4
        %v3213 = vadd.f32 %v3211, %v3212
        %v3214 = vrot.slane %v3213, 2
        %v3215 = vadd.f32 %v3213, %v3214
        %v3216 = vrot.slane %v3215, 1
        %v3217 = vadd.f32 %v3215, %v3216
        %v3218 = vmax.f32 %v3126, %v3139
        %v3219 = vmax.f32 %v3218, %v3152
        %v3220 = vmax.f32 %v3219, %v3165
        %v3221 = vmax.f32 %v3220, %v3178
        %v3222 = vmax.f32 %v3221, %v3191
        %v3223 = vmax.f32 %v3222, %v3204
        %v3224 = vmax.f32 %v3223, %v3217
        %v3225 = vsub.f32 %v3126, %v3224
        %v3226 = vmul.f32 %v3225, 1.442695
        %v3227 = vpow.pop %v3226
        %v3228 = vsub.f32 %v3139, %v3224
        %v3229 = vmul.f32 %v3228, 1.442695
        %v3230 = vpow.pop %v3229
        %v3231 = vsub.f32 %v3152, %v3224
        %v3232 = vmul.f32 %v3231, 1.442695
        %v3233 = vpow.pop %v3232
        %v3234 = vsub.f32 %v3165, %v3224
        %v3235 = vmul.f32 %v3234, 1.442695
        %v3236 = vpow.pop %v3235
        %v3237 = vsub.f32 %v3178, %v3224
        %v3238 = vmul.f32 %v3237, 1.442695
        %v3239 = vpow.pop %v3238
        %v3240 = vsub.f32 %v3191, %v3224
        %v3241 = vmul.f32 %v3240, 1.442695
        %v3242 = vpow.pop %v3241
        %v3243 = vsub.f32 %v3204, %v3224
        %v3244 = vmul.f32 %v3243, 1.442695
        %v3245 = vpow.pop %v3244
        %v3246 = vsub.f32 %v3217, %v3224
        %v3247 = vmul.f32 %v3246, 1.442695
        %v3248 = vpow.pop %v3247
        %v3249 = vadd.f32 %v3227, %v3230
        %v3250 = vadd.f32 %v3249, %v3233
        %v3251 = vadd.f32 %v3250, %v3236
        %v3252 = vadd.f32 %v3251, %v3239
        %v3253 = vadd.f32 %v3252, %v3242
        %v3254 = vadd.f32 %v3253, %v3245
        %v3255 = vadd.f32 %v3254, %v3248
        %v3256 = vrcp.pop %v3255
        %v3257 = vmul.f32 %v3227, %v3256
        %v3258 = vmul.f32 %v3257, %v1948
        %v3259 = vmul.f32 %v3257, %v1950
        %v3260 = vmul.f32 %v3257, %v1953
        %v3261 = vmul.f32 %v3257, %v1955
        %v3262 = vmul.f32 %v3230, %v3256
        %v3263 = vmul.f32 %v3262, %v1958
        %v3264 = vmul.f32 %v3262, %v1960
        %v3265 = vmul.f32 %v3262, %v1963
        %v3266 = vmul.f32 %v3262, %v1965
        %v3267 = vadd.f32 %v3258, %v3263
        %v3268 = vadd.f32 %v3259, %v3264
        %v3269 = vadd.f32 %v3260, %v3265
        %v3270 = vadd.f32 %v3261, %v3266
        %v3271 = vmul.f32 %v3233, %v3256
        %v3272 = vmul.f32 %v3271, %v1968
        %v3273 = vmul.f32 %v3271, %v1970
        %v3274 = vmul.f32 %v3271, %v1973
        %v3275 = vmul.f32 %v3271, %v1975
        %v3276 = vadd.f32 %v3267, %v3272
        %v3277 = vadd.f32 %v3268, %v3273
        %v3278 = vadd.f32 %v3269, %v3274
        %v3279 = vadd.f32 %v3270, %v3275
        %v3280 = vmul.f32 %v3236, %v3256
        %v3281 = vmul.f32 %v3280, %v1978
        %v3282 = vmul.f32 %v3280, %v1980
        %v3283 = vmul.f32 %v3280, %v1983
        %v3284 = vmul.f32 %v3280, %v1985
        %v3285 = vadd.f32 %v3276, %v3281
        %v3286 = vadd.f32 %v3277, %v3282
        %v3287 = vadd.f32 %v3278, %v3283
        %v3288 = vadd.f32 %v3279, %v3284
        %v3289 = vmul.f32 %v3239, %v3256
        %v3290 = vmul.f32 %v3289, %v1988
        %v3291 = vmul.f32 %v3289, %v1990
        %v3292 = vmul.f32 %v3289, %v1993
        %v3293 = vmul.f32 %v3289, %v1995
        %v3294 = vadd.f32 %v3285, %v3290
        %v3295 = vadd.f32 %v3286, %v3291
        %v3296 = vadd.f32 %v3287, %v3292
        %v3297 = vadd.f32 %v3288, %v3293
        %v3298 = vmul.f32 %v3242, %v3256
        %v3299 = vmul.f32 %v3298, %v1998
        %v3300 = vmul.f32 %v3298, %v2000
        %v3301 = vmul.f32 %v3298, %v2003
        %v3302 = vmul.f32 %v3298, %v2005
        %v3303 = vadd.f32 %v3294, %v3299
        %v3304 = vadd.f32 %v3295, %v3300
        %v3305 = vadd.f32 %v3296, %v3301
        %v3306 = vadd.f32 %v3297, %v3302
        %v3307 = vmul.f32 %v3245, %v3256
        %v3308 = vmul.f32 %v3307, %v2008
        %v3309 = vmul.f32 %v3307, %v2010
        %v3310 = vmul.f32 %v3307, %v2013
        %v3311 = vmul.f32 %v3307, %v2015
        %v3312 = vadd.f32 %v3303, %v3308
        %v3313 = vadd.f32 %v3304, %v3309
        %v3314 = vadd.f32 %v3305, %v3310
        %v3315 = vadd.f32 %v3306, %v3311
        %v3316 = vmul.f32 %v3248, %v3256
        %v3317 = vmul.f32 %v3316, %v2018
        %v3318 = vmul.f32 %v3316, %v2020
        %v3319 = vmul.f32 %v3316, %v2023
        %v3320 = vmul.f32 %v3316, %v2025
        %v3321 = vadd.f32 %v3312, %v3317
        %v3322 = vadd.f32 %v3313, %v3318
        %v3323 = vadd.f32 %v3314, %v3319
        %v3324 = vadd.f32 %v3315, %v3320
        %v3325 = vmul.f32 %v2051, %v1868
        %v3326 = vmul.f32 %v2052, %v1870
        %v3327 = vmul.f32 %v2053, %v1873
        %v3328 = vmul.f32 %v2054, %v1875
        %v3329 = vadd.f32 %v3325, %v3326
        %v3330 = vadd.f32 %v3329, %v3327
        %v3331 = vadd.f32 %v3330, %v3328
        %v3332 = vrot.slane %v3331, 4
        %v3333 = vadd.f32 %v3331, %v3332
        %v3334 = vrot.slane %v3333, 2
        %v3335 = vadd.f32 %v3333, %v3334
        %v3336 = vrot.slane %v3335, 1
        %v3337 = vadd.f32 %v3335, %v3336
        %v3338 = vmul.f32 %v2051, %v1878
        %v3339 = vmul.f32 %v2052, %v1880
        %v3340 = vmul.f32 %v2053, %v1883
        %v3341 = vmul.f32 %v2054, %v1885
        %v3342 = vadd.f32 %v3338, %v3339
        %v3343 = vadd.f32 %v3342, %v3340
        %v3344 = vadd.f32 %v3343, %v3341
        %v3345 = vrot.slane %v3344, 4
        %v3346 = vadd.f32 %v3344, %v3345
        %v3347 = vrot.slane %v3346, 2
        %v3348 = vadd.f32 %v3346, %v3347
        %v3349 = vrot.slane %v3348, 1
        %v3350 = vadd.f32 %v3348, %v3349
        %v3351 = vmul.f32 %v2051, %v1888
        %v3352 = vmul.f32 %v2052, %v1890
        %v3353 = vmul.f32 %v2053, %v1893
        %v3354 = vmul.f32 %v2054, %v1895
        %v3355 = vadd.f32 %v3351, %v3352
        %v3356 = vadd.f32 %v3355, %v3353
        %v3357 = vadd.f32 %v3356, %v3354
        %v3358 = vrot.slane %v3357, 4
        %v3359 = vadd.f32 %v3357, %v3358
        %v3360 = vrot.slane %v3359, 2
        %v3361 = vadd.f32 %v3359, %v3360
        %v3362 = vrot.slane %v3361, 1
        %v3363 = vadd.f32 %v3361, %v3362
        %v3364 = vmul.f32 %v2051, %v1898
        %v3365 = vmul.f32 %v2052, %v1900
        %v3366 = vmul.f32 %v2053, %v1903
        %v3367 = vmul.f32 %v2054, %v1905
        %v3368 = vadd.f32 %v3364, %v3365
        %v3369 = vadd.f32 %v3368, %v3366
        %v3370 = vadd.f32 %v3369, %v3367
        %v3371 = vrot.slane %v3370, 4
        %v3372 = vadd.f32 %v3370, %v3371
        %v3373 = vrot.slane %v3372, 2
        %v3374 = vadd.f32 %v3372, %v3373
        %v3375 = vrot.slane %v3374, 1
        %v3376 = vadd.f32 %v3374, %v3375
        %v3377 = vmul.f32 %v2051, %v1908
        %v3378 = vmul.f32 %v2052, %v1910
        %v3379 = vmul.f32 %v2053, %v1913
        %v3380 = vmul.f32 %v2054, %v1915
        %v3381 = vadd.f32 %v3377, %v3378
        %v3382 = vadd.f32 %v3381, %v3379
        %v3383 = vadd.f32 %v3382, %v3380
        %v3384 = vrot.slane %v3383, 4
        %v3385 = vadd.f32 %v3383, %v3384
        %v3386 = vrot.slane %v3385, 2
        %v3387 = vadd.f32 %v3385, %v3386
        %v3388 = vrot.slane %v3387, 1
        %v3389 = vadd.f32 %v3387, %v3388
        %v3390 = vmul.f32 %v2051, %v1918
        %v3391 = vmul.f32 %v2052, %v1920
        %v3392 = vmul.f32 %v2053, %v1923
        %v3393 = vmul.f32 %v2054, %v1925
        %v3394 = vadd.f32 %v3390, %v3391
        %v3395 = vadd.f32 %v3394, %v3392
        %v3396 = vadd.f32 %v3395, %v3393
        %v3397 = vrot.slane %v3396, 4
        %v3398 = vadd.f32 %v3396, %v3397
        %v3399 = vrot.slane %v3398, 2
        %v3400 = vadd.f32 %v3398, %v3399
        %v3401 = vrot.slane %v3400, 1
        %v3402 = vadd.f32 %v3400, %v3401
        %v3403 = vmul.f32 %v2051, %v1928
        %v3404 = vmul.f32 %v2052, %v1930
        %v3405 = vmul.f32 %v2053, %v1933
        %v3406 = vmul.f32 %v2054, %v1935
        %v3407 = vadd.f32 %v3403, %v3404
        %v3408 = vadd.f32 %v3407, %v3405
        %v3409 = vadd.f32 %v3408, %v3406
        %v3410 = vrot.slane %v3409, 4
        %v3411 = vadd.f32 %v3409, %v3410
        %v3412 = vrot.slane %v3411, 2
        %v3413 = vadd.f32 %v3411, %v3412
        %v3414 = vrot.slane %v3413, 1
        %v3415 = vadd.f32 %v3413, %v3414
        %v3416 = vmul.f32 %v2051, %v1938
        %v3417 = vmul.f32 %v2052, %v1940
        %v3418 = vmul.f32 %v2053, %v1943
        %v3419 = vmul.f32 %v2054, %v1945
        %v3420 = vadd.f32 %v3416, %v3417
        %v3421 = vadd.f32 %v3420, %v3418
        %v3422 = vadd.f32 %v3421, %v3419
        %v3423 = vrot.slane %v3422, 4
        %v3424 = vadd.f32 %v3422, %v3423
        %v3425 = vrot.slane %v3424, 2
        %v3426 = vadd.f32 %v3424, %v3425
        %v3427 = vrot.slane %v3426, 1
        %v3428 = vadd.f32 %v3426, %v3427
        %v3429 = vmax.f32 %v3337, %v3350
        %v3430 = vmax.f32 %v3429, %v3363
        %v3431 = vmax.f32 %v3430, %v3376
        %v3432 = vmax.f32 %v3431, %v3389
        %v3433 = vmax.f32 %v3432, %v3402
        %v3434 = vmax.f32 %v3433, %v3415
        %v3435 = vmax.f32 %v3434, %v3428
        %v3436 = vsub.f32 %v3337, %v3435
        %v3437 = vmul.f32 %v3436, 1.442695
        %v3438 = vpow.pop %v3437
        %v3439 = vsub.f32 %v3350, %v3435
        %v3440 = vmul.f32 %v3439, 1.442695
        %v3441 = vpow.pop %v3440
        %v3442 = vsub.f32 %v3363, %v3435
        %v3443 = vmul.f32 %v3442, 1.442695
        %v3444 = vpow.pop %v3443
        %v3445 = vsub.f32 %v3376, %v3435
        %v3446 = vmul.f32 %v3445, 1.442695
        %v3447 = vpow.pop %v3446
        %v3448 = vsub.f32 %v3389, %v3435
        %v3449 = vmul.f32 %v3448, 1.442695
        %v3450 = vpow.pop %v3449
        %v3451 = vsub.f32 %v3402, %v3435
        %v3452 = vmul.f32 %v3451, 1.442695
        %v3453 = vpow.pop %v3452
        %v3454 = vsub.f32 %v3415, %v3435
        %v3455 = vmul.f32 %v3454, 1.442695
        %v3456 = vpow.pop %v3455
        %v3457 = vsub.f32 %v3428, %v3435
        %v3458 = vmul.f32 %v3457, 1.442695
        %v3459 = vpow.pop %v3458
        %v3460 = vadd.f32 %v3438, %v3441
        %v3461 = vadd.f32 %v3460, %v3444
        %v3462 = vadd.f32 %v3461, %v3447
        %v3463 = vadd.f32 %v3462, %v3450
        %v3464 = vadd.f32 %v3463, %v3453
        %v3465 = vadd.f32 %v3464, %v3456
        %v3466 = vadd.f32 %v3465, %v3459
        %v3467 = vrcp.pop %v3466
        %v3468 = vmul.f32 %v3438, %v3467
        %v3469 = vmul.f32 %v3468, %v1948
        %v3470 = vmul.f32 %v3468, %v1950
        %v3471 = vmul.f32 %v3468, %v1953
        %v3472 = vmul.f32 %v3468, %v1955
        %v3473 = vmul.f32 %v3441, %v3467
        %v3474 = vmul.f32 %v3473, %v1958
        %v3475 = vmul.f32 %v3473, %v1960
        %v3476 = vmul.f32 %v3473, %v1963
        %v3477 = vmul.f32 %v3473, %v1965
        %v3478 = vadd.f32 %v3469, %v3474
        %v3479 = vadd.f32 %v3470, %v3475
        %v3480 = vadd.f32 %v3471, %v3476
        %v3481 = vadd.f32 %v3472, %v3477
        %v3482 = vmul.f32 %v3444, %v3467
        %v3483 = vmul.f32 %v3482, %v1968
        %v3484 = vmul.f32 %v3482, %v1970
        %v3485 = vmul.f32 %v3482, %v1973
        %v3486 = vmul.f32 %v3482, %v1975
        %v3487 = vadd.f32 %v3478, %v3483
        %v3488 = vadd.f32 %v3479, %v3484
        %v3489 = vadd.f32 %v3480, %v3485
        %v3490 = vadd.f32 %v3481, %v3486
        %v3491 = vmul.f32 %v3447, %v3467
        %v3492 = vmul.f32 %v3491, %v1978
        %v3493 = vmul.f32 %v3491, %v1980
        %v3494 = vmul.f32 %v3491, %v1983
        %v3495 = vmul.f32 %v3491, %v1985
        %v3496 = vadd.f32 %v3487, %v3492
        %v3497 = vadd.f32 %v3488, %v3493
        %v3498 = vadd.f32 %v3489, %v3494
        %v3499 = vadd.f32 %v3490, %v3495
        %v3500 = vmul.f32 %v3450, %v3467
        %v3501 = vmul.f32 %v3500, %v1988
        %v3502 = vmul.f32 %v3500, %v1990
        %v3503 = vmul.f32 %v3500, %v1993
        %v3504 = vmul.f32 %v3500, %v1995
        %v3505 = vadd.f32 %v3496, %v3501
        %v3506 = vadd.f32 %v3497, %v3502
        %v3507 = vadd.f32 %v3498, %v3503
        %v3508 = vadd.f32 %v3499, %v3504
        %v3509 = vmul.f32 %v3453, %v3467
        %v3510 = vmul.f32 %v3509, %v1998
        %v3511 = vmul.f32 %v3509, %v2000
        %v3512 = vmul.f32 %v3509, %v2003
        %v3513 = vmul.f32 %v3509, %v2005
        %v3514 = vadd.f32 %v3505, %v3510
        %v3515 = vadd.f32 %v3506, %v3511
        %v3516 = vadd.f32 %v3507, %v3512
        %v3517 = vadd.f32 %v3508, %v3513
        %v3518 = vmul.f32 %v3456, %v3467
        %v3519 = vmul.f32 %v3518, %v2008
        %v3520 = vmul.f32 %v3518, %v2010
        %v3521 = vmul.f32 %v3518, %v2013
        %v3522 = vmul.f32 %v3518, %v2015
        %v3523 = vadd.f32 %v3514, %v3519
        %v3524 = vadd.f32 %v3515, %v3520
        %v3525 = vadd.f32 %v3516, %v3521
        %v3526 = vadd.f32 %v3517, %v3522
        %v3527 = vmul.f32 %v3459, %v3467
        %v3528 = vmul.f32 %v3527, %v2018
        %v3529 = vmul.f32 %v3527, %v2020
        %v3530 = vmul.f32 %v3527, %v2023
        %v3531 = vmul.f32 %v3527, %v2025
        %v3532 = vadd.f32 %v3523, %v3528
        %v3533 = vadd.f32 %v3524, %v3529
        %v3534 = vadd.f32 %v3525, %v3530
        %v3535 = vadd.f32 %v3526, %v3531
        %v3536 = vmul.f32 %v2055, %v1868
        %v3537 = vmul.f32 %v2056, %v1870
        %v3538 = vmul.f32 %v2057, %v1873
        %v3539 = vmul.f32 %v2058, %v1875
        %v3540 = vadd.f32 %v3536, %v3537
        %v3541 = vadd.f32 %v3540, %v3538
        %v3542 = vadd.f32 %v3541, %v3539
        %v3543 = vrot.slane %v3542, 4
        %v3544 = vadd.f32 %v3542, %v3543
        %v3545 = vrot.slane %v3544, 2
        %v3546 = vadd.f32 %v3544, %v3545
        %v3547 = vrot.slane %v3546, 1
        %v3548 = vadd.f32 %v3546, %v3547
        %v3549 = vmul.f32 %v2055, %v1878
        %v3550 = vmul.f32 %v2056, %v1880
        %v3551 = vmul.f32 %v2057, %v1883
        %v3552 = vmul.f32 %v2058, %v1885
        %v3553 = vadd.f32 %v3549, %v3550
        %v3554 = vadd.f32 %v3553, %v3551
        %v3555 = vadd.f32 %v3554, %v3552
        %v3556 = vrot.slane %v3555, 4
        %v3557 = vadd.f32 %v3555, %v3556
        %v3558 = vrot.slane %v3557, 2
        %v3559 = vadd.f32 %v3557, %v3558
        %v3560 = vrot.slane %v3559, 1
        %v3561 = vadd.f32 %v3559, %v3560
        %v3562 = vmul.f32 %v2055, %v1888
        %v3563 = vmul.f32 %v2056, %v1890
        %v3564 = vmul.f32 %v2057, %v1893
        %v3565 = vmul.f32 %v2058, %v1895
        %v3566 = vadd.f32 %v3562, %v3563
        %v3567 = vadd.f32 %v3566, %v3564
        %v3568 = vadd.f32 %v3567, %v3565
        %v3569 = vrot.slane %v3568, 4
        %v3570 = vadd.f32 %v3568, %v3569
        %v3571 = vrot.slane %v3570, 2
        %v3572 = vadd.f32 %v3570, %v3571
        %v3573 = vrot.slane %v3572, 1
        %v3574 = vadd.f32 %v3572, %v3573
        %v3575 = vmul.f32 %v2055, %v1898
        %v3576 = vmul.f32 %v2056, %v1900
        %v3577 = vmul.f32 %v2057, %v1903
        %v3578 = vmul.f32 %v2058, %v1905
        %v3579 = vadd.f32 %v3575, %v3576
        %v3580 = vadd.f32 %v3579, %v3577
        %v3581 = vadd.f32 %v3580, %v3578
        %v3582 = vrot.slane %v3581, 4
        %v3583 = vadd.f32 %v3581, %v3582
        %v3584 = vrot.slane %v3583, 2
        %v3585 = vadd.f32 %v3583, %v3584
        %v3586 = vrot.slane %v3585, 1
        %v3587 = vadd.f32 %v3585, %v3586
        %v3588 = vmul.f32 %v2055, %v1908
        %v3589 = vmul.f32 %v2056, %v1910
        %v3590 = vmul.f32 %v2057, %v1913
        %v3591 = vmul.f32 %v2058, %v1915
        %v3592 = vadd.f32 %v3588, %v3589
        %v3593 = vadd.f32 %v3592, %v3590
        %v3594 = vadd.f32 %v3593, %v3591
        %v3595 = vrot.slane %v3594, 4
        %v3596 = vadd.f32 %v3594, %v3595
        %v3597 = vrot.slane %v3596, 2
        %v3598 = vadd.f32 %v3596, %v3597
        %v3599 = vrot.slane %v3598, 1
        %v3600 = vadd.f32 %v3598, %v3599
        %v3601 = vmul.f32 %v2055, %v1918
        %v3602 = vmul.f32 %v2056, %v1920
        %v3603 = vmul.f32 %v2057, %v1923
        %v3604 = vmul.f32 %v2058, %v1925
        %v3605 = vadd.f32 %v3601, %v3602
        %v3606 = vadd.f32 %v3605, %v3603
        %v3607 = vadd.f32 %v3606, %v3604
        %v3608 = vrot.slane %v3607, 4
        %v3609 = vadd.f32 %v3607, %v3608
        %v3610 = vrot.slane %v3609, 2
        %v3611 = vadd.f32 %v3609, %v3610
        %v3612 = vrot.slane %v3611, 1
        %v3613 = vadd.f32 %v3611, %v3612
        %v3614 = vmul.f32 %v2055, %v1928
        %v3615 = vmul.f32 %v2056, %v1930
        %v3616 = vmul.f32 %v2057, %v1933
        %v3617 = vmul.f32 %v2058, %v1935
        %v3618 = vadd.f32 %v3614, %v3615
        %v3619 = vadd.f32 %v3618, %v3616
        %v3620 = vadd.f32 %v3619, %v3617
        %v3621 = vrot.slane %v3620, 4
        %v3622 = vadd.f32 %v3620, %v3621
        %v3623 = vrot.slane %v3622, 2
        %v3624 = vadd.f32 %v3622, %v3623
        %v3625 = vrot.slane %v3624, 1
        %v3626 = vadd.f32 %v3624, %v3625
        %v3627 = vmul.f32 %v2055, %v1938
        %v3628 = vmul.f32 %v2056, %v1940
        %v3629 = vmul.f32 %v2057, %v1943
        %v3630 = vmul.f32 %v2058, %v1945
        %v3631 = vadd.f32 %v3627, %v3628
        %v3632 = vadd.f32 %v3631, %v3629
        %v3633 = vadd.f32 %v3632, %v3630
        %v3634 = vrot.slane %v3633, 4
        %v3635 = vadd.f32 %v3633, %v3634
        %v3636 = vrot.slane %v3635, 2
        %v3637 = vadd.f32 %v3635, %v3636
        %v3638 = vrot.slane %v3637, 1
        %v3639 = vadd.f32 %v3637, %v3638
        %v3640 = vmax.f32 %v3548, %v3561
        %v3641 = vmax.f32 %v3640, %v3574
        %v3642 = vmax.f32 %v3641, %v3587
        %v3643 = vmax.f32 %v3642, %v3600
        %v3644 = vmax.f32 %v3643, %v3613
        %v3645 = vmax.f32 %v3644, %v3626
        %v3646 = vmax.f32 %v3645, %v3639
        %v3647 = vsub.f32 %v3548, %v3646
        %v3648 = vmul.f32 %v3647, 1.442695
        %v3649 = vpow.pop %v3648
        %v3650 = vsub.f32 %v3561, %v3646
        %v3651 = vmul.f32 %v3650, 1.442695
        %v3652 = vpow.pop %v3651
        %v3653 = vsub.f32 %v3574, %v3646
        %v3654 = vmul.f32 %v3653, 1.442695
        %v3655 = vpow.pop %v3654
        %v3656 = vsub.f32 %v3587, %v3646
        %v3657 = vmul.f32 %v3656, 1.442695
        %v3658 = vpow.pop %v3657
        %v3659 = vsub.f32 %v3600, %v3646
        %v3660 = vmul.f32 %v3659, 1.442695
        %v3661 = vpow.pop %v3660
        %v3662 = vsub.f32 %v3613, %v3646
        %v3663 = vmul.f32 %v3662, 1.442695
        %v3664 = vpow.pop %v3663
        %v3665 = vsub.f32 %v3626, %v3646
        %v3666 = vmul.f32 %v3665, 1.442695
        %v3667 = vpow.pop %v3666
        %v3668 = vsub.f32 %v3639, %v3646
        %v3669 = vmul.f32 %v3668, 1.442695
        %v3670 = vpow.pop %v3669
        %v3671 = vadd.f32 %v3649, %v3652
        %v3672 = vadd.f32 %v3671, %v3655
        %v3673 = vadd.f32 %v3672, %v3658
        %v3674 = vadd.f32 %v3673, %v3661
        %v3675 = vadd.f32 %v3674, %v3664
        %v3676 = vadd.f32 %v3675, %v3667
        %v3677 = vadd.f32 %v3676, %v3670
        %v3678 = vrcp.pop %v3677
        %v3679 = vmul.f32 %v3649, %v3678
        %v3680 = vmul.f32 %v3679, %v1948
        %v3681 = vmul.f32 %v3679, %v1950
        %v3682 = vmul.f32 %v3679, %v1953
        %v3683 = vmul.f32 %v3679, %v1955
        %v3684 = vmul.f32 %v3652, %v3678
        %v3685 = vmul.f32 %v3684, %v1958
        %v3686 = vmul.f32 %v3684, %v1960
        %v3687 = vmul.f32 %v3684, %v1963
        %v3688 = vmul.f32 %v3684, %v1965
        %v3689 = vadd.f32 %v3680, %v3685
        %v3690 = vadd.f32 %v3681, %v3686
        %v3691 = vadd.f32 %v3682, %v3687
        %v3692 = vadd.f32 %v3683, %v3688
        %v3693 = vmul.f32 %v3655, %v3678
        %v3694 = vmul.f32 %v3693, %v1968
        %v3695 = vmul.f32 %v3693, %v1970
        %v3696 = vmul.f32 %v3693, %v1973
        %v3697 = vmul.f32 %v3693, %v1975
        %v3698 = vadd.f32 %v3689, %v3694
        %v3699 = vadd.f32 %v3690, %v3695
        %v3700 = vadd.f32 %v3691, %v3696
        %v3701 = vadd.f32 %v3692, %v3697
        %v3702 = vmul.f32 %v3658, %v3678
        %v3703 = vmul.f32 %v3702, %v1978
        %v3704 = vmul.f32 %v3702, %v1980
        %v3705 = vmul.f32 %v3702, %v1983
        %v3706 = vmul.f32 %v3702, %v1985
        %v3707 = vadd.f32 %v3698, %v3703
        %v3708 = vadd.f32 %v3699, %v3704
        %v3709 = vadd.f32 %v3700, %v3705
        %v3710 = vadd.f32 %v3701, %v3706
        %v3711 = vmul.f32 %v3661, %v3678
        %v3712 = vmul.f32 %v3711, %v1988
        %v3713 = vmul.f32 %v3711, %v1990
        %v3714 = vmul.f32 %v3711, %v1993
        %v3715 = vmul.f32 %v3711, %v1995
        %v3716 = vadd.f32 %v3707, %v3712
        %v3717 = vadd.f32 %v3708, %v3713
        %v3718 = vadd.f32 %v3709, %v3714
        %v3719 = vadd.f32 %v3710, %v3715
        %v3720 = vmul.f32 %v3664, %v3678
        %v3721 = vmul.f32 %v3720, %v1998
        %v3722 = vmul.f32 %v3720, %v2000
        %v3723 = vmul.f32 %v3720, %v2003
        %v3724 = vmul.f32 %v3720, %v2005
        %v3725 = vadd.f32 %v3716, %v3721
        %v3726 = vadd.f32 %v3717, %v3722
        %v3727 = vadd.f32 %v3718, %v3723
        %v3728 = vadd.f32 %v3719, %v3724
        %v3729 = vmul.f32 %v3667, %v3678
        %v3730 = vmul.f32 %v3729, %v2008
        %v3731 = vmul.f32 %v3729, %v2010
        %v3732 = vmul.f32 %v3729, %v2013
        %v3733 = vmul.f32 %v3729, %v2015
        %v3734 = vadd.f32 %v3725, %v3730
        %v3735 = vadd.f32 %v3726, %v3731
        %v3736 = vadd.f32 %v3727, %v3732
        %v3737 = vadd.f32 %v3728, %v3733
        %v3738 = vmul.f32 %v3670, %v3678
        %v3739 = vmul.f32 %v3738, %v2018
        %v3740 = vmul.f32 %v3738, %v2020
        %v3741 = vmul.f32 %v3738, %v2023
        %v3742 = vmul.f32 %v3738, %v2025
        %v3743 = vadd.f32 %v3734, %v3739
        %v3744 = vadd.f32 %v3735, %v3740
        %v3745 = vadd.f32 %v3736, %v3741
        %v3746 = vadd.f32 %v3737, %v3742
        %3747 = vxpose.xlu0.b32.start [1/16] %v2266, 128
        %3748 = vxpose.xlu0.b32.cont [2/16] %v2267, 128
        %3749 = vxpose.xlu0.b32.cont [3/16] %v2268, 128
        %3750 = vxpose.xlu0.b32.cont [4/16] %v2269, 128
        %3751 = vxpose.xlu0.b32.cont [5/16] %v2477, 128
        %3752 = vxpose.xlu0.b32.cont [6/16] %v2478, 128
        %3753 = vxpose.xlu0.b32.cont [7/16] %v2479, 128
        %3754 = vxpose.xlu0.b32.cont [8/16] %v2480, 128
        %3755 = vxpose.xlu0.b32.cont [9/16] %v2688, 128
        %3756 = vxpose.xlu0.b32.cont [10/16] %v2689, 128
        %3757 = vxpose.xlu0.b32.cont [11/16] %v2690, 128
        %3758 = vxpose.xlu0.b32.cont [12/16] %v2691, 128
        %3759 = vxpose.xlu0.b32.cont [13/16] %v2899, 128
        %3760 = vxpose.xlu0.b32.cont [14/16] %v2900, 128
        %3761 = vxpose.xlu0.b32.cont [15/16] %v2901, 128
        %3762 = vxpose.xlu0.b32.end [16/16] %v2902, 128
        %v3763 = vpop.trf.xlu0
        %v3764 = vpop.trf.xlu0
        %v3765 = vpop.trf.xlu0
        %v3766 = vpop.trf.xlu0
        %v3767 = vpop.trf.xlu0
        %v3768 = vpop.trf.xlu0
        %v3769 = vpop.trf.xlu0
        %v3770 = vpop.trf.xlu0
        %v3771 = vpop.trf.xlu0
        %v3772 = vpop.trf.xlu0
        %v3773 = vpop.trf.xlu0
        %v3774 = vpop.trf.xlu0
        %v3775 = vpop.trf.xlu0
        %v3776 = vpop.trf.xlu0
        %v3777 = vpop.trf.xlu0
        %v3778 = vpop.trf.xlu0
        %3779 = vxpose.xlu0.b32.start [1/16] %v3110, 128
        %3780 = vxpose.xlu0.b32.cont [2/16] %v3111, 128
        %3781 = vxpose.xlu0.b32.cont [3/16] %v3112, 128
        %3782 = vxpose.xlu0.b32.cont [4/16] %v3113, 128
        %3783 = vxpose.xlu0.b32.cont [5/16] %v3321, 128
        %3784 = vxpose.xlu0.b32.cont [6/16] %v3322, 128
        %3785 = vxpose.xlu0.b32.cont [7/16] %v3323, 128
        %3786 = vxpose.xlu0.b32.cont [8/16] %v3324, 128
        %3787 = vxpose.xlu0.b32.cont [9/16] %v3532, 128
        %3788 = vxpose.xlu0.b32.cont [10/16] %v3533, 128
        %3789 = vxpose.xlu0.b32.cont [11/16] %v3534, 128
        %3790 = vxpose.xlu0.b32.cont [12/16] %v3535, 128
        %3791 = vxpose.xlu0.b32.cont [13/16] %v3743, 128
        %3792 = vxpose.xlu0.b32.cont [14/16] %v3744, 128
        %3793 = vxpose.xlu0.b32.cont [15/16] %v3745, 128
        %3794 = vxpose.xlu0.b32.end [16/16] %v3746, 128
        %v3795 = vpop.trf.xlu0
        %v3796 = vpop.trf.xlu0
        %v3797 = vpop.trf.xlu0
        %v3798 = vpop.trf.xlu0
        %v3799 = vpop.trf.xlu0
        %v3800 = vpop.trf.xlu0
        %v3801 = vpop.trf.xlu0
        %v3802 = vpop.trf.xlu0
        %v3803 = vpop.trf.xlu0
        %v3804 = vpop.trf.xlu0
        %v3805 = vpop.trf.xlu0
        %v3806 = vpop.trf.xlu0
        %v3807 = vpop.trf.xlu0
        %v3808 = vpop.trf.xlu0
        %v3809 = vpop.trf.xlu0
        %v3810 = vpop.trf.xlu0
        %v3811 = vpack.c.bf16 %v3764, %v3763
        %v3812 = vpack.c.bf16 %v3796, %v3795
        %v3813 = vpack.c.bf16 %v3766, %v3765
        %v3814 = vpack.c.bf16 %v3798, %v3797
        %v3815 = vpack.c.bf16 %v3768, %v3767
        %v3816 = vpack.c.bf16 %v3800, %v3799
        %v3817 = vpack.c.bf16 %v3770, %v3769
        %v3818 = vpack.c.bf16 %v3802, %v3801
        %v3819 = vpack.c.bf16 %v3772, %v3771
        %v3820 = vpack.c.bf16 %v3804, %v3803
        %v3821 = vpack.c.bf16 %v3774, %v3773
        %v3822 = vpack.c.bf16 %v3806, %v3805
        %v3823 = vpack.c.bf16 %v3776, %v3775
        %v3824 = vpack.c.bf16 %v3808, %v3807
        %v3825 = vpack.c.bf16 %v3778, %v3777
        %v3826 = vpack.c.bf16 %v3810, %v3809
        %v3827 = vld [vmem:[#allocation5] sm:$0xff]
        %v3828 = vld [vmem:[#allocation5 + $0x8] sm:$0xff]
        %v3829 = vld [vmem:[#allocation5 + $0x10] sm:$0xff]
        %v3830 = vld [vmem:[#allocation5 + $0x18] sm:$0xff]
        %v3831 = vld [vmem:[#allocation5 + $0x20] sm:$0xff]
        %v3832 = vld [vmem:[#allocation5 + $0x28] sm:$0xff]
        %v3833 = vld [vmem:[#allocation5 + $0x30] sm:$0xff]
        %v3834 = vld [vmem:[#allocation5 + $0x38] sm:$0xff]
        %v3835 = vld [vmem:[#allocation5 + $0x40] sm:$0xff]
        %v3836 = vld [vmem:[#allocation5 + $0x48] sm:$0xff]
        %v3837 = vld [vmem:[#allocation5 + $0x50] sm:$0xff]
        %v3838 = vld [vmem:[#allocation5 + $0x58] sm:$0xff]
        %v3839 = vld [vmem:[#allocation5 + $0x60] sm:$0xff]
        %v3840 = vld [vmem:[#allocation5 + $0x68] sm:$0xff]
        %v3841 = vld [vmem:[#allocation5 + $0x70] sm:$0xff]
        %v3842 = vld [vmem:[#allocation5 + $0x78] sm:$0xff]
        %v3843 = vld [vmem:[#allocation5 + $0x80] sm:$0xff]
        %v3844 = vld [vmem:[#allocation5 + $0x88] sm:$0xff]
        %v3845 = vld [vmem:[#allocation5 + $0x90] sm:$0xff]
        %v3846 = vld [vmem:[#allocation5 + $0x98] sm:$0xff]
        %v3847 = vld [vmem:[#allocation5 + $0xa0] sm:$0xff]
        %v3848 = vld [vmem:[#allocation5 + $0xa8] sm:$0xff]
        %v3849 = vld [vmem:[#allocation5 + $0xb0] sm:$0xff]
        %v3850 = vld [vmem:[#allocation5 + $0xb8] sm:$0xff]
        %v3851 = vld [vmem:[#allocation5 + $0xc0] sm:$0xff]
        %v3852 = vld [vmem:[#allocation5 + $0xc8] sm:$0xff]
        %v3853 = vld [vmem:[#allocation5 + $0xd0] sm:$0xff]
        %v3854 = vld [vmem:[#allocation5 + $0xd8] sm:$0xff]
        %v3855 = vld [vmem:[#allocation5 + $0xe0] sm:$0xff]
        %v3856 = vld [vmem:[#allocation5 + $0xe8] sm:$0xff]
        %v3857 = vld [vmem:[#allocation5 + $0xf0] sm:$0xff]
        %v3858 = vld [vmem:[#allocation5 + $0xf8] sm:$0xff]
        %v3859 = vld [vmem:[%s4] sm:$0x3]
        %v3861 = vperm.slane %v3859, 0
        %v3862 = vperm.slane %v3859, 1
        %v3897 = vunpack.c.l.b16 %v3827
        %v3898 = vunpack.c.h.b16 %v3827
        %v3899 = vunpack.c.l.b16 %v3828
        %v3900 = vunpack.c.h.b16 %v3828
        %v3901 = vunpack.c.l.b16 %v3829
        %v3902 = vunpack.c.h.b16 %v3829
        %v3903 = vunpack.c.l.b16 %v3830
        %v3904 = vunpack.c.h.b16 %v3830
        %v3905 = vunpack.c.l.b16 %v3831
        %v3906 = vunpack.c.h.b16 %v3831
        %v3907 = vunpack.c.l.b16 %v3832
        %v3908 = vunpack.c.h.b16 %v3832
        %v3909 = vunpack.c.l.b16 %v3833
        %v3910 = vunpack.c.h.b16 %v3833
        %v3911 = vunpack.c.l.b16 %v3834
        %v3912 = vunpack.c.h.b16 %v3834
        %v3913 = vunpack.c.l.b16 %v3835
        %v3914 = vunpack.c.h.b16 %v3835
        %v3915 = vunpack.c.l.b16 %v3836
        %v3916 = vunpack.c.h.b16 %v3836
        %v3917 = vunpack.c.l.b16 %v3837
        %v3918 = vunpack.c.h.b16 %v3837
        %v3919 = vunpack.c.l.b16 %v3838
        %v3920 = vunpack.c.h.b16 %v3838
        %v3921 = vunpack.c.l.b16 %v3839
        %v3922 = vunpack.c.h.b16 %v3839
        %v3923 = vunpack.c.l.b16 %v3840
        %v3924 = vunpack.c.h.b16 %v3840
        %v3925 = vunpack.c.l.b16 %v3841
        %v3926 = vunpack.c.h.b16 %v3841
        %v3927 = vunpack.c.l.b16 %v3842
        %v3928 = vunpack.c.h.b16 %v3842
        %v3929 = vunpack.c.l.b16 %v3843
        %v3930 = vunpack.c.h.b16 %v3843
        %v3931 = vunpack.c.l.b16 %v3844
        %v3932 = vunpack.c.h.b16 %v3844
        %v3933 = vunpack.c.l.b16 %v3845
        %v3934 = vunpack.c.h.b16 %v3845
        %v3935 = vunpack.c.l.b16 %v3846
        %v3936 = vunpack.c.h.b16 %v3846
        %v3937 = vunpack.c.l.b16 %v3847
        %v3938 = vunpack.c.h.b16 %v3847
        %v3939 = vunpack.c.l.b16 %v3848
        %v3940 = vunpack.c.h.b16 %v3848
        %v3941 = vunpack.c.l.b16 %v3849
        %v3942 = vunpack.c.h.b16 %v3849
        %v3943 = vunpack.c.l.b16 %v3850
        %v3944 = vunpack.c.h.b16 %v3850
        %v3945 = vunpack.c.l.b16 %v3851
        %v3946 = vunpack.c.h.b16 %v3851
        %v3947 = vunpack.c.l.b16 %v3852
        %v3948 = vunpack.c.h.b16 %v3852
        %v3949 = vunpack.c.l.b16 %v3853
        %v3950 = vunpack.c.h.b16 %v3853
        %v3951 = vunpack.c.l.b16 %v3854
        %v3952 = vunpack.c.h.b16 %v3854
        %v3953 = vunpack.c.l.b16 %v3855
        %v3954 = vunpack.c.h.b16 %v3855
        %v3955 = vunpack.c.l.b16 %v3856
        %v3956 = vunpack.c.h.b16 %v3856
        %v3957 = vunpack.c.l.b16 %v3857
        %v3958 = vunpack.c.h.b16 %v3857
        %v3959 = vunpack.c.l.b16 %v3858
        %v3960 = vunpack.c.h.b16 %v3858
        %v3961 = vpack.c.b16 %v3899, %v3897
        %v3962 = vpack.c.b16 %v3900, %v3898
        %v3963 = vpack.c.b16 %v3903, %v3901
        %v3964 = vpack.c.b16 %v3904, %v3902
        %v3965 = vpack.c.b16 %v3907, %v3905
        %v3966 = vpack.c.b16 %v3908, %v3906
        %v3967 = vpack.c.b16 %v3911, %v3909
        %v3968 = vpack.c.b16 %v3912, %v3910
        %v3969 = vpack.c.b16 %v3915, %v3913
        %v3970 = vpack.c.b16 %v3916, %v3914
        %v3971 = vpack.c.b16 %v3919, %v3917
        %v3972 = vpack.c.b16 %v3920, %v3918
        %v3973 = vpack.c.b16 %v3923, %v3921
        %v3974 = vpack.c.b16 %v3924, %v3922
        %v3975 = vpack.c.b16 %v3927, %v3925
        %v3976 = vpack.c.b16 %v3928, %v3926
        %v3977 = vpack.c.b16 %v3931, %v3929
        %v3978 = vpack.c.b16 %v3932, %v3930
        %v3979 = vpack.c.b16 %v3935, %v3933
        %v3980 = vpack.c.b16 %v3936, %v3934
        %v3981 = vpack.c.b16 %v3939, %v3937
        %v3982 = vpack.c.b16 %v3940, %v3938
        %v3983 = vpack.c.b16 %v3943, %v3941
        %v3984 = vpack.c.b16 %v3944, %v3942
        %v3985 = vpack.c.b16 %v3947, %v3945
        %v3986 = vpack.c.b16 %v3948, %v3946
        %v3987 = vpack.c.b16 %v3951, %v3949
        %v3988 = vpack.c.b16 %v3952, %v3950
        %v3989 = vpack.c.b16 %v3955, %v3953
        %v3990 = vpack.c.b16 %v3956, %v3954
        %v3991 = vpack.c.b16 %v3959, %v3957
        %v3992 = vpack.c.b16 %v3960, %v3958
        %4025 = vmatpush.bf16.msra.mxu0 %v3975
        %4026 = vmatpush.bf16.msra.mxu0 %v3973
        %4027 = vmatpush.bf16.msra.mxu0 %v3971
        %4028 = vmatpush.bf16.msra.mxu0 %v3969
        %4029 = vmatpush.bf16.msra.mxu0 %v3967
        %4030 = vmatpush.bf16.msra.mxu0 %v3965
        %4031 = vmatpush.bf16.msra.mxu0 %v3963
        %4032 = vmatpush.bf16.msra.mxu0 %v3961
        %4033 = vmatmul.bf16.gmra.mxu0 %v3811
        %v4034 = vpop.f32.mrf.mxu0
        %v4035 = vadd.f32 %v3861, %v4034
        %v4036 = vpop.f32.mrf.mxu0
        %v4037 = vadd.f32 %v3861, %v4036
        %4038 = vmatmul.bf16.gmra.mxu0 %v3813
        %v4039 = vpop.f32.mrf.mxu0
        %v4040 = vadd.f32 %v3861, %v4039
        %v4041 = vpop.f32.mrf.mxu0
        %v4042 = vadd.f32 %v3861, %v4041
        %4043 = vmatmul.bf16.gmra.mxu0 %v3815
        %v4044 = vpop.f32.mrf.mxu0
        %v4045 = vadd.f32 %v3861, %v4044
        %v4046 = vpop.f32.mrf.mxu0
        %v4047 = vadd.f32 %v3861, %v4046
        %4048 = vmatmul.bf16.gmra.mxu0 %v3817
        %v4049 = vpop.f32.mrf.mxu0
        %v4050 = vadd.f32 %v3861, %v4049
        %v4051 = vpop.f32.mrf.mxu0
        %v4052 = vadd.f32 %v3861, %v4051
        %4053 = vmatmul.bf16.gmra.mxu0 %v3819
        %v4054 = vpop.f32.mrf.mxu0
        %v4055 = vadd.f32 %v3861, %v4054
        %v4056 = vpop.f32.mrf.mxu0
        %v4057 = vadd.f32 %v3861, %v4056
        %4058 = vmatmul.bf16.gmra.mxu0 %v3821
        %v4059 = vpop.f32.mrf.mxu0
        %v4060 = vadd.f32 %v3861, %v4059
        %v4061 = vpop.f32.mrf.mxu0
        %v4062 = vadd.f32 %v3861, %v4061
        %4063 = vmatmul.bf16.gmra.mxu0 %v3823
        %v4064 = vpop.f32.mrf.mxu0
        %v4065 = vadd.f32 %v3861, %v4064
        %v4066 = vpop.f32.mrf.mxu0
        %v4067 = vadd.f32 %v3861, %v4066
        %4068 = vmatmul.bf16.gmra.mxu0 %v3825
        %v4069 = vpop.f32.mrf.mxu0
        %v4070 = vadd.f32 %v3861, %v4069
        %v4071 = vpop.f32.mrf.mxu0
        %v4072 = vadd.f32 %v3861, %v4071
        %4073 = vdwg.mxu0
        %4074 = vmatpush.bf16.msra.mxu0 %v3991
        %4075 = vmatpush.bf16.msra.mxu0 %v3989
        %4076 = vmatpush.bf16.msra.mxu0 %v3987
        %4077 = vmatpush.bf16.msra.mxu0 %v3985
        %4078 = vmatpush.bf16.msra.mxu0 %v3983
        %4079 = vmatpush.bf16.msra.mxu0 %v3981
        %4080 = vmatpush.bf16.msra.mxu0 %v3979
        %4081 = vmatpush.bf16.msra.mxu0 %v3977
        %4082 = vmatmul.bf16.gmra.mxu0 %v3812
        %v4083 = vpop.f32.mrf.mxu0
        %v4084 = vadd.f32 %v4035, %v4083
        %v4085 = vpop.f32.mrf.mxu0
        %v4086 = vadd.f32 %v4037, %v4085
        %4087 = vmatmul.bf16.gmra.mxu0 %v3814
        %v4088 = vpop.f32.mrf.mxu0
        %v4089 = vadd.f32 %v4040, %v4088
        %v4090 = vpop.f32.mrf.mxu0
        %v4091 = vadd.f32 %v4042, %v4090
        %4092 = vmatmul.bf16.gmra.mxu0 %v3816
        %v4093 = vpop.f32.mrf.mxu0
        %v4094 = vadd.f32 %v4045, %v4093
        %v4095 = vpop.f32.mrf.mxu0
        %v4096 = vadd.f32 %v4047, %v4095
        %4097 = vmatmul.bf16.gmra.mxu0 %v3818
        %v4098 = vpop.f32.mrf.mxu0
        %v4099 = vadd.f32 %v4050, %v4098
        %v4100 = vpop.f32.mrf.mxu0
        %v4101 = vadd.f32 %v4052, %v4100
        %4102 = vmatmul.bf16.gmra.mxu0 %v3820
        %v4103 = vpop.f32.mrf.mxu0
        %v4104 = vadd.f32 %v4055, %v4103
        %v4105 = vpop.f32.mrf.mxu0
        %v4106 = vadd.f32 %v4057, %v4105
        %4107 = vmatmul.bf16.gmra.mxu0 %v3822
        %v4108 = vpop.f32.mrf.mxu0
        %v4109 = vadd.f32 %v4060, %v4108
        %v4110 = vpop.f32.mrf.mxu0
        %v4111 = vadd.f32 %v4062, %v4110
        %4112 = vmatmul.bf16.gmra.mxu0 %v3824
        %v4113 = vpop.f32.mrf.mxu0
        %v4114 = vadd.f32 %v4065, %v4113
        %v4115 = vpop.f32.mrf.mxu0
        %v4116 = vadd.f32 %v4067, %v4115
        %4117 = vmatmul.bf16.gmra.mxu0 %v3826
        %v4118 = vpop.f32.mrf.mxu0
        %v4119 = vadd.f32 %v4070, %v4118
        %v4120 = vpop.f32.mrf.mxu0
        %v4121 = vadd.f32 %v4072, %v4120
        %4122 = vdwg.mxu0
        %4123 = vmatpush.bf16.msra.mxu0 %v3976
        %4124 = vmatpush.bf16.msra.mxu0 %v3974
        %4125 = vmatpush.bf16.msra.mxu0 %v3972
        %4126 = vmatpush.bf16.msra.mxu0 %v3970
        %4127 = vmatpush.bf16.msra.mxu0 %v3968
        %4128 = vmatpush.bf16.msra.mxu0 %v3966
        %4129 = vmatpush.bf16.msra.mxu0 %v3964
        %4130 = vmatpush.bf16.msra.mxu0 %v3962
        %4131 = vmatmul.bf16.gmra.mxu0 %v3811
        %v4132 = vpop.f32.mrf.mxu0
        %v4133 = vadd.f32 %v3862, %v4132
        %v4134 = vpop.f32.mrf.mxu0
        %v4135 = vadd.f32 %v3862, %v4134
        %4136 = vmatmul.bf16.gmra.mxu0 %v3813
        %v4137 = vpop.f32.mrf.mxu0
        %v4138 = vadd.f32 %v3862, %v4137
        %v4139 = vpop.f32.mrf.mxu0
        %v4140 = vadd.f32 %v3862, %v4139
        %4141 = vmatmul.bf16.gmra.mxu0 %v3815
        %v4142 = vpop.f32.mrf.mxu0
        %v4143 = vadd.f32 %v3862, %v4142
        %v4144 = vpop.f32.mrf.mxu0
        %v4145 = vadd.f32 %v3862, %v4144
        %4146 = vmatmul.bf16.gmra.mxu0 %v3817
        %v4147 = vpop.f32.mrf.mxu0
        %v4148 = vadd.f32 %v3862, %v4147
        %v4149 = vpop.f32.mrf.mxu0
        %v4150 = vadd.f32 %v3862, %v4149
        %4151 = vmatmul.bf16.gmra.mxu0 %v3819
        %v4152 = vpop.f32.mrf.mxu0
        %v4153 = vadd.f32 %v3862, %v4152
        %v4154 = vpop.f32.mrf.mxu0
        %v4155 = vadd.f32 %v3862, %v4154
        %4156 = vmatmul.bf16.gmra.mxu0 %v3821
        %v4157 = vpop.f32.mrf.mxu0
        %v4158 = vadd.f32 %v3862, %v4157
        %v4159 = vpop.f32.mrf.mxu0
        %v4160 = vadd.f32 %v3862, %v4159
        %4161 = vmatmul.bf16.gmra.mxu0 %v3823
        %v4162 = vpop.f32.mrf.mxu0
        %v4163 = vadd.f32 %v3862, %v4162
        %v4164 = vpop.f32.mrf.mxu0
        %v4165 = vadd.f32 %v3862, %v4164
        %4166 = vmatmul.bf16.gmra.mxu0 %v3825
        %v4167 = vpop.f32.mrf.mxu0
        %v4168 = vadd.f32 %v3862, %v4167
        %v4169 = vpop.f32.mrf.mxu0
        %v4170 = vadd.f32 %v3862, %v4169
        %4171 = vdwg.mxu0
        %4172 = vmatpush.bf16.msra.mxu0 %v3992
        %4173 = vmatpush.bf16.msra.mxu0 %v3990
        %4174 = vmatpush.bf16.msra.mxu0 %v3988
        %4175 = vmatpush.bf16.msra.mxu0 %v3986
        %4176 = vmatpush.bf16.msra.mxu0 %v3984
        %4177 = vmatpush.bf16.msra.mxu0 %v3982
        %4178 = vmatpush.bf16.msra.mxu0 %v3980
        %4179 = vmatpush.bf16.msra.mxu0 %v3978
        %4180 = vmatmul.bf16.gmra.mxu0 %v3812
        %v4181 = vpop.f32.mrf.mxu0
        %v4182 = vadd.f32 %v4133, %v4181
        %v4183 = vpop.f32.mrf.mxu0
        %v4184 = vadd.f32 %v4135, %v4183
        %4185 = vmatmul.bf16.gmra.mxu0 %v3814
        %v4186 = vpop.f32.mrf.mxu0
        %v4187 = vadd.f32 %v4138, %v4186
        %v4188 = vpop.f32.mrf.mxu0
        %v4189 = vadd.f32 %v4140, %v4188
        %4190 = vmatmul.bf16.gmra.mxu0 %v3816
        %v4191 = vpop.f32.mrf.mxu0
        %v4192 = vadd.f32 %v4143, %v4191
        %v4193 = vpop.f32.mrf.mxu0
        %v4194 = vadd.f32 %v4145, %v4193
        %4195 = vmatmul.bf16.gmra.mxu0 %v3818
        %v4196 = vpop.f32.mrf.mxu0
        %v4197 = vadd.f32 %v4148, %v4196
        %v4198 = vpop.f32.mrf.mxu0
        %v4199 = vadd.f32 %v4150, %v4198
        %4200 = vmatmul.bf16.gmra.mxu0 %v3820
        %v4201 = vpop.f32.mrf.mxu0
        %v4202 = vadd.f32 %v4153, %v4201
        %v4203 = vpop.f32.mrf.mxu0
        %v4204 = vadd.f32 %v4155, %v4203
        %4205 = vmatmul.bf16.gmra.mxu0 %v3822
        %v4206 = vpop.f32.mrf.mxu0
        %v4207 = vadd.f32 %v4158, %v4206
        %v4208 = vpop.f32.mrf.mxu0
        %v4209 = vadd.f32 %v4160, %v4208
        %4210 = vmatmul.bf16.gmra.mxu0 %v3824
        %v4211 = vpop.f32.mrf.mxu0
        %v4212 = vadd.f32 %v4163, %v4211
        %v4213 = vpop.f32.mrf.mxu0
        %v4214 = vadd.f32 %v4165, %v4213
        %4215 = vmatmul.bf16.gmra.mxu0 %v3826
        %v4216 = vpop.f32.mrf.mxu0
        %v4217 = vadd.f32 %v4168, %v4216
        %v4218 = vpop.f32.mrf.mxu0
        %v4219 = vadd.f32 %v4170, %v4218
        %4220 = vdwg.mxu0
        %4221 = vst [vmem:[%s262] sm:$0xff] %v4084
        %4222 = vst [vmem:[%s262 + $0x8] sm:$0xff] %v4182
        %4223 = vst [vmem:[%s262 + $0x10] sm:$0xff] %v4086
        %4224 = vst [vmem:[%s262 + $0x18] sm:$0xff] %v4184
        %4225 = vst [vmem:[%s262 + $0x20] sm:$0xff] %v4089
        %4226 = vst [vmem:[%s262 + $0x28] sm:$0xff] %v4187
        %4227 = vst [vmem:[%s262 + $0x30] sm:$0xff] %v4091
        %4228 = vst [vmem:[%s262 + $0x38] sm:$0xff] %v4189
        %4229 = vst [vmem:[%s262 + $0x40] sm:$0xff] %v4094
        %4230 = vst [vmem:[%s262 + $0x48] sm:$0xff] %v4192
        %4231 = vst [vmem:[%s262 + $0x50] sm:$0xff] %v4096
        %4232 = vst [vmem:[%s262 + $0x58] sm:$0xff] %v4194
        %4233 = vst [vmem:[%s262 + $0x60] sm:$0xff] %v4099
        %4234 = vst [vmem:[%s262 + $0x68] sm:$0xff] %v4197
        %4235 = vst [vmem:[%s262 + $0x70] sm:$0xff] %v4101
        %4236 = vst [vmem:[%s262 + $0x78] sm:$0xff] %v4199
        %4237 = vst [vmem:[%s262 + $0x80] sm:$0xff] %v4104
        %4238 = vst [vmem:[%s262 + $0x88] sm:$0xff] %v4202
        %4239 = vst [vmem:[%s262 + $0x90] sm:$0xff] %v4106
        %4240 = vst [vmem:[%s262 + $0x98] sm:$0xff] %v4204
        %4241 = vst [vmem:[%s262 + $0xa0] sm:$0xff] %v4109
        %4242 = vst [vmem:[%s262 + $0xa8] sm:$0xff] %v4207
        %4243 = vst [vmem:[%s262 + $0xb0] sm:$0xff] %v4111
        %4244 = vst [vmem:[%s262 + $0xb8] sm:$0xff] %v4209
        %4245 = vst [vmem:[%s262 + $0xc0] sm:$0xff] %v4114
        %4246 = vst [vmem:[%s262 + $0xc8] sm:$0xff] %v4212
        %4247 = vst [vmem:[%s262 + $0xd0] sm:$0xff] %v4116
        %4248 = vst [vmem:[%s262 + $0xd8] sm:$0xff] %v4214
        %4249 = vst [vmem:[%s262 + $0xe0] sm:$0xff] %v4119
        %4250 = vst [vmem:[%s262 + $0xe8] sm:$0xff] %v4217
        %4251 = vst [vmem:[%s262 + $0xf0] sm:$0xff] %v4121
        %4252 = vst [vmem:[%s262 + $0xf8] sm:$0xff] %v4219
        %s4253 = sand.u32 %s141, 1
        %s4254 = scalar_lea.sflag [#allocation4], %s4253
        %s4255 = sand.u32 %s141, 1
        %s4256 = smul.addr %s4255, 256
        %s4257 = scalar_lea.vmem [#allocation7], %s4256
        // Predicated region
        $region49: #{_simple_attention_call.1} parent=39 // pred_check
          %p4258 = pneg %p151
        $region50: #{_simple_attention_call.1} parent=39 // pred_check_branch
          %4260 = sbr.rel (%p4258) target = $region52
        $region51: #{_simple_attention_call.1} parent=39 // pred_region
          %s4261 = smul.u32 16, %s23
          %4263 = vsyncadd %s4254, 0
          %s4264 = smul.addr %s4261, 2
          %s4265 = smul.addr %s4264, 8
          %s4266 = scalar_lea.hbm %s5, %s4265
          %s4267 = sshll.u32 %s4257, 4
          %s4268 = int_to_ptr.vmem [resolvable:$true] %s4267
          %s4269 = sshll.u32 %s4266, 4
          %s4270 = int_to_ptr.hbm [resolvable:$true] %s4269
          %4275 = dma.vmem_to_hbm [thread:$0]  %s4268, 4096, %s4270, %s4254, 256, 256, 16
        $region52: #{_simple_attention_call.1} parent=39 // pred_fallthru
          _
      $region40: #{_simple_attention_call.1} parent=5 // pred_fallthru
        _
      %p4276 = scmp.le.s32.totalorder 2, %s18
      // Predicated region
      $region53: #{_simple_attention_call.1} parent=5 // pred_check
        %p4277 = pneg %p4276
      $region54: #{_simple_attention_call.1} parent=5 // pred_check_branch
        %4279 = sbr.rel (%p4277) target = $region56
      $region55: #{_simple_attention_call.1} parent=5 // pred_region
        %s4280 = ssub.s32 %s18, 2
        // Predicated region
        $region57: #{_simple_attention_call.1} parent=55 // pred_check
          %p4281 = pneg %p157
        $region58: #{_simple_attention_call.1} parent=55 // pred_check_branch
          %4283 = sbr.rel (%p4281) target = $region60
        $region59: #{_simple_attention_call.1} parent=55 // pred_region
          %s4284 = sand.u32 %s142, 1
          %s4285 = scalar_lea.sflag [#allocation4], %s4284
          %s4286 = sand.u32 %s142, 1
          %s4287 = smul.addr %s4286, 256
          %s4288 = scalar_lea.vmem [#allocation7], %s4287
          %4290 = dma.done %s4285, 4096
        $region60: #{_simple_attention_call.1} parent=55 // pred_fallthru
          _
      $region56: #{_simple_attention_call.1} parent=5 // pred_fallthru
        _
    $region6: #{_simple_attention_call.1} parent=1 // loop_footer
      %s22 = sadd.s32 1, %s18
    $region7: #{_simple_attention_call.1} parent=1 // loop_footer_branch
      %17 = sbr.rel target = $region3
    $region8: #{_simple_attention_call.1} parent=1 // loop_exit
      _
    %4291 = vsyncpa [#allocation3], 1
    %s4292 = scalar_lea.sflag [#allocation3], 1
    %4293 = vsyncpa %s4292, 1
    %4294 = vsyncpa [#allocation6], 1
    %4295 = vsyncpa [#allocation4], 1
    %s4296 = scalar_lea.sflag [#allocation4], 1
    %4297 = vsyncpa %s4296, 1

</llo_original>
